<compile_context>
chip_gen: v6e
topology: v6e:2x2x1
jax: 0.10.0
libtpu: 0.0.40
codegen_flags: <defaults>
</compile_context>

<pallas_src>
import functools

import jax
import jax.numpy as jnp
from jax import lax
from jax.experimental import pallas as pl
from jax.experimental.pallas import tpu as pltpu


def _round_up(v: int, m: int) -> int:
    return (v + m - 1) // m * m


def basic_block_kernel(x_ref, w1_ref, w2_ref, b1_ref, b2_ref, out_ref,
                       buf_ref, *, H, W, C, pad_head, pad_tail, cdtype):
    HW = H * W
    C3 = 3 * C

    # Zero only the halo rows; the interior is fully overwritten by each
    # conv's buffer build.  Redone every grid step (per-core scratch).
    buf_ref[0:pad_head, :] = jnp.zeros((pad_head, C3), cdtype)
    buf_ref[pad_head + HW:pad_head + HW + pad_tail, :] = (
        jnp.zeros((pad_tail, C3), cdtype))

    # Column masks for the left/right zero-padding columns.  Computed once per
    # step, applied once per conv while building the dx-im2col buffer.
    col = lax.broadcasted_iota(jnp.int32, (H, W, C), 1).reshape(HW, C)
    mask_l = col > 0           # x[r, c-1] exists
    mask_r = col < (W - 1)     # x[r, c+1] exists

    def build_rows(img2d):
        """Fill the interior of buf_ref so row r*W+c holds
        [y[r,c-1] | y[r,c] | y[r,c+1]] (zero where the neighbor column falls
        off the image)."""
        buf_ref[pl.ds(pad_head, HW), C:2 * C] = img2d
        # +-1 sublane-shifted windows read back from the buffer realize the
        # left/right column shift; row-wrap positions are masked to zero.
        left = jnp.where(mask_l, buf_ref[pl.ds(pad_head - 1, HW), C:2 * C], 0)
        right = jnp.where(mask_r, buf_ref[pl.ds(pad_head + 1, HW), C:2 * C], 0)
        buf_ref[pl.ds(pad_head, HW), 0:C] = left
        buf_ref[pl.ds(pad_head, HW), 2 * C:3 * C] = right

    def conv3x3(w_ref):
        """3x3 stride-1 'SAME' conv of the image held in buf_ref: three
        accumulating (HW, 3C) x (3C, C) MXU matmuls, one per kernel row dy."""
        acc = jnp.zeros((HW, C), jnp.float32)
        for dy in range(3):
            start = pad_head + (dy - 1) * W          # static, sublane-aligned
            acc += jnp.dot(buf_ref[pl.ds(start, HW), :], w_ref[dy],
                           preferred_element_type=jnp.float32)
        return acc

    # conv1 (BN1 scale folded into w1) -> + bias -> relu
    build_rows(x_ref[0].reshape(HW, C))
    h1 = jnp.maximum(conv3x3(w1_ref) + b1_ref[...], 0.0)

    # conv2 (BN2 scale folded into w2) -> + bias   (same halo buffer reused;
    # halo rows are still zero)
    build_rows(h1.astype(cdtype))
    h2 = conv3x3(w2_ref) + b2_ref[...]

    # residual add + relu; re-read the resident input block for the identity.
    out = jnp.maximum(h2 + x_ref[0].reshape(HW, C).astype(jnp.float32), 0.0)
    out_ref[...] = out.reshape(1, H, W, C).astype(out_ref.dtype)


def basic_block_forward_nhwc(x_nhwc, w1, w2, s1, b1, s2, b2, *,
                             compute_dtype=jnp.bfloat16, out_dtype=None):
    """BasicBlock forward on NHWC activations (stride=1, downsample=None),
    eval-mode BN folded into per-channel scale/shift.

    x_nhwc: (N, H, W, C); w1, w2: torch layout (Cout, Cin, 3, 3); s*, b*: (C,)."""
    N, H, W, C = x_nhwc.shape
    assert w1.shape == (C, C, 3, 3) and w2.shape == (C, C, 3, 3), \
        "BasicBlock with downsample=None needs inplanes == planes"
    out_dtype = compute_dtype if out_dtype is None else out_dtype

    def prep_w(w, s):
        # (Cout, Cin, kH, kW) -> (kH, kW, Cin, Cout); fold the BN scale per
        # output channel in f32 BEFORE the bf16 cast; reshape to
        # (3, 3*Cin, Cout) so row index dx*Cin + cin matches the kernel's
        # dx-im2col buffer column order.
        w_hwio = jnp.transpose(w, (2, 3, 1, 0)).astype(jnp.float32)
        w_hwio = w_hwio * s.astype(jnp.float32)[None, None, None, :]
        return w_hwio.reshape(3, 3 * C, C).astype(compute_dtype)

    w1k = prep_w(w1, s1)
    w2k = prep_w(w2, s2)
    b1r = b1.reshape(1, C).astype(jnp.float32)
    b2r = b2.reshape(1, C).astype(jnp.float32)
    x_c = x_nhwc.astype(compute_dtype)

    # Row halo: >= W zero rows before/after the flattened image (dy shifts are
    # exactly +-W), rounded to the sublane size so the dot windows are aligned.
    pad_head = _round_up(W, 8)
    pad_tail = _round_up(W, 8)
    buf_rows = pad_head + H * W + pad_tail

    kernel = functools.partial(basic_block_kernel, H=H, W=W, C=C,
                               pad_head=pad_head, pad_tail=pad_tail,
                               cdtype=compute_dtype)

    return pl.pallas_call(
        kernel,
        out_shape=jax.ShapeDtypeStruct((N, H, W, C), out_dtype),
        grid_spec=pltpu.PrefetchScalarGridSpec(
            num_scalar_prefetch=0,
            grid=(N,),
            in_specs=[
                pl.BlockSpec((1, H, W, C), lambda n: (n, 0, 0, 0)),
                pl.BlockSpec((3, 3 * C, C), lambda n: (0, 0, 0)),
                pl.BlockSpec((3, 3 * C, C), lambda n: (0, 0, 0)),
                pl.BlockSpec((1, C), lambda n: (0, 0)),
                pl.BlockSpec((1, C), lambda n: (0, 0)),
            ],
            out_specs=pl.BlockSpec((1, H, W, C), lambda n: (n, 0, 0, 0)),
            scratch_shapes=[pltpu.VMEM((buf_rows, 3 * C), compute_dtype)],
        ),
        compiler_params=pltpu.CompilerParams(
            dimension_semantics=("parallel",)),
    )(x_c, w1k, w2k, b1r, b2r)


def basic_block_forward(x_nchw, w1, w2, s1, b1, s2, b2, *,
                        compute_dtype=jnp.bfloat16, out_dtype=None):
    """NCHW wrapper matching the PyTorch module's interface.

    TODO(synk): drop these NCHW<->NHWC transposes by keeping activations NHWC
    across the whole residual stack (each transpose is a full HBM round trip
    outside the kernel)."""
    x_nhwc = jnp.transpose(x_nchw, (0, 2, 3, 1))
    out_nhwc = basic_block_forward_nhwc(x_nhwc, w1, w2, s1, b1, s2, b2,
                                        compute_dtype=compute_dtype,
                                        out_dtype=out_dtype)
    return jnp.transpose(out_nhwc, (0, 3, 1, 2))


def reference_forward(x_nchw, w1, w2, s1, b1, s2, b2,
                      *, compute_dtype=jnp.bfloat16):
    """Pure-JAX (lax.conv) reference with the same quantization points as the
    kernel: bf16 inputs, BN scale folded into f32 weights then cast to bf16,
    bf16 conv1->conv2 intermediate.  (Deviation from a true fp32 torch
    BasicBlock is therefore dominated by the intentional bf16 contract.)"""
    f32 = jnp.float32
    q = lambda a: a.astype(compute_dtype).astype(f32)
    x = q(jnp.transpose(x_nchw, (0, 2, 3, 1)))
    k1 = q(jnp.transpose(w1, (2, 3, 1, 0)) * s1[None, None, None, :])
    k2 = q(jnp.transpose(w2, (2, 3, 1, 0)) * s2[None, None, None, :])
    h = lax.conv_general_dilated(x, k1, (1, 1), 'SAME',
                                 dimension_numbers=('NHWC', 'HWIO', 'NHWC'))
    h = jnp.maximum(h + b1, 0.0)
    h = q(h)
    h = lax.conv_general_dilated(h, k2, (1, 1), 'SAME',
                                 dimension_numbers=('NHWC', 'HWIO', 'NHWC'))
    h = h + b2
    out = jnp.maximum(h + x, 0.0)
    return jnp.transpose(out, (0, 3, 1, 2))


if __name__ == "__main__":
    # BasicBlock(inplanes=128, planes=128, stride=1) at a small spatial size.
    # C=128 keeps the channel (lane) dimension dense; W=16 keeps the
    # (H,W,C)->(HW,C) reshape relayout-free for bf16.
    N, C, H, W = 2, 128, 16, 16
    eps = 1e-5

    key = jax.random.PRNGKey(0)
    (kx, kw1, kw2, kg1, kb1, km1, kv1, kg2, kb2, km2, kv2) = jax.random.split(key, 11)

    x = jax.random.normal(kx, (N, C, H, W), jnp.float32)

    # conv3x3 weights (bias=False)
    w1 = 0.1 * jax.random.normal(kw1, (C, C, 3, 3), jnp.float32)
    w2 = 0.1 * jax.random.normal(kw2, (C, C, 3, 3), jnp.float32)

    # BatchNorm2d parameters (gamma, beta, running_mean, running_var)
    g1 = 1.0 + 0.1 * jax.random.normal(kg1, (C,), jnp.float32)
    be1 = 0.1 * jax.random.normal(kb1, (C,), jnp.float32)
    m1 = 0.1 * jax.random.normal(km1, (C,), jnp.float32)
    v1 = jax.random.uniform(kv1, (C,), jnp.float32, 0.5, 1.5)
    g2 = 1.0 + 0.1 * jax.random.normal(kg2, (C,), jnp.float32)
    be2 = 0.1 * jax.random.normal(kb2, (C,), jnp.float32)
    m2 = 0.1 * jax.random.normal(km2, (C,), jnp.float32)
    v2 = jax.random.uniform(kv2, (C,), jnp.float32, 0.5, 1.5)

    # Fold eval-mode BN into per-channel scale/shift.
    s1 = g1 / jnp.sqrt(v1 + eps)
    b1 = be1 - m1 * s1
    s2 = g2 / jnp.sqrt(v2 + eps)
    b2 = be2 - m2 * s2

    out = jax.jit(basic_block_forward)(x, w1, w2, s1, b1, s2, b2)
    out = jax.block_until_ready(out)

    ref = reference_forward(x, w1, w2, s1, b1, s2, b2)
    assert out.shape == (N, C, H, W)
    out_f32 = out.astype(jnp.float32)
    max_err = jnp.max(jnp.abs(out_f32 - ref))
    assert jnp.allclose(out_f32, ref, atol=5e-2, rtol=5e-2), \
        f"mismatch: max abs err = {max_err}"

    print("KERNEL_OK")
</pallas_src>

<mosaic_0001>
module attributes {stable_mosaic.version = 11 : i64} {
  func.func @basic_block_kernel(%arg0: i32, %arg1: memref<1x16x16x128xbf16, #tpu.memory_space<vmem>>, %arg2: memref<3x384x128xbf16, #tpu.memory_space<vmem>>, %arg3: memref<3x384x128xbf16, #tpu.memory_space<vmem>>, %arg4: memref<1x128xf32, #tpu.memory_space<vmem>>, %arg5: memref<1x128xf32, #tpu.memory_space<vmem>>, %arg6: memref<1x16x16x128xbf16, #tpu.memory_space<vmem>>, %arg7: memref<288x384xbf16, #tpu.memory_space<vmem>>) attributes {dimension_semantics = [#tpu.dimension_semantics<parallel>], iteration_bounds = array<i64: 2>, scalar_prefetch = 0 : i64, scratch_operands = 1 : i64, tpu.core_type = #tpu.core_type<tc>, window_params = [{transform_indices = @transform_0, window_bounds = array<i64: 1, 16, 16, 128>}, {pipeline_mode = #tpu.pipeline_mode<synchronous>, transform_indices = @transform_1, window_bounds = array<i64: 3, 384, 128>}, {pipeline_mode = #tpu.pipeline_mode<synchronous>, transform_indices = @transform_2, window_bounds = array<i64: 3, 384, 128>}, {pipeline_mode = #tpu.pipeline_mode<synchronous>, transform_indices = @transform_3, window_bounds = array<i64: 1, 128>}, {pipeline_mode = #tpu.pipeline_mode<synchronous>, transform_indices = @transform_4, window_bounds = array<i64: 1, 128>}, {transform_indices = @transform_5, window_bounds = array<i64: 1, 16, 16, 128>}]} {
    %cst = arith.constant 0.000000e+00 : bf16
    %0 = vector.broadcast %cst : bf16 to vector<16x384xbf16>
    %c0 = arith.constant 0 : index
    %c0_0 = arith.constant 0 : index
    %1 = vector.load %arg7[%c0, %c0_0] : memref<288x384xbf16, #tpu.memory_space<vmem>>, vector<16x384xbf16>
    tpu.vector_store %arg7[%c0, %c0_0], %0 {strides = array<i32>} : memref<288x384xbf16, #tpu.memory_space<vmem>>, vector<16x384xbf16>,
    %cst_1 = arith.constant 0.000000e+00 : bf16
    %2 = vector.broadcast %cst_1 : bf16 to vector<16x384xbf16>
    %c272 = arith.constant 272 : index
    %c0_2 = arith.constant 0 : index
    %3 = vector.load %arg7[%c272, %c0_2] : memref<288x384xbf16, #tpu.memory_space<vmem>>, vector<16x384xbf16>
    tpu.vector_store %arg7[%c272, %c0_2], %2 {strides = array<i32>} : memref<288x384xbf16, #tpu.memory_space<vmem>>, vector<16x384xbf16>,
    %4 = tpu.iota {dimensions = array<i32: 1>} : vector<16x16x128xi32>
    %5 = vector.shape_cast %4 : vector<16x16x128xi32> to vector<256x128xi32>
    %c0_i32 = arith.constant 0 : i32
    %6 = vector.broadcast %c0_i32 : i32 to vector<256x128xi32>
    %7 = arith.cmpi sgt, %5, %6 : vector<256x128xi32>
    %c15_i32 = arith.constant 15 : i32
    %8 = vector.broadcast %c15_i32 : i32 to vector<256x128xi32>
    %9 = arith.cmpi slt, %5, %8 : vector<256x128xi32>
    %c0_3 = arith.constant 0 : index
    %c0_4 = arith.constant 0 : index
    %c0_5 = arith.constant 0 : index
    %c0_6 = arith.constant 0 : index
    %10 = vector.load %arg1[%c0_3, %c0_4, %c0_5, %c0_6] : memref<1x16x16x128xbf16, #tpu.memory_space<vmem>>, vector<1x16x16x128xbf16>
    %11 = vector.shape_cast %10 : vector<1x16x16x128xbf16> to vector<16x16x128xbf16>
    %12 = vector.shape_cast %11 : vector<16x16x128xbf16> to vector<256x128xbf16>
    %c16 = arith.constant 16 : index
    %c128 = arith.constant 128 : index
    %13 = vector.load %arg7[%c16, %c128] : memref<288x384xbf16, #tpu.memory_space<vmem>>, vector<256x128xbf16>
    tpu.vector_store %arg7[%c16, %c128], %12 {strides = array<i32>} : memref<288x384xbf16, #tpu.memory_space<vmem>>, vector<256x128xbf16>,
    %c15 = arith.constant 15 : index
    %c128_7 = arith.constant 128 : index
    %14 = vector.load %arg7[%c15, %c128_7] : memref<288x384xbf16, #tpu.memory_space<vmem>>, vector<256x128xbf16>
    %c0_i32_8 = arith.constant 0 : i32
    %15 = arith.sitofp %c0_i32_8 : i32 to bf16
    %16 = vector.broadcast %15 : bf16 to vector<256x128xbf16>
    %17 = arith.select %7, %14, %16 : vector<256x128xi1>, vector<256x128xbf16>
    %c17 = arith.constant 17 : index
    %c128_9 = arith.constant 128 : index
    %18 = vector.load %arg7[%c17, %c128_9] : memref<288x384xbf16, #tpu.memory_space<vmem>>, vector<256x128xbf16>
    %c0_i32_10 = arith.constant 0 : i32
    %19 = arith.sitofp %c0_i32_10 : i32 to bf16
    %20 = vector.broadcast %19 : bf16 to vector<256x128xbf16>
    %21 = arith.select %9, %18, %20 : vector<256x128xi1>, vector<256x128xbf16>
    %c16_11 = arith.constant 16 : index
    %c0_12 = arith.constant 0 : index
    %22 = vector.load %arg7[%c16_11, %c0_12] : memref<288x384xbf16, #tpu.memory_space<vmem>>, vector<256x128xbf16>
    tpu.vector_store %arg7[%c16_11, %c0_12], %17 {strides = array<i32>} : memref<288x384xbf16, #tpu.memory_space<vmem>>, vector<256x128xbf16>,
    %c16_13 = arith.constant 16 : index
    %c256 = arith.constant 256 : index
    %23 = vector.load %arg7[%c16_13, %c256] : memref<288x384xbf16, #tpu.memory_space<vmem>>, vector<256x128xbf16>
    tpu.vector_store %arg7[%c16_13, %c256], %21 {strides = array<i32>} : memref<288x384xbf16, #tpu.memory_space<vmem>>, vector<256x128xbf16>,
    %cst_14 = arith.constant 0.000000e+00 : f32
    %24 = vector.broadcast %cst_14 : f32 to vector<256x128xf32>
    %c0_15 = arith.constant 0 : index
    %c0_16 = arith.constant 0 : index
    %25 = vector.load %arg7[%c0_15, %c0_16] : memref<288x384xbf16, #tpu.memory_space<vmem>>, vector<256x384xbf16>
    %c0_17 = arith.constant 0 : index
    %c0_18 = arith.constant 0 : index
    %c0_19 = arith.constant 0 : index
    %26 = vector.load %arg2[%c0_17, %c0_18, %c0_19] : memref<3x384x128xbf16, #tpu.memory_space<vmem>>, vector<1x384x128xbf16>
    %27 = vector.shape_cast %26 : vector<1x384x128xbf16> to vector<384x128xbf16>
    %cst_20 = arith.constant dense<0.000000e+00> : vector<256x128xf32>
    %28 = tpu.matmul %25, %27, %cst_20 {dimension_numbers = #tpu.dot_dimension_numbers<[1], [0], [0], [1], [0, 0, 1, 1], [], []>} : vector<256x384xbf16>, vector<384x128xbf16>, vector<256x128xf32> -> vector<256x128xf32>
    %29 = arith.addf %24, %28 : vector<256x128xf32>
    %c16_21 = arith.constant 16 : index
    %c0_22 = arith.constant 0 : index
    %30 = vector.load %arg7[%c16_21, %c0_22] : memref<288x384xbf16, #tpu.memory_space<vmem>>, vector<256x384xbf16>
    %c1 = arith.constant 1 : index
    %c0_23 = arith.constant 0 : index
    %c0_24 = arith.constant 0 : index
    %31 = vector.load %arg2[%c1, %c0_23, %c0_24] : memref<3x384x128xbf16, #tpu.memory_space<vmem>>, vector<1x384x128xbf16>
    %32 = vector.shape_cast %31 : vector<1x384x128xbf16> to vector<384x128xbf16>
    %cst_25 = arith.constant dense<0.000000e+00> : vector<256x128xf32>
    %33 = tpu.matmul %30, %32, %cst_25 {dimension_numbers = #tpu.dot_dimension_numbers<[1], [0], [0], [1], [0, 0, 1, 1], [], []>} : vector<256x384xbf16>, vector<384x128xbf16>, vector<256x128xf32> -> vector<256x128xf32>
    %34 = arith.addf %29, %33 : vector<256x128xf32>
    %c32 = arith.constant 32 : index
    %c0_26 = arith.constant 0 : index
    %35 = vector.load %arg7[%c32, %c0_26] : memref<288x384xbf16, #tpu.memory_space<vmem>>, vector<256x384xbf16>
    %c2 = arith.constant 2 : index
    %c0_27 = arith.constant 0 : index
    %c0_28 = arith.constant 0 : index
    %36 = vector.load %arg2[%c2, %c0_27, %c0_28] : memref<3x384x128xbf16, #tpu.memory_space<vmem>>, vector<1x384x128xbf16>
    %37 = vector.shape_cast %36 : vector<1x384x128xbf16> to vector<384x128xbf16>
    %cst_29 = arith.constant dense<0.000000e+00> : vector<256x128xf32>
    %38 = tpu.matmul %35, %37, %cst_29 {dimension_numbers = #tpu.dot_dimension_numbers<[1], [0], [0], [1], [0, 0, 1, 1], [], []>} : vector<256x384xbf16>, vector<384x128xbf16>, vector<256x128xf32> -> vector<256x128xf32>
    %39 = arith.addf %34, %38 : vector<256x128xf32>
    %c0_30 = arith.constant 0 : index
    %c0_31 = arith.constant 0 : index
    %40 = vector.load %arg4[%c0_30, %c0_31] : memref<1x128xf32, #tpu.memory_space<vmem>>, vector<1x128xf32>
    %41 = vector.broadcast %40 : vector<1x128xf32> to vector<256x128xf32>
    %42 = arith.addf %39, %41 : vector<256x128xf32>
    %cst_32 = arith.constant 0.000000e+00 : f32
    %43 = vector.broadcast %cst_32 : f32 to vector<256x128xf32>
    %44 = arith.maximumf %42, %43 : vector<256x128xf32>
    %45 = arith.truncf %44 : vector<256x128xf32> to vector<256x128xbf16>
    %c16_33 = arith.constant 16 : index
    %c128_34 = arith.constant 128 : index
    %46 = vector.load %arg7[%c16_33, %c128_34] : memref<288x384xbf16, #tpu.memory_space<vmem>>, vector<256x128xbf16>
    tpu.vector_store %arg7[%c16_33, %c128_34], %45 {strides = array<i32>} : memref<288x384xbf16, #tpu.memory_space<vmem>>, vector<256x128xbf16>,
    %c15_35 = arith.constant 15 : index
    %c128_36 = arith.constant 128 : index
    %47 = vector.load %arg7[%c15_35, %c128_36] : memref<288x384xbf16, #tpu.memory_space<vmem>>, vector<256x128xbf16>
    %c0_i32_37 = arith.constant 0 : i32
    %48 = arith.sitofp %c0_i32_37 : i32 to bf16
    %49 = vector.broadcast %48 : bf16 to vector<256x128xbf16>
    %50 = arith.select %7, %47, %49 : vector<256x128xi1>, vector<256x128xbf16>
    %c17_38 = arith.constant 17 : index
    %c128_39 = arith.constant 128 : index
    %51 = vector.load %arg7[%c17_38, %c128_39] : memref<288x384xbf16, #tpu.memory_space<vmem>>, vector<256x128xbf16>
    %c0_i32_40 = arith.constant 0 : i32
    %52 = arith.sitofp %c0_i32_40 : i32 to bf16
    %53 = vector.broadcast %52 : bf16 to vector<256x128xbf16>
    %54 = arith.select %9, %51, %53 : vector<256x128xi1>, vector<256x128xbf16>
    %c16_41 = arith.constant 16 : index
    %c0_42 = arith.constant 0 : index
    %55 = vector.load %arg7[%c16_41, %c0_42] : memref<288x384xbf16, #tpu.memory_space<vmem>>, vector<256x128xbf16>
    tpu.vector_store %arg7[%c16_41, %c0_42], %50 {strides = array<i32>} : memref<288x384xbf16, #tpu.memory_space<vmem>>, vector<256x128xbf16>,
    %c16_43 = arith.constant 16 : index
    %c256_44 = arith.constant 256 : index
    %56 = vector.load %arg7[%c16_43, %c256_44] : memref<288x384xbf16, #tpu.memory_space<vmem>>, vector<256x128xbf16>
    tpu.vector_store %arg7[%c16_43, %c256_44], %54 {strides = array<i32>} : memref<288x384xbf16, #tpu.memory_space<vmem>>, vector<256x128xbf16>,
    %cst_45 = arith.constant 0.000000e+00 : f32
    %57 = vector.broadcast %cst_45 : f32 to vector<256x128xf32>
    %c0_46 = arith.constant 0 : index
    %c0_47 = arith.constant 0 : index
    %58 = vector.load %arg7[%c0_46, %c0_47] : memref<288x384xbf16, #tpu.memory_space<vmem>>, vector<256x384xbf16>
    %c0_48 = arith.constant 0 : index
    %c0_49 = arith.constant 0 : index
    %c0_50 = arith.constant 0 : index
    %59 = vector.load %arg3[%c0_48, %c0_49, %c0_50] : memref<3x384x128xbf16, #tpu.memory_space<vmem>>, vector<1x384x128xbf16>
    %60 = vector.shape_cast %59 : vector<1x384x128xbf16> to vector<384x128xbf16>
    %cst_51 = arith.constant dense<0.000000e+00> : vector<256x128xf32>
    %61 = tpu.matmul %58, %60, %cst_51 {dimension_numbers = #tpu.dot_dimension_numbers<[1], [0], [0], [1], [0, 0, 1, 1], [], []>} : vector<256x384xbf16>, vector<384x128xbf16>, vector<256x128xf32> -> vector<256x128xf32>
    %62 = arith.addf %57, %61 : vector<256x128xf32>
    %c16_52 = arith.constant 16 : index
    %c0_53 = arith.constant 0 : index
    %63 = vector.load %arg7[%c16_52, %c0_53] : memref<288x384xbf16, #tpu.memory_space<vmem>>, vector<256x384xbf16>
    %c1_54 = arith.constant 1 : index
    %c0_55 = arith.constant 0 : index
    %c0_56 = arith.constant 0 : index
    %64 = vector.load %arg3[%c1_54, %c0_55, %c0_56] : memref<3x384x128xbf16, #tpu.memory_space<vmem>>, vector<1x384x128xbf16>
    %65 = vector.shape_cast %64 : vector<1x384x128xbf16> to vector<384x128xbf16>
    %cst_57 = arith.constant dense<0.000000e+00> : vector<256x128xf32>
    %66 = tpu.matmul %63, %65, %cst_57 {dimension_numbers = #tpu.dot_dimension_numbers<[1], [0], [0], [1], [0, 0, 1, 1], [], []>} : vector<256x384xbf16>, vector<384x128xbf16>, vector<256x128xf32> -> vector<256x128xf32>
    %67 = arith.addf %62, %66 : vector<256x128xf32>
    %c32_58 = arith.constant 32 : index
    %c0_59 = arith.constant 0 : index
    %68 = vector.load %arg7[%c32_58, %c0_59] : memref<288x384xbf16, #tpu.memory_space<vmem>>, vector<256x384xbf16>
    %c2_60 = arith.constant 2 : index
    %c0_61 = arith.constant 0 : index
    %c0_62 = arith.constant 0 : index
    %69 = vector.load %arg3[%c2_60, %c0_61, %c0_62] : memref<3x384x128xbf16, #tpu.memory_space<vmem>>, vector<1x384x128xbf16>
    %70 = vector.shape_cast %69 : vector<1x384x128xbf16> to vector<384x128xbf16>
    %cst_63 = arith.constant dense<0.000000e+00> : vector<256x128xf32>
    %71 = tpu.matmul %68, %70, %cst_63 {dimension_numbers = #tpu.dot_dimension_numbers<[1], [0], [0], [1], [0, 0, 1, 1], [], []>} : vector<256x384xbf16>, vector<384x128xbf16>, vector<256x128xf32> -> vector<256x128xf32>
    %72 = arith.addf %67, %71 : vector<256x128xf32>
    %c0_64 = arith.constant 0 : index
    %c0_65 = arith.constant 0 : index
    %73 = vector.load %arg5[%c0_64, %c0_65] : memref<1x128xf32, #tpu.memory_space<vmem>>, vector<1x128xf32>
    %74 = vector.broadcast %73 : vector<1x128xf32> to vector<256x128xf32>
    %75 = arith.addf %72, %74 : vector<256x128xf32>
    %c0_66 = arith.constant 0 : index
    %c0_67 = arith.constant 0 : index
    %c0_68 = arith.constant 0 : index
    %c0_69 = arith.constant 0 : index
    %76 = vector.load %arg1[%c0_66, %c0_67, %c0_68, %c0_69] : memref<1x16x16x128xbf16, #tpu.memory_space<vmem>>, vector<1x16x16x128xbf16>
    %77 = vector.shape_cast %76 : vector<1x16x16x128xbf16> to vector<16x16x128xbf16>
    %78 = vector.shape_cast %77 : vector<16x16x128xbf16> to vector<256x128xbf16>
    %79 = arith.extf %78 : vector<256x128xbf16> to vector<256x128xf32>
    %80 = arith.addf %75, %79 : vector<256x128xf32>
    %cst_70 = arith.constant 0.000000e+00 : f32
    %81 = vector.broadcast %cst_70 : f32 to vector<256x128xf32>
    %82 = arith.maximumf %80, %81 : vector<256x128xf32>
    %83 = vector.shape_cast %82 : vector<256x128xf32> to vector<1x16x16x128xf32>
    %84 = arith.truncf %83 : vector<1x16x16x128xf32> to vector<1x16x16x128xbf16>
    %c0_71 = arith.constant 0 : index
    %c0_72 = arith.constant 0 : index
    %c0_73 = arith.constant 0 : index
    %c0_74 = arith.constant 0 : index
    %85 = vector.load %arg6[%c0_71, %c0_72, %c0_73, %c0_74] : memref<1x16x16x128xbf16, #tpu.memory_space<vmem>>, vector<1x16x16x128xbf16>
    tpu.vector_store %arg6[%c0_71, %c0_72, %c0_73, %c0_74], %84 {strides = array<i32>} : memref<1x16x16x128xbf16, #tpu.memory_space<vmem>>, vector<1x16x16x128xbf16>,
    return
  }
  func.func @transform_0(%arg0: i32) -> (i32, i32, i32, i32) {
    %c0_i32 = arith.constant 0 : i32
    %c0_i32_0 = arith.constant 0 : i32
    %c0_i32_1 = arith.constant 0 : i32
    %c0_i32_2 = arith.constant 0 : i32
    return %arg0, %c0_i32, %c0_i32_0, %c0_i32_1 : i32, i32, i32, i32
  }
  func.func @transform_1(%arg0: i32) -> (i32, i32, i32) {
    %c0_i32 = arith.constant 0 : i32
    %c0_i32_0 = arith.constant 0 : i32
    %c0_i32_1 = arith.constant 0 : i32
    %c0_i32_2 = arith.constant 0 : i32
    return %c0_i32, %c0_i32_0, %c0_i32_1 : i32, i32, i32
  }
  func.func @transform_2(%arg0: i32) -> (i32, i32, i32) {
    %c0_i32 = arith.constant 0 : i32
    %c0_i32_0 = arith.constant 0 : i32
    %c0_i32_1 = arith.constant 0 : i32
    %c0_i32_2 = arith.constant 0 : i32
    return %c0_i32, %c0_i32_0, %c0_i32_1 : i32, i32, i32
  }
  func.func @transform_3(%arg0: i32) -> (i32, i32) {
    %c0_i32 = arith.constant 0 : i32
    %c0_i32_0 = arith.constant 0 : i32
    %c0_i32_1 = arith.constant 0 : i32
    return %c0_i32, %c0_i32_0 : i32, i32
  }
  func.func @transform_4(%arg0: i32) -> (i32, i32) {
    %c0_i32 = arith.constant 0 : i32
    %c0_i32_0 = arith.constant 0 : i32
    %c0_i32_1 = arith.constant 0 : i32
    return %c0_i32, %c0_i32_0 : i32, i32
  }
  func.func @transform_5(%arg0: i32) -> (i32, i32, i32, i32) {
    %c0_i32 = arith.constant 0 : i32
    %c0_i32_0 = arith.constant 0 : i32
    %c0_i32_1 = arith.constant 0 : i32
    %c0_i32_2 = arith.constant 0 : i32
    return %arg0, %c0_i32, %c0_i32_0, %c0_i32_1 : i32, i32, i32, i32
  }
}

</mosaic_0001>

<llo_original>
// kernel: basic_block_forward.1
$region0: #{basic_block_forward.1}
  #allocation0 [shape = 'u32[]', space=smem, size = 0x4, offset = 0x4, fixed_abs, tag = 'smem constant byte address 0x4 - core index']
  #allocation1 [shape = 'u32[144,128]{1,0:T(1,128)}', space=vmem, size = 0x12000, scoped, tag = 'internal scratch']
  #allocation2 [shape = 'bf16[288,384]{1,0:T(8,128)(2,1)}', space=vmem, size = 0x36000, scoped, tag = 'scratch operand']
  %s0 = inlined_call_operand.vmem [shape: bf16[2,16,16,128], index: 0, kind: input, shape index: {}]
  %s1 = inlined_call_operand.vmem [shape: bf16[3,384,128], index: 1, kind: input, shape index: {}]
  %s2 = inlined_call_operand.vmem [shape: bf16[3,384,128], index: 2, kind: input, shape index: {}]
  %s3 = inlined_call_operand.vmem [shape: f32[1,128], index: 3, kind: input, shape index: {}]
  %s4 = inlined_call_operand.vmem [shape: f32[1,128], index: 4, kind: input, shape index: {}]
  %s5 = inlined_call_operand.hbm [shape: bf16[2,16,16,128], index: 5, kind: output, shape index: {}]
  %s6 = sld [smem:[#allocation0]]
  $region53: #{basic_block_forward.1} parent=0
    _
  %s8 = ssub.s32 1, %s6
  %s9 = scalar_select 0, %s8, %s6
  $region1: #{basic_block_forward.1} parent=0
    #allocation3 [shape = 'u8[131072]{0}', space=vmem, size = 0x20000, scoped, tag = 'output window, operand 0']
    #allocation4 [shape = 's32[2]{0}', space=sflag, size = 0x8, scoped, tag = 'scoped memory for basic_block_forward.1']
    %10 = vsyncpa [#allocation4], 0
    %s11 = scalar_lea.sflag [#allocation4], 1
    %12 = vsyncpa %s11, 0
    loop: start=0, step=1, limit=4
    $region2: #{basic_block_forward.1} parent=1 // loop_pre_header
      _
    $region3: #{basic_block_forward.1} parent=1 // loop_header
      %s14 = sphi 0, %s18
      %p15 = scmp.ge.s32.totalorder %s14, 4
      %s24 = sphi 0, %s26
      %s27 = sphi 0, %s24
      %s28 = sphi 0, %s27
      %s44 = sphi 0, %s28
      %s48 = sphi 0, %s48
      %s50 = sphi 0, %s48
      %s51 = sphi 0, %s50
      %s65 = sphi 0, %s51
      %s69 = sphi 0, %s69
      %s71 = sphi 0, %s69
      %s72 = sphi 0, %s71
      %s86 = sphi 0, %s72
      %s90 = sphi 0, %s90
      %s92 = sphi 0, %s90
      %s93 = sphi 0, %s92
      %s107 = sphi 0, %s93
      %s111 = sphi 0, %s111
      %s113 = sphi 0, %s111
      %s114 = sphi 0, %s113
      %s128 = sphi 0, %s114
      %s134 = sphi 0, %s136
      %s137 = sphi 0, %s134
      %s138 = sphi 0, %s137
      %s154 = sphi 0, %s138
    $region4: #{basic_block_forward.1} parent=1 // loop_header_branch
      %17 = sbr.rel (%p15) target = $region8
    $region5: #{basic_block_forward.1} parent=1 // loop_body
      %s19 = ssub.s32 %s14, 1
      %s20 = ssub.s32 %s14, 2
      %s21 = sadd.s32 %s14, 1
      %s22 = ssub.s32 %s14, %s21
      %p23 = scmp.eq.s32.totalorder %s22, 0
      %s25 = sadd.s32 %s24, 1
      %s26 = scalar_select %p23, %s24, %s25
      %p29 = pneg %p23
      %p30 = scmp.eq.s32.totalorder %s14, 1
      %p31 = por %p29, %p30
      %p32 = scmp.ne.s32.totalorder %s24, %s27
      %p33 = scmp.eq.s32.totalorder %s14, 0
      %p34 = por %p32, %p33
      %p35 = scmp.ne.s32.totalorder %s24, %s27
      %p36 = scmp.eq.s32.totalorder %s19, 1
      %p37 = por %p35, %p36
      %p38 = scmp.ne.s32.totalorder %s27, %s28
      %p39 = scmp.eq.s32.totalorder %s19, 0
      %p40 = por %p38, %p39
      %p41 = scmp.ne.s32.totalorder %s27, %s28
      %p42 = scmp.eq.s32.totalorder %s20, 1
      %p43 = por %p41, %p42
      %p45 = scmp.ne.s32.totalorder %s28, %s44
      %p46 = scmp.eq.s32.totalorder %s20, 0
      %p47 = por %p45, %p46
      %s49 = sadd.s32 %s48, 1
      %p52 = scmp.eq.s32.totalorder %s14, 1
      %p53 = scmp.ne.s32.totalorder %s48, %s50
      %p54 = scmp.eq.s32.totalorder %s14, 0
      %p55 = por %p53, %p54
      %p56 = scmp.ne.s32.totalorder %s48, %s50
      %p57 = scmp.eq.s32.totalorder %s19, 1
      %p58 = por %p56, %p57
      %p59 = scmp.ne.s32.totalorder %s50, %s51
      %p60 = scmp.eq.s32.totalorder %s19, 0
      %p61 = por %p59, %p60
      %p62 = scmp.ne.s32.totalorder %s50, %s51
      %p63 = scmp.eq.s32.totalorder %s20, 1
      %p64 = por %p62, %p63
      %p66 = scmp.ne.s32.totalorder %s51, %s65
      %p67 = scmp.eq.s32.totalorder %s20, 0
      %p68 = por %p66, %p67
      %s70 = sadd.s32 %s69, 1
      %p73 = scmp.eq.s32.totalorder %s14, 1
      %p74 = scmp.ne.s32.totalorder %s69, %s71
      %p75 = scmp.eq.s32.totalorder %s14, 0
      %p76 = por %p74, %p75
      %p77 = scmp.ne.s32.totalorder %s69, %s71
      %p78 = scmp.eq.s32.totalorder %s19, 1
      %p79 = por %p77, %p78
      %p80 = scmp.ne.s32.totalorder %s71, %s72
      %p81 = scmp.eq.s32.totalorder %s19, 0
      %p82 = por %p80, %p81
      %p83 = scmp.ne.s32.totalorder %s71, %s72
      %p84 = scmp.eq.s32.totalorder %s20, 1
      %p85 = por %p83, %p84
      %p87 = scmp.ne.s32.totalorder %s72, %s86
      %p88 = scmp.eq.s32.totalorder %s20, 0
      %p89 = por %p87, %p88
      %s91 = sadd.s32 %s90, 1
      %p94 = scmp.eq.s32.totalorder %s14, 1
      %p95 = scmp.ne.s32.totalorder %s90, %s92
      %p96 = scmp.eq.s32.totalorder %s14, 0
      %p97 = por %p95, %p96
      %p98 = scmp.ne.s32.totalorder %s90, %s92
      %p99 = scmp.eq.s32.totalorder %s19, 1
      %p100 = por %p98, %p99
      %p101 = scmp.ne.s32.totalorder %s92, %s93
      %p102 = scmp.eq.s32.totalorder %s19, 0
      %p103 = por %p101, %p102
      %p104 = scmp.ne.s32.totalorder %s92, %s93
      %p105 = scmp.eq.s32.totalorder %s20, 1
      %p106 = por %p104, %p105
      %p108 = scmp.ne.s32.totalorder %s93, %s107
      %p109 = scmp.eq.s32.totalorder %s20, 0
      %p110 = por %p108, %p109
      %s112 = sadd.s32 %s111, 1
      %p115 = scmp.eq.s32.totalorder %s14, 1
      %p116 = scmp.ne.s32.totalorder %s111, %s113
      %p117 = scmp.eq.s32.totalorder %s14, 0
      %p118 = por %p116, %p117
      %p119 = scmp.ne.s32.totalorder %s111, %s113
      %p120 = scmp.eq.s32.totalorder %s19, 1
      %p121 = por %p119, %p120
      %p122 = scmp.ne.s32.totalorder %s113, %s114
      %p123 = scmp.eq.s32.totalorder %s19, 0
      %p124 = por %p122, %p123
      %p125 = scmp.ne.s32.totalorder %s113, %s114
      %p126 = scmp.eq.s32.totalorder %s20, 1
      %p127 = por %p125, %p126
      %p129 = scmp.ne.s32.totalorder %s114, %s128
      %p130 = scmp.eq.s32.totalorder %s20, 0
      %p131 = por %p129, %p130
      %s132 = ssub.s32 %s14, %s21
      %p133 = scmp.eq.s32.totalorder %s132, 0
      %s135 = sadd.s32 %s134, 1
      %s136 = scalar_select %p133, %s134, %s135
      %p139 = pneg %p133
      %p140 = scmp.eq.s32.totalorder %s14, 1
      %p141 = por %p139, %p140
      %p142 = scmp.ne.s32.totalorder %s134, %s137
      %p143 = scmp.eq.s32.totalorder %s14, 0
      %p144 = por %p142, %p143
      %p145 = scmp.ne.s32.totalorder %s134, %s137
      %p146 = scmp.eq.s32.totalorder %s19, 1
      %p147 = por %p145, %p146
      %p148 = scmp.ne.s32.totalorder %s137, %s138
      %p149 = scmp.eq.s32.totalorder %s19, 0
      %p150 = por %p148, %p149
      %p151 = scmp.ne.s32.totalorder %s137, %s138
      %p152 = scmp.eq.s32.totalorder %s20, 1
      %p153 = por %p151, %p152
      %p155 = scmp.ne.s32.totalorder %s138, %s154
      %p156 = scmp.eq.s32.totalorder %s20, 0
      %p157 = por %p155, %p156
      %p158 = scmp.le.s32.totalorder 1, %s14
      %p159 = scmp.lt.s32.totalorder %s14, 3
      %p160 = pnand %p158, %p159
      %p161 = pneg %p160
      // Predicated region
      $region9: #{basic_block_forward.1} parent=5 // pred_check
        _
      $region10: #{basic_block_forward.1} parent=5 // pred_check_branch
        %163 = sbr.rel (%p160) target = $region12
      $region11: #{basic_block_forward.1} parent=5 // pred_region
        %s164 = ssub.s32 %s14, 1
        // Predicated region
        $region13: #{basic_block_forward.1} parent=11 // pred_check
          %p165 = pneg %p61
        $region14: #{basic_block_forward.1} parent=11 // pred_check_branch
          %167 = sbr.rel (%p165) target = $region16
        $region15: #{basic_block_forward.1} parent=11 // pred_region
          _
        $region16: #{basic_block_forward.1} parent=11 // pred_fallthru
          _
        // Predicated region
        $region17: #{basic_block_forward.1} parent=11 // pred_check
          %p168 = pneg %p82
        $region18: #{basic_block_forward.1} parent=11 // pred_check_branch
          %170 = sbr.rel (%p168) target = $region20
        $region19: #{basic_block_forward.1} parent=11 // pred_region
          _
        $region20: #{basic_block_forward.1} parent=11 // pred_fallthru
          _
        // Predicated region
        $region21: #{basic_block_forward.1} parent=11 // pred_check
          %p171 = pneg %p103
        $region22: #{basic_block_forward.1} parent=11 // pred_check_branch
          %173 = sbr.rel (%p171) target = $region24
        $region23: #{basic_block_forward.1} parent=11 // pred_region
          _
        $region24: #{basic_block_forward.1} parent=11 // pred_fallthru
          _
        // Predicated region
        $region25: #{basic_block_forward.1} parent=11 // pred_check
          %p174 = pneg %p124
        $region26: #{basic_block_forward.1} parent=11 // pred_check_branch
          %176 = sbr.rel (%p174) target = $region28
        $region27: #{basic_block_forward.1} parent=11 // pred_region
          _
        $region28: #{basic_block_forward.1} parent=11 // pred_fallthru
          _
      $region12: #{basic_block_forward.1} parent=5 // pred_fallthru
        _
      %p177 = scmp.lt.s32.totalorder %s14, 2
      // Predicated region
      $region29: #{basic_block_forward.1} parent=5 // pred_check
        %p178 = pneg %p177
      $region30: #{basic_block_forward.1} parent=5 // pred_check_branch
        %180 = sbr.rel (%p178) target = $region32
      $region31: #{basic_block_forward.1} parent=5 // pred_region
        // Predicated region
        $region33: #{basic_block_forward.1} parent=31 // pred_check
          %p181 = pneg %p34
        $region34: #{basic_block_forward.1} parent=31 // pred_check_branch
          %183 = sbr.rel (%p181) target = $region36
        $region35: #{basic_block_forward.1} parent=31 // pred_region
          %p184 = scmp.lt.s32.totalorder %s14, 1
          %s185 = scalar_select %p184, %s14, 1
          %s186 = smul.addr %s185, 32
          %s187 = smul.addr %s186, 4
          %s188 = scalar_lea.vmem %s0, %s187
        $region36: #{basic_block_forward.1} parent=31 // pred_fallthru
          _
      $region32: #{basic_block_forward.1} parent=5 // pred_fallthru
        _
      %p189 = scmp.le.s32.totalorder 1, %s14
      %p190 = scmp.lt.s32.totalorder %s14, 3
      %p191 = pnand %p189, %p190
      %p192 = pneg %p191
      // Predicated region
      $region37: #{basic_block_forward.1} parent=5 // pred_check
        _
      $region38: #{basic_block_forward.1} parent=5 // pred_check_branch
        %194 = sbr.rel (%p191) target = $region40
      $region39: #{basic_block_forward.1} parent=5 // pred_region
        %s195 = ssub.s32 %s14, 1
        %p196 = scmp.lt.s32.totalorder %s19, 1
        %s197 = scalar_select %p196, %s19, 1
        %s198 = smul.addr %s197, 32
        %s199 = smul.addr %s198, 4
        %s200 = scalar_lea.vmem %s0, %s199
        %p201 = pneg %p40
        %p202 = pneg %p37
        %p203 = pneg %p61
        %p204 = pneg %p58
        %p205 = pneg %p82
        %p206 = pneg %p79
        %p207 = pneg %p103
        %p208 = pneg %p100
        %p209 = pneg %p124
        %p210 = pneg %p121
        %p211 = pneg %p150
        %p212 = pneg %p147
        %s213 = sand.u32 %s137, 1
        %s214 = scalar_lea.sflag [#allocation4], %s213
        %s215 = sand.u32 %s137, 1
        %s216 = smul.addr %s215, 128
        %s217 = scalar_lea.vmem [#allocation3], %s216
        %p218 = scmp.lt.s32.totalorder %s19, 1
        %s219 = scalar_select %p218, %s19, 1
        %s220 = smul.addr %s219, 32
        %s221 = smul.addr %s220, 4
        %s222 = scalar_lea.vmem %s0, %s221
        %226 = vst [vmem:[#allocation2] sm:$0xff] 0
        %227 = vst [vmem:[#allocation2 + $0x8] sm:$0xf] 0
        %228 = vst [vmem:[#allocation2 + $0xc] sm:$0xff] 0
        %229 = vst [vmem:[#allocation2 + $0x14] sm:$0xf] 0
        %230 = vst [vmem:[#allocation2 + $0x198] sm:$0xff] 0
        %231 = vst [vmem:[#allocation2 + $0x1a0] sm:$0xf] 0
        %232 = vst [vmem:[#allocation2 + $0x1a4] sm:$0xff] 0
        %233 = vst [vmem:[#allocation2 + $0x1ac] sm:$0xf] 0
        %v234 = vlaneseq
        %v235 = vshrl.u32 %v234, 7
        %v236 = vadd.s32 %v235, 8
        %vm237 = vcmp.gt.s32.totalorder %v235, 0
        %vm238 = vcmp.gt.s32.totalorder %v236, 0
        %vm239 = vcmp.lt.s32.totalorder %v235, 15
        %vm240 = vcmp.lt.s32.totalorder %v236, 15
        %v241 = vld [vmem:[%s222] sm:$0xf]
        %v242 = vld [vmem:[%s222 + $0x4] sm:$0xf]
        %v243 = vld [vmem:[%s222 + $0x8] sm:$0xf]
        %v244 = vld [vmem:[%s222 + $0xc] sm:$0xf]
        %v245 = vld [vmem:[%s222 + $0x10] sm:$0xf]
        %v246 = vld [vmem:[%s222 + $0x14] sm:$0xf]
        %v247 = vld [vmem:[%s222 + $0x18] sm:$0xf]
        %v248 = vld [vmem:[%s222 + $0x1c] sm:$0xf]
        %v249 = vld [vmem:[%s222 + $0x20] sm:$0xf]
        %v250 = vld [vmem:[%s222 + $0x24] sm:$0xf]
        %v251 = vld [vmem:[%s222 + $0x28] sm:$0xf]
        %v252 = vld [vmem:[%s222 + $0x2c] sm:$0xf]
        %v253 = vld [vmem:[%s222 + $0x30] sm:$0xf]
        %v254 = vld [vmem:[%s222 + $0x34] sm:$0xf]
        %v255 = vld [vmem:[%s222 + $0x38] sm:$0xf]
        %v256 = vld [vmem:[%s222 + $0x3c] sm:$0xf]
        %v257 = vld [vmem:[%s222 + $0x40] sm:$0xf]
        %v258 = vld [vmem:[%s222 + $0x44] sm:$0xf]
        %v259 = vld [vmem:[%s222 + $0x48] sm:$0xf]
        %v260 = vld [vmem:[%s222 + $0x4c] sm:$0xf]
        %v261 = vld [vmem:[%s222 + $0x50] sm:$0xf]
        %v262 = vld [vmem:[%s222 + $0x54] sm:$0xf]
        %v263 = vld [vmem:[%s222 + $0x58] sm:$0xf]
        %v264 = vld [vmem:[%s222 + $0x5c] sm:$0xf]
        %v265 = vld [vmem:[%s222 + $0x60] sm:$0xf]
        %v266 = vld [vmem:[%s222 + $0x64] sm:$0xf]
        %v267 = vld [vmem:[%s222 + $0x68] sm:$0xf]
        %v268 = vld [vmem:[%s222 + $0x6c] sm:$0xf]
        %v269 = vld [vmem:[%s222 + $0x70] sm:$0xf]
        %v270 = vld [vmem:[%s222 + $0x74] sm:$0xf]
        %v271 = vld [vmem:[%s222 + $0x78] sm:$0xf]
        %v272 = vld [vmem:[%s222 + $0x7c] sm:$0xf]
        %273 = vst [vmem:[#allocation2 + $0x1c] sm:$0xf] %v241
        %274 = vst [vmem:[#allocation2 + $0x28] sm:$0xf] %v242
        %275 = vst [vmem:[#allocation2 + $0x34] sm:$0xf] %v243
        %276 = vst [vmem:[#allocation2 + $0x40] sm:$0xf] %v244
        %277 = vst [vmem:[#allocation2 + $0x4c] sm:$0xf] %v245
        %278 = vst [vmem:[#allocation2 + $0x58] sm:$0xf] %v246
        %279 = vst [vmem:[#allocation2 + $0x64] sm:$0xf] %v247
        %280 = vst [vmem:[#allocation2 + $0x70] sm:$0xf] %v248
        %281 = vst [vmem:[#allocation2 + $0x7c] sm:$0xf] %v249
        %282 = vst [vmem:[#allocation2 + $0x88] sm:$0xf] %v250
        %283 = vst [vmem:[#allocation2 + $0x94] sm:$0xf] %v251
        %284 = vst [vmem:[#allocation2 + $0xa0] sm:$0xf] %v252
        %285 = vst [vmem:[#allocation2 + $0xac] sm:$0xf] %v253
        %286 = vst [vmem:[#allocation2 + $0xb8] sm:$0xf] %v254
        %287 = vst [vmem:[#allocation2 + $0xc4] sm:$0xf] %v255
        %288 = vst [vmem:[#allocation2 + $0xd0] sm:$0xf] %v256
        %289 = vst [vmem:[#allocation2 + $0xdc] sm:$0xf] %v257
        %290 = vst [vmem:[#allocation2 + $0xe8] sm:$0xf] %v258
        %291 = vst [vmem:[#allocation2 + $0xf4] sm:$0xf] %v259
        %292 = vst [vmem:[#allocation2 + $0x100] sm:$0xf] %v260
        %293 = vst [vmem:[#allocation2 + $0x10c] sm:$0xf] %v261
        %294 = vst [vmem:[#allocation2 + $0x118] sm:$0xf] %v262
        %295 = vst [vmem:[#allocation2 + $0x124] sm:$0xf] %v263
        %296 = vst [vmem:[#allocation2 + $0x130] sm:$0xf] %v264
        %297 = vst [vmem:[#allocation2 + $0x13c] sm:$0xf] %v265
        %298 = vst [vmem:[#allocation2 + $0x148] sm:$0xf] %v266
        %299 = vst [vmem:[#allocation2 + $0x154] sm:$0xf] %v267
        %300 = vst [vmem:[#allocation2 + $0x160] sm:$0xf] %v268
        %301 = vst [vmem:[#allocation2 + $0x16c] sm:$0xf] %v269
        %302 = vst [vmem:[#allocation2 + $0x178] sm:$0xf] %v270
        %303 = vst [vmem:[#allocation2 + $0x184] sm:$0xf] %v271
        %304 = vst [vmem:[#allocation2 + $0x190] sm:$0xf] %v272
        %v305 = vld [vmem:[#allocation2 + $0x10] sm:$0x8]
        %v306 = vld [vmem:[#allocation2 + $0x1c] sm:$0xf]
        %v307 = vld [vmem:[#allocation2 + $0x28] sm:$0xf]
        %v308 = vld [vmem:[#allocation2 + $0x34] sm:$0xf]
        %v309 = vld [vmem:[#allocation2 + $0x40] sm:$0xf]
        %v310 = vld [vmem:[#allocation2 + $0x4c] sm:$0xf]
        %v311 = vld [vmem:[#allocation2 + $0x58] sm:$0xf]
        %v312 = vld [vmem:[#allocation2 + $0x64] sm:$0xf]
        %v313 = vld [vmem:[#allocation2 + $0x70] sm:$0xf]
        %v314 = vld [vmem:[#allocation2 + $0x7c] sm:$0xf]
        %v315 = vld [vmem:[#allocation2 + $0x88] sm:$0xf]
        %v316 = vld [vmem:[#allocation2 + $0x94] sm:$0xf]
        %v317 = vld [vmem:[#allocation2 + $0xa0] sm:$0xf]
        %v318 = vld [vmem:[#allocation2 + $0xac] sm:$0xf]
        %v319 = vld [vmem:[#allocation2 + $0xb8] sm:$0xf]
        %v320 = vld [vmem:[#allocation2 + $0xc4] sm:$0xf]
        %v321 = vld [vmem:[#allocation2 + $0xd0] sm:$0xf]
        %v322 = vld [vmem:[#allocation2 + $0xdc] sm:$0xf]
        %v323 = vld [vmem:[#allocation2 + $0xe8] sm:$0xf]
        %v324 = vld [vmem:[#allocation2 + $0xf4] sm:$0xf]
        %v325 = vld [vmem:[#allocation2 + $0x100] sm:$0xf]
        %v326 = vld [vmem:[#allocation2 + $0x10c] sm:$0xf]
        %v327 = vld [vmem:[#allocation2 + $0x118] sm:$0xf]
        %v328 = vld [vmem:[#allocation2 + $0x124] sm:$0xf]
        %v329 = vld [vmem:[#allocation2 + $0x130] sm:$0xf]
        %v330 = vld [vmem:[#allocation2 + $0x13c] sm:$0xf]
        %v331 = vld [vmem:[#allocation2 + $0x148] sm:$0xf]
        %v332 = vld [vmem:[#allocation2 + $0x154] sm:$0xf]
        %v333 = vld [vmem:[#allocation2 + $0x160] sm:$0xf]
        %v334 = vld [vmem:[#allocation2 + $0x16c] sm:$0xf]
        %v335 = vld [vmem:[#allocation2 + $0x178] sm:$0xf]
        %v336 = vld [vmem:[#allocation2 + $0x184] sm:$0xf]
        %v337 = vld [vmem:[#allocation2 + $0x190] sm:$0xf]
        %vm338 = vmpackc.low %vm237, %vm237
        %vm339 = vmpackc.low %vm238, %vm238
        %v340 = vsel %vm338, 65537, 0
        %v341 = vsel %vm339, 65537, 0
        %vm342 = vsmask.f32 3328
        %vm343 = vsmask.f32 7440
        %vm344 = vmor %vm342, %vm343
        %v346 = vshll.u32 %v340, 16
        %v348 = vrot.slane %v346, 5
        %v349 = vshrl.u32 %v340, 16
        %v351 = vrot.slane %v349, 4
        %v352 = vor.u32 %v351, %v348
        %v353 = vrot.slane %v352, 4
        %v355 = vshll.u32 %v341, 16
        %v357 = vrot.slane %v355, 5
        %v358 = vsel %vm344, %v353, %v357
        %v359 = vshrl.u32 %v341, 16
        %v361 = vrot.slane %v359, 4
        %v362 = vor.u32 %v361, %v357
        %v363 = vrot.slane %v362, 4
        %v364 = vsel %vm344, %v363, %v348
        %vm365 = vcmp.ne.s16.totalorder %v348, 0
        %vm366 = vcmp.ne.s16.totalorder %v358, 0
        %vm367 = vcmp.ne.s16.totalorder %v364, 0
        %vm368 = vcmp.ne.s16.totalorder %v363, 0
        %v369 = vsel %vm365, %v305, 0
        %v370 = vsel %vm366, %v306, 0
        %v371 = vsel %vm367, %v307, 0
        %v372 = vsel %vm366, %v308, 0
        %v373 = vsel %vm367, %v309, 0
        %v374 = vsel %vm366, %v310, 0
        %v375 = vsel %vm367, %v311, 0
        %v376 = vsel %vm366, %v312, 0
        %v377 = vsel %vm367, %v313, 0
        %v378 = vsel %vm366, %v314, 0
        %v379 = vsel %vm367, %v315, 0
        %v380 = vsel %vm366, %v316, 0
        %v381 = vsel %vm367, %v317, 0
        %v382 = vsel %vm366, %v318, 0
        %v383 = vsel %vm367, %v319, 0
        %v384 = vsel %vm366, %v320, 0
        %v385 = vsel %vm367, %v321, 0
        %v386 = vsel %vm366, %v322, 0
        %v387 = vsel %vm367, %v323, 0
        %v388 = vsel %vm366, %v324, 0
        %v389 = vsel %vm367, %v325, 0
        %v390 = vsel %vm366, %v326, 0
        %v391 = vsel %vm367, %v327, 0
        %v392 = vsel %vm366, %v328, 0
        %v393 = vsel %vm367, %v329, 0
        %v394 = vsel %vm366, %v330, 0
        %v395 = vsel %vm367, %v331, 0
        %v396 = vsel %vm366, %v332, 0
        %v397 = vsel %vm367, %v333, 0
        %v398 = vsel %vm366, %v334, 0
        %v399 = vsel %vm367, %v335, 0
        %v400 = vsel %vm366, %v336, 0
        %v401 = vsel %vm368, %v337, 0
        %v402 = vld [vmem:[#allocation2 + $0x19c] sm:$0x1]
        %vm403 = vmpackc.low %vm239, %vm239
        %vm404 = vmpackc.low %vm240, %vm240
        %v405 = vsel %vm403, 65537, 0
        %v406 = vsel %vm404, 65537, 0
        %vm407 = vsmask.f32 256
        %vm408 = vsmask.f32 4368
        %vm409 = vmor %vm407, %vm408
        %v411 = vshrl.u32 %v405, 16
        %v413 = vrot.slane %v411, 7
        %v414 = vshll.u32 %v405, 16
        %v416 = vor.u32 %v413, %v414
        %v417 = vrot.slane %v413, 4
        %v419 = vshrl.u32 %v406, 16
        %v421 = vrot.slane %v419, 7
        %v422 = vshll.u32 %v406, 16
        %v424 = vor.u32 %v421, %v422
        %v425 = vsel %vm409, %v417, %v424
        %v426 = vrot.slane %v421, 4
        %v427 = vsel %vm409, %v426, %v416
        %vm428 = vcmp.ne.s16.totalorder %v416, 0
        %vm429 = vcmp.ne.s16.totalorder %v425, 0
        %vm430 = vcmp.ne.s16.totalorder %v427, 0
        %vm431 = vcmp.ne.s16.totalorder %v426, 0
        %v432 = vsel %vm428, %v306, 0
        %v433 = vsel %vm429, %v307, 0
        %v434 = vsel %vm430, %v308, 0
        %v435 = vsel %vm429, %v309, 0
        %v436 = vsel %vm430, %v310, 0
        %v437 = vsel %vm429, %v311, 0
        %v438 = vsel %vm430, %v312, 0
        %v439 = vsel %vm429, %v313, 0
        %v440 = vsel %vm430, %v314, 0
        %v441 = vsel %vm429, %v315, 0
        %v442 = vsel %vm430, %v316, 0
        %v443 = vsel %vm429, %v317, 0
        %v444 = vsel %vm430, %v318, 0
        %v445 = vsel %vm429, %v319, 0
        %v446 = vsel %vm430, %v320, 0
        %v447 = vsel %vm429, %v321, 0
        %v448 = vsel %vm430, %v322, 0
        %v449 = vsel %vm429, %v323, 0
        %v450 = vsel %vm430, %v324, 0
        %v451 = vsel %vm429, %v325, 0
        %v452 = vsel %vm430, %v326, 0
        %v453 = vsel %vm429, %v327, 0
        %v454 = vsel %vm430, %v328, 0
        %v455 = vsel %vm429, %v329, 0
        %v456 = vsel %vm430, %v330, 0
        %v457 = vsel %vm429, %v331, 0
        %v458 = vsel %vm430, %v332, 0
        %v459 = vsel %vm429, %v333, 0
        %v460 = vsel %vm430, %v334, 0
        %v461 = vsel %vm429, %v335, 0
        %v462 = vsel %vm430, %v336, 0
        %v463 = vsel %vm429, %v337, 0
        %v464 = vsel %vm431, %v402, 0
        %v466 = vshrl.u32 %v369, 16
        %v468 = vrot.slane %v466, 7
        %v469 = vrot.slane %v468, 4
        %v471 = vshrl.u32 %v370, 16
        %v473 = vrot.slane %v471, 7
        %v474 = vshll.u32 %v370, 16
        %v476 = vor.u32 %v473, %v474
        %v477 = vsel %vm409, %v469, %v476
        %v478 = vrot.slane %v473, 4
        %v480 = vshrl.u32 %v371, 16
        %v482 = vrot.slane %v480, 7
        %v483 = vshll.u32 %v371, 16
        %v485 = vor.u32 %v482, %v483
        %v486 = vsel %vm409, %v478, %v485
        %v487 = vrot.slane %v482, 4
        %v489 = vshrl.u32 %v372, 16
        %v491 = vrot.slane %v489, 7
        %v492 = vshll.u32 %v372, 16
        %v494 = vor.u32 %v491, %v492
        %v495 = vsel %vm409, %v487, %v494
        %v496 = vrot.slane %v491, 4
        %v498 = vshrl.u32 %v373, 16
        %v500 = vrot.slane %v498, 7
        %v501 = vshll.u32 %v373, 16
        %v503 = vor.u32 %v500, %v501
        %v504 = vsel %vm409, %v496, %v503
        %v505 = vrot.slane %v500, 4
        %v507 = vshrl.u32 %v374, 16
        %v509 = vrot.slane %v507, 7
        %v510 = vshll.u32 %v374, 16
        %v512 = vor.u32 %v509, %v510
        %v513 = vsel %vm409, %v505, %v512
        %v514 = vrot.slane %v509, 4
        %v516 = vshrl.u32 %v375, 16
        %v518 = vrot.slane %v516, 7
        %v519 = vshll.u32 %v375, 16
        %v521 = vor.u32 %v518, %v519
        %v522 = vsel %vm409, %v514, %v521
        %v523 = vrot.slane %v518, 4
        %v525 = vshrl.u32 %v376, 16
        %v527 = vrot.slane %v525, 7
        %v528 = vshll.u32 %v376, 16
        %v530 = vor.u32 %v527, %v528
        %v531 = vsel %vm409, %v523, %v530
        %v532 = vrot.slane %v527, 4
        %v534 = vshrl.u32 %v377, 16
        %v536 = vrot.slane %v534, 7
        %v537 = vshll.u32 %v377, 16
        %v539 = vor.u32 %v536, %v537
        %v540 = vsel %vm409, %v532, %v539
        %v541 = vrot.slane %v536, 4
        %v543 = vshrl.u32 %v378, 16
        %v545 = vrot.slane %v543, 7
        %v546 = vshll.u32 %v378, 16
        %v548 = vor.u32 %v545, %v546
        %v549 = vsel %vm409, %v541, %v548
        %v550 = vrot.slane %v545, 4
        %v552 = vshrl.u32 %v379, 16
        %v554 = vrot.slane %v552, 7
        %v555 = vshll.u32 %v379, 16
        %v557 = vor.u32 %v554, %v555
        %v558 = vsel %vm409, %v550, %v557
        %v559 = vrot.slane %v554, 4
        %v561 = vshrl.u32 %v380, 16
        %v563 = vrot.slane %v561, 7
        %v564 = vshll.u32 %v380, 16
        %v566 = vor.u32 %v563, %v564
        %v567 = vsel %vm409, %v559, %v566
        %v568 = vrot.slane %v563, 4
        %v570 = vshrl.u32 %v381, 16
        %v572 = vrot.slane %v570, 7
        %v573 = vshll.u32 %v381, 16
        %v575 = vor.u32 %v572, %v573
        %v576 = vsel %vm409, %v568, %v575
        %v577 = vrot.slane %v572, 4
        %v579 = vshrl.u32 %v382, 16
        %v581 = vrot.slane %v579, 7
        %v582 = vshll.u32 %v382, 16
        %v584 = vor.u32 %v581, %v582
        %v585 = vsel %vm409, %v577, %v584
        %v586 = vrot.slane %v581, 4
        %v588 = vshrl.u32 %v383, 16
        %v590 = vrot.slane %v588, 7
        %v591 = vshll.u32 %v383, 16
        %v593 = vor.u32 %v590, %v591
        %v594 = vsel %vm409, %v586, %v593
        %v595 = vrot.slane %v590, 4
        %v597 = vshrl.u32 %v384, 16
        %v599 = vrot.slane %v597, 7
        %v600 = vshll.u32 %v384, 16
        %v602 = vor.u32 %v599, %v600
        %v603 = vsel %vm409, %v595, %v602
        %v604 = vrot.slane %v599, 4
        %v606 = vshrl.u32 %v385, 16
        %v608 = vrot.slane %v606, 7
        %v609 = vshll.u32 %v385, 16
        %v611 = vor.u32 %v608, %v609
        %v612 = vsel %vm409, %v604, %v611
        %v613 = vrot.slane %v608, 4
        %v615 = vshrl.u32 %v386, 16
        %v617 = vrot.slane %v615, 7
        %v618 = vshll.u32 %v386, 16
        %v620 = vor.u32 %v617, %v618
        %v621 = vsel %vm409, %v613, %v620
        %v622 = vrot.slane %v617, 4
        %v624 = vshrl.u32 %v387, 16
        %v626 = vrot.slane %v624, 7
        %v627 = vshll.u32 %v387, 16
        %v629 = vor.u32 %v626, %v627
        %v630 = vsel %vm409, %v622, %v629
        %v631 = vrot.slane %v626, 4
        %v633 = vshrl.u32 %v388, 16
        %v635 = vrot.slane %v633, 7
        %v636 = vshll.u32 %v388, 16
        %v638 = vor.u32 %v635, %v636
        %v639 = vsel %vm409, %v631, %v638
        %v640 = vrot.slane %v635, 4
        %v642 = vshrl.u32 %v389, 16
        %v644 = vrot.slane %v642, 7
        %v645 = vshll.u32 %v389, 16
        %v647 = vor.u32 %v644, %v645
        %v648 = vsel %vm409, %v640, %v647
        %v649 = vrot.slane %v644, 4
        %v651 = vshrl.u32 %v390, 16
        %v653 = vrot.slane %v651, 7
        %v654 = vshll.u32 %v390, 16
        %v656 = vor.u32 %v653, %v654
        %v657 = vsel %vm409, %v649, %v656
        %v658 = vrot.slane %v653, 4
        %v660 = vshrl.u32 %v391, 16
        %v662 = vrot.slane %v660, 7
        %v663 = vshll.u32 %v391, 16
        %v665 = vor.u32 %v662, %v663
        %v666 = vsel %vm409, %v658, %v665
        %v667 = vrot.slane %v662, 4
        %v669 = vshrl.u32 %v392, 16
        %v671 = vrot.slane %v669, 7
        %v672 = vshll.u32 %v392, 16
        %v674 = vor.u32 %v671, %v672
        %v675 = vsel %vm409, %v667, %v674
        %v676 = vrot.slane %v671, 4
        %v678 = vshrl.u32 %v393, 16
        %v680 = vrot.slane %v678, 7
        %v681 = vshll.u32 %v393, 16
        %v683 = vor.u32 %v680, %v681
        %v684 = vsel %vm409, %v676, %v683
        %v685 = vrot.slane %v680, 4
        %v687 = vshrl.u32 %v394, 16
        %v689 = vrot.slane %v687, 7
        %v690 = vshll.u32 %v394, 16
        %v692 = vor.u32 %v689, %v690
        %v693 = vsel %vm409, %v685, %v692
        %v694 = vrot.slane %v689, 4
        %v696 = vshrl.u32 %v395, 16
        %v698 = vrot.slane %v696, 7
        %v699 = vshll.u32 %v395, 16
        %v701 = vor.u32 %v698, %v699
        %v702 = vsel %vm409, %v694, %v701
        %v703 = vrot.slane %v698, 4
        %v705 = vshrl.u32 %v396, 16
        %v707 = vrot.slane %v705, 7
        %v708 = vshll.u32 %v396, 16
        %v710 = vor.u32 %v707, %v708
        %v711 = vsel %vm409, %v703, %v710
        %v712 = vrot.slane %v707, 4
        %v714 = vshrl.u32 %v397, 16
        %v716 = vrot.slane %v714, 7
        %v717 = vshll.u32 %v397, 16
        %v719 = vor.u32 %v716, %v717
        %v720 = vsel %vm409, %v712, %v719
        %v721 = vrot.slane %v716, 4
        %v723 = vshrl.u32 %v398, 16
        %v725 = vrot.slane %v723, 7
        %v726 = vshll.u32 %v398, 16
        %v728 = vor.u32 %v725, %v726
        %v729 = vsel %vm409, %v721, %v728
        %v730 = vrot.slane %v725, 4
        %v732 = vshrl.u32 %v399, 16
        %v734 = vrot.slane %v732, 7
        %v735 = vshll.u32 %v399, 16
        %v737 = vor.u32 %v734, %v735
        %v738 = vsel %vm409, %v730, %v737
        %v739 = vrot.slane %v734, 4
        %v741 = vshrl.u32 %v400, 16
        %v743 = vrot.slane %v741, 7
        %v744 = vshll.u32 %v400, 16
        %v746 = vor.u32 %v743, %v744
        %v747 = vsel %vm409, %v739, %v746
        %v748 = vrot.slane %v743, 4
        %v750 = vshrl.u32 %v401, 16
        %v752 = vrot.slane %v750, 7
        %v753 = vshll.u32 %v401, 16
        %v755 = vor.u32 %v752, %v753
        %v756 = vsel %vm409, %v748, %v755
        %789 = vst [vmem:[#allocation2 + $0x18] sm:$0xf] %v477
        %790 = vst [vmem:[#allocation2 + $0x24] sm:$0xf] %v486
        %791 = vst [vmem:[#allocation2 + $0x30] sm:$0xf] %v495
        %792 = vst [vmem:[#allocation2 + $0x3c] sm:$0xf] %v504
        %793 = vst [vmem:[#allocation2 + $0x48] sm:$0xf] %v513
        %794 = vst [vmem:[#allocation2 + $0x54] sm:$0xf] %v522
        %795 = vst [vmem:[#allocation2 + $0x60] sm:$0xf] %v531
        %796 = vst [vmem:[#allocation2 + $0x6c] sm:$0xf] %v540
        %797 = vst [vmem:[#allocation2 + $0x78] sm:$0xf] %v549
        %798 = vst [vmem:[#allocation2 + $0x84] sm:$0xf] %v558
        %799 = vst [vmem:[#allocation2 + $0x90] sm:$0xf] %v567
        %800 = vst [vmem:[#allocation2 + $0x9c] sm:$0xf] %v576
        %801 = vst [vmem:[#allocation2 + $0xa8] sm:$0xf] %v585
        %802 = vst [vmem:[#allocation2 + $0xb4] sm:$0xf] %v594
        %803 = vst [vmem:[#allocation2 + $0xc0] sm:$0xf] %v603
        %804 = vst [vmem:[#allocation2 + $0xcc] sm:$0xf] %v612
        %805 = vst [vmem:[#allocation2 + $0xd8] sm:$0xf] %v621
        %806 = vst [vmem:[#allocation2 + $0xe4] sm:$0xf] %v630
        %807 = vst [vmem:[#allocation2 + $0xf0] sm:$0xf] %v639
        %808 = vst [vmem:[#allocation2 + $0xfc] sm:$0xf] %v648
        %809 = vst [vmem:[#allocation2 + $0x108] sm:$0xf] %v657
        %810 = vst [vmem:[#allocation2 + $0x114] sm:$0xf] %v666
        %811 = vst [vmem:[#allocation2 + $0x120] sm:$0xf] %v675
        %812 = vst [vmem:[#allocation2 + $0x12c] sm:$0xf] %v684
        %813 = vst [vmem:[#allocation2 + $0x138] sm:$0xf] %v693
        %814 = vst [vmem:[#allocation2 + $0x144] sm:$0xf] %v702
        %815 = vst [vmem:[#allocation2 + $0x150] sm:$0xf] %v711
        %816 = vst [vmem:[#allocation2 + $0x15c] sm:$0xf] %v720
        %817 = vst [vmem:[#allocation2 + $0x168] sm:$0xf] %v729
        %818 = vst [vmem:[#allocation2 + $0x174] sm:$0xf] %v738
        %819 = vst [vmem:[#allocation2 + $0x180] sm:$0xf] %v747
        %820 = vst [vmem:[#allocation2 + $0x18c] sm:$0xf] %v756
        %v822 = vshrl.u32 %v432, 16
        %v824 = vrot.slane %v822, 4
        %v825 = vshll.u32 %v432, 16
        %v827 = vrot.slane %v825, 5
        %v828 = vor.u32 %v824, %v827
        %v829 = vrot.slane %v828, 4
        %v831 = vshll.u32 %v433, 16
        %v833 = vrot.slane %v831, 5
        %v834 = vsel %vm344, %v829, %v833
        %v835 = vshrl.u32 %v433, 16
        %v837 = vrot.slane %v835, 4
        %v838 = vor.u32 %v837, %v833
        %v839 = vrot.slane %v838, 4
        %v841 = vshll.u32 %v434, 16
        %v843 = vrot.slane %v841, 5
        %v844 = vsel %vm344, %v839, %v843
        %v845 = vshrl.u32 %v434, 16
        %v847 = vrot.slane %v845, 4
        %v848 = vor.u32 %v847, %v843
        %v849 = vrot.slane %v848, 4
        %v851 = vshll.u32 %v435, 16
        %v853 = vrot.slane %v851, 5
        %v854 = vsel %vm344, %v849, %v853
        %v855 = vshrl.u32 %v435, 16
        %v857 = vrot.slane %v855, 4
        %v858 = vor.u32 %v857, %v853
        %v859 = vrot.slane %v858, 4
        %v861 = vshll.u32 %v436, 16
        %v863 = vrot.slane %v861, 5
        %v864 = vsel %vm344, %v859, %v863
        %v865 = vshrl.u32 %v436, 16
        %v867 = vrot.slane %v865, 4
        %v868 = vor.u32 %v867, %v863
        %v869 = vrot.slane %v868, 4
        %v871 = vshll.u32 %v437, 16
        %v873 = vrot.slane %v871, 5
        %v874 = vsel %vm344, %v869, %v873
        %v875 = vshrl.u32 %v437, 16
        %v877 = vrot.slane %v875, 4
        %v878 = vor.u32 %v877, %v873
        %v879 = vrot.slane %v878, 4
        %v881 = vshll.u32 %v438, 16
        %v883 = vrot.slane %v881, 5
        %v884 = vsel %vm344, %v879, %v883
        %v885 = vshrl.u32 %v438, 16
        %v887 = vrot.slane %v885, 4
        %v888 = vor.u32 %v887, %v883
        %v889 = vrot.slane %v888, 4
        %v891 = vshll.u32 %v439, 16
        %v893 = vrot.slane %v891, 5
        %v894 = vsel %vm344, %v889, %v893
        %v895 = vshrl.u32 %v439, 16
        %v897 = vrot.slane %v895, 4
        %v898 = vor.u32 %v897, %v893
        %v899 = vrot.slane %v898, 4
        %v901 = vshll.u32 %v440, 16
        %v903 = vrot.slane %v901, 5
        %v904 = vsel %vm344, %v899, %v903
        %v905 = vshrl.u32 %v440, 16
        %v907 = vrot.slane %v905, 4
        %v908 = vor.u32 %v907, %v903
        %v909 = vrot.slane %v908, 4
        %v911 = vshll.u32 %v441, 16
        %v913 = vrot.slane %v911, 5
        %v914 = vsel %vm344, %v909, %v913
        %v915 = vshrl.u32 %v441, 16
        %v917 = vrot.slane %v915, 4
        %v918 = vor.u32 %v917, %v913
        %v919 = vrot.slane %v918, 4
        %v921 = vshll.u32 %v442, 16
        %v923 = vrot.slane %v921, 5
        %v924 = vsel %vm344, %v919, %v923
        %v925 = vshrl.u32 %v442, 16
        %v927 = vrot.slane %v925, 4
        %v928 = vor.u32 %v927, %v923
        %v929 = vrot.slane %v928, 4
        %v931 = vshll.u32 %v443, 16
        %v933 = vrot.slane %v931, 5
        %v934 = vsel %vm344, %v929, %v933
        %v935 = vshrl.u32 %v443, 16
        %v937 = vrot.slane %v935, 4
        %v938 = vor.u32 %v937, %v933
        %v939 = vrot.slane %v938, 4
        %v941 = vshll.u32 %v444, 16
        %v943 = vrot.slane %v941, 5
        %v944 = vsel %vm344, %v939, %v943
        %v945 = vshrl.u32 %v444, 16
        %v947 = vrot.slane %v945, 4
        %v948 = vor.u32 %v947, %v943
        %v949 = vrot.slane %v948, 4
        %v951 = vshll.u32 %v445, 16
        %v953 = vrot.slane %v951, 5
        %v954 = vsel %vm344, %v949, %v953
        %v955 = vshrl.u32 %v445, 16
        %v957 = vrot.slane %v955, 4
        %v958 = vor.u32 %v957, %v953
        %v959 = vrot.slane %v958, 4
        %v961 = vshll.u32 %v446, 16
        %v963 = vrot.slane %v961, 5
        %v964 = vsel %vm344, %v959, %v963
        %v965 = vshrl.u32 %v446, 16
        %v967 = vrot.slane %v965, 4
        %v968 = vor.u32 %v967, %v963
        %v969 = vrot.slane %v968, 4
        %v971 = vshll.u32 %v447, 16
        %v973 = vrot.slane %v971, 5
        %v974 = vsel %vm344, %v969, %v973
        %v975 = vshrl.u32 %v447, 16
        %v977 = vrot.slane %v975, 4
        %v978 = vor.u32 %v977, %v973
        %v979 = vrot.slane %v978, 4
        %v981 = vshll.u32 %v448, 16
        %v983 = vrot.slane %v981, 5
        %v984 = vsel %vm344, %v979, %v983
        %v985 = vshrl.u32 %v448, 16
        %v987 = vrot.slane %v985, 4
        %v988 = vor.u32 %v987, %v983
        %v989 = vrot.slane %v988, 4
        %v991 = vshll.u32 %v449, 16
        %v993 = vrot.slane %v991, 5
        %v994 = vsel %vm344, %v989, %v993
        %v995 = vshrl.u32 %v449, 16
        %v997 = vrot.slane %v995, 4
        %v998 = vor.u32 %v997, %v993
        %v999 = vrot.slane %v998, 4
        %v1001 = vshll.u32 %v450, 16
        %v1003 = vrot.slane %v1001, 5
        %v1004 = vsel %vm344, %v999, %v1003
        %v1005 = vshrl.u32 %v450, 16
        %v1007 = vrot.slane %v1005, 4
        %v1008 = vor.u32 %v1007, %v1003
        %v1009 = vrot.slane %v1008, 4
        %v1011 = vshll.u32 %v451, 16
        %v1013 = vrot.slane %v1011, 5
        %v1014 = vsel %vm344, %v1009, %v1013
        %v1015 = vshrl.u32 %v451, 16
        %v1017 = vrot.slane %v1015, 4
        %v1018 = vor.u32 %v1017, %v1013
        %v1019 = vrot.slane %v1018, 4
        %v1021 = vshll.u32 %v452, 16
        %v1023 = vrot.slane %v1021, 5
        %v1024 = vsel %vm344, %v1019, %v1023
        %v1025 = vshrl.u32 %v452, 16
        %v1027 = vrot.slane %v1025, 4
        %v1028 = vor.u32 %v1027, %v1023
        %v1029 = vrot.slane %v1028, 4
        %v1031 = vshll.u32 %v453, 16
        %v1033 = vrot.slane %v1031, 5
        %v1034 = vsel %vm344, %v1029, %v1033
        %v1035 = vshrl.u32 %v453, 16
        %v1037 = vrot.slane %v1035, 4
        %v1038 = vor.u32 %v1037, %v1033
        %v1039 = vrot.slane %v1038, 4
        %v1041 = vshll.u32 %v454, 16
        %v1043 = vrot.slane %v1041, 5
        %v1044 = vsel %vm344, %v1039, %v1043
        %v1045 = vshrl.u32 %v454, 16
        %v1047 = vrot.slane %v1045, 4
        %v1048 = vor.u32 %v1047, %v1043
        %v1049 = vrot.slane %v1048, 4
        %v1051 = vshll.u32 %v455, 16
        %v1053 = vrot.slane %v1051, 5
        %v1054 = vsel %vm344, %v1049, %v1053
        %v1055 = vshrl.u32 %v455, 16
        %v1057 = vrot.slane %v1055, 4
        %v1058 = vor.u32 %v1057, %v1053
        %v1059 = vrot.slane %v1058, 4
        %v1061 = vshll.u32 %v456, 16
        %v1063 = vrot.slane %v1061, 5
        %v1064 = vsel %vm344, %v1059, %v1063
        %v1065 = vshrl.u32 %v456, 16
        %v1067 = vrot.slane %v1065, 4
        %v1068 = vor.u32 %v1067, %v1063
        %v1069 = vrot.slane %v1068, 4
        %v1071 = vshll.u32 %v457, 16
        %v1073 = vrot.slane %v1071, 5
        %v1074 = vsel %vm344, %v1069, %v1073
        %v1075 = vshrl.u32 %v457, 16
        %v1077 = vrot.slane %v1075, 4
        %v1078 = vor.u32 %v1077, %v1073
        %v1079 = vrot.slane %v1078, 4
        %v1081 = vshll.u32 %v458, 16
        %v1083 = vrot.slane %v1081, 5
        %v1084 = vsel %vm344, %v1079, %v1083
        %v1085 = vshrl.u32 %v458, 16
        %v1087 = vrot.slane %v1085, 4
        %v1088 = vor.u32 %v1087, %v1083
        %v1089 = vrot.slane %v1088, 4
        %v1091 = vshll.u32 %v459, 16
        %v1093 = vrot.slane %v1091, 5
        %v1094 = vsel %vm344, %v1089, %v1093
        %v1095 = vshrl.u32 %v459, 16
        %v1097 = vrot.slane %v1095, 4
        %v1098 = vor.u32 %v1097, %v1093
        %v1099 = vrot.slane %v1098, 4
        %v1101 = vshll.u32 %v460, 16
        %v1103 = vrot.slane %v1101, 5
        %v1104 = vsel %vm344, %v1099, %v1103
        %v1105 = vshrl.u32 %v460, 16
        %v1107 = vrot.slane %v1105, 4
        %v1108 = vor.u32 %v1107, %v1103
        %v1109 = vrot.slane %v1108, 4
        %v1111 = vshll.u32 %v461, 16
        %v1113 = vrot.slane %v1111, 5
        %v1114 = vsel %vm344, %v1109, %v1113
        %v1115 = vshrl.u32 %v461, 16
        %v1117 = vrot.slane %v1115, 4
        %v1118 = vor.u32 %v1117, %v1113
        %v1119 = vrot.slane %v1118, 4
        %v1121 = vshll.u32 %v462, 16
        %v1123 = vrot.slane %v1121, 5
        %v1124 = vsel %vm344, %v1119, %v1123
        %v1125 = vshrl.u32 %v462, 16
        %v1127 = vrot.slane %v1125, 4
        %v1128 = vor.u32 %v1127, %v1123
        %v1129 = vrot.slane %v1128, 4
        %v1131 = vshll.u32 %v463, 16
        %v1133 = vrot.slane %v1131, 5
        %v1134 = vsel %vm344, %v1129, %v1133
        %v1135 = vshrl.u32 %v463, 16
        %v1137 = vrot.slane %v1135, 4
        %v1138 = vor.u32 %v1137, %v1133
        %v1139 = vrot.slane %v1138, 4
        %v1141 = vshll.u32 %v464, 16
        %v1143 = vrot.slane %v1141, 5
        %v1144 = vsel %vm344, %v1139, %v1143
        %1177 = vst [vmem:[#allocation2 + $0x20] sm:$0xf] %v834
        %1178 = vst [vmem:[#allocation2 + $0x2c] sm:$0xf] %v844
        %1179 = vst [vmem:[#allocation2 + $0x38] sm:$0xf] %v854
        %1180 = vst [vmem:[#allocation2 + $0x44] sm:$0xf] %v864
        %1181 = vst [vmem:[#allocation2 + $0x50] sm:$0xf] %v874
        %1182 = vst [vmem:[#allocation2 + $0x5c] sm:$0xf] %v884
        %1183 = vst [vmem:[#allocation2 + $0x68] sm:$0xf] %v894
        %1184 = vst [vmem:[#allocation2 + $0x74] sm:$0xf] %v904
        %1185 = vst [vmem:[#allocation2 + $0x80] sm:$0xf] %v914
        %1186 = vst [vmem:[#allocation2 + $0x8c] sm:$0xf] %v924
        %1187 = vst [vmem:[#allocation2 + $0x98] sm:$0xf] %v934
        %1188 = vst [vmem:[#allocation2 + $0xa4] sm:$0xf] %v944
        %1189 = vst [vmem:[#allocation2 + $0xb0] sm:$0xf] %v954
        %1190 = vst [vmem:[#allocation2 + $0xbc] sm:$0xf] %v964
        %1191 = vst [vmem:[#allocation2 + $0xc8] sm:$0xf] %v974
        %1192 = vst [vmem:[#allocation2 + $0xd4] sm:$0xf] %v984
        %1193 = vst [vmem:[#allocation2 + $0xe0] sm:$0xf] %v994
        %1194 = vst [vmem:[#allocation2 + $0xec] sm:$0xf] %v1004
        %1195 = vst [vmem:[#allocation2 + $0xf8] sm:$0xf] %v1014
        %1196 = vst [vmem:[#allocation2 + $0x104] sm:$0xf] %v1024
        %1197 = vst [vmem:[#allocation2 + $0x110] sm:$0xf] %v1034
        %1198 = vst [vmem:[#allocation2 + $0x11c] sm:$0xf] %v1044
        %1199 = vst [vmem:[#allocation2 + $0x128] sm:$0xf] %v1054
        %1200 = vst [vmem:[#allocation2 + $0x134] sm:$0xf] %v1064
        %1201 = vst [vmem:[#allocation2 + $0x140] sm:$0xf] %v1074
        %1202 = vst [vmem:[#allocation2 + $0x14c] sm:$0xf] %v1084
        %1203 = vst [vmem:[#allocation2 + $0x158] sm:$0xf] %v1094
        %1204 = vst [vmem:[#allocation2 + $0x164] sm:$0xf] %v1104
        %1205 = vst [vmem:[#allocation2 + $0x170] sm:$0xf] %v1114
        %1206 = vst [vmem:[#allocation2 + $0x17c] sm:$0xf] %v1124
        %1207 = vst [vmem:[#allocation2 + $0x188] sm:$0xf] %v1134
        %1208 = vst [vmem:[#allocation2 + $0x194] sm:$0xf] %v1144
        %v1209 = vld [vmem:[#allocation2] sm:$0xff]
        %v1210 = vld [vmem:[#allocation2 + $0x8] sm:$0xf]
        %v1211 = vld [vmem:[#allocation2 + $0xc] sm:$0xff]
        %v1212 = vld [vmem:[#allocation2 + $0x14] sm:$0xf]
        %v1213 = vld [vmem:[#allocation2 + $0x18] sm:$0xff]
        %v1214 = vld [vmem:[#allocation2 + $0x20] sm:$0xf]
        %v1215 = vld [vmem:[#allocation2 + $0x24] sm:$0xff]
        %v1216 = vld [vmem:[#allocation2 + $0x2c] sm:$0xf]
        %v1217 = vld [vmem:[#allocation2 + $0x30] sm:$0xff]
        %v1218 = vld [vmem:[#allocation2 + $0x38] sm:$0xf]
        %v1219 = vld [vmem:[#allocation2 + $0x3c] sm:$0xff]
        %v1220 = vld [vmem:[#allocation2 + $0x44] sm:$0xf]
        %v1221 = vld [vmem:[#allocation2 + $0x48] sm:$0xff]
        %v1222 = vld [vmem:[#allocation2 + $0x50] sm:$0xf]
        %v1223 = vld [vmem:[#allocation2 + $0x54] sm:$0xff]
        %v1224 = vld [vmem:[#allocation2 + $0x5c] sm:$0xf]
        %v1225 = vld [vmem:[#allocation2 + $0x60] sm:$0xff]
        %v1226 = vld [vmem:[#allocation2 + $0x68] sm:$0xf]
        %v1227 = vld [vmem:[#allocation2 + $0x6c] sm:$0xff]
        %v1228 = vld [vmem:[#allocation2 + $0x74] sm:$0xf]
        %v1229 = vld [vmem:[#allocation2 + $0x78] sm:$0xff]
        %v1230 = vld [vmem:[#allocation2 + $0x80] sm:$0xf]
        %v1231 = vld [vmem:[#allocation2 + $0x84] sm:$0xff]
        %v1232 = vld [vmem:[#allocation2 + $0x8c] sm:$0xf]
        %v1233 = vld [vmem:[#allocation2 + $0x90] sm:$0xff]
        %v1234 = vld [vmem:[#allocation2 + $0x98] sm:$0xf]
        %v1235 = vld [vmem:[#allocation2 + $0x9c] sm:$0xff]
        %v1236 = vld [vmem:[#allocation2 + $0xa4] sm:$0xf]
        %v1237 = vld [vmem:[#allocation2 + $0xa8] sm:$0xff]
        %v1238 = vld [vmem:[#allocation2 + $0xb0] sm:$0xf]
        %v1239 = vld [vmem:[#allocation2 + $0xb4] sm:$0xff]
        %v1240 = vld [vmem:[#allocation2 + $0xbc] sm:$0xf]
        %v1241 = vld [vmem:[#allocation2 + $0xc0] sm:$0xff]
        %v1242 = vld [vmem:[#allocation2 + $0xc8] sm:$0xf]
        %v1243 = vld [vmem:[#allocation2 + $0xcc] sm:$0xff]
        %v1244 = vld [vmem:[#allocation2 + $0xd4] sm:$0xf]
        %v1245 = vld [vmem:[#allocation2 + $0xd8] sm:$0xff]
        %v1246 = vld [vmem:[#allocation2 + $0xe0] sm:$0xf]
        %v1247 = vld [vmem:[#allocation2 + $0xe4] sm:$0xff]
        %v1248 = vld [vmem:[#allocation2 + $0xec] sm:$0xf]
        %v1249 = vld [vmem:[#allocation2 + $0xf0] sm:$0xff]
        %v1250 = vld [vmem:[#allocation2 + $0xf8] sm:$0xf]
        %v1251 = vld [vmem:[#allocation2 + $0xfc] sm:$0xff]
        %v1252 = vld [vmem:[#allocation2 + $0x104] sm:$0xf]
        %v1253 = vld [vmem:[#allocation2 + $0x108] sm:$0xff]
        %v1254 = vld [vmem:[#allocation2 + $0x110] sm:$0xf]
        %v1255 = vld [vmem:[#allocation2 + $0x114] sm:$0xff]
        %v1256 = vld [vmem:[#allocation2 + $0x11c] sm:$0xf]
        %v1257 = vld [vmem:[#allocation2 + $0x120] sm:$0xff]
        %v1258 = vld [vmem:[#allocation2 + $0x128] sm:$0xf]
        %v1259 = vld [vmem:[#allocation2 + $0x12c] sm:$0xff]
        %v1260 = vld [vmem:[#allocation2 + $0x134] sm:$0xf]
        %v1261 = vld [vmem:[#allocation2 + $0x138] sm:$0xff]
        %v1262 = vld [vmem:[#allocation2 + $0x140] sm:$0xf]
        %v1263 = vld [vmem:[#allocation2 + $0x144] sm:$0xff]
        %v1264 = vld [vmem:[#allocation2 + $0x14c] sm:$0xf]
        %v1265 = vld [vmem:[#allocation2 + $0x150] sm:$0xff]
        %v1266 = vld [vmem:[#allocation2 + $0x158] sm:$0xf]
        %v1267 = vld [vmem:[#allocation2 + $0x15c] sm:$0xff]
        %v1268 = vld [vmem:[#allocation2 + $0x164] sm:$0xf]
        %v1269 = vld [vmem:[#allocation2 + $0x168] sm:$0xff]
        %v1270 = vld [vmem:[#allocation2 + $0x170] sm:$0xf]
        %v1271 = vld [vmem:[#allocation2 + $0x174] sm:$0xff]
        %v1272 = vld [vmem:[#allocation2 + $0x17c] sm:$0xf]
        %v1273 = vld [vmem:[%s1] sm:$0xf]
        %v1274 = vld [vmem:[%s1 + $0x4] sm:$0xf]
        %v1275 = vld [vmem:[%s1 + $0x8] sm:$0xf]
        %v1276 = vld [vmem:[%s1 + $0xc] sm:$0xf]
        %v1277 = vld [vmem:[%s1 + $0x10] sm:$0xf]
        %v1278 = vld [vmem:[%s1 + $0x14] sm:$0xf]
        %v1279 = vld [vmem:[%s1 + $0x18] sm:$0xf]
        %v1280 = vld [vmem:[%s1 + $0x1c] sm:$0xf]
        %v1281 = vld [vmem:[%s1 + $0x20] sm:$0xf]
        %v1282 = vld [vmem:[%s1 + $0x24] sm:$0xf]
        %v1283 = vld [vmem:[%s1 + $0x28] sm:$0xf]
        %v1284 = vld [vmem:[%s1 + $0x2c] sm:$0xf]
        %v1285 = vld [vmem:[%s1 + $0x30] sm:$0xf]
        %v1286 = vld [vmem:[%s1 + $0x34] sm:$0xf]
        %v1287 = vld [vmem:[%s1 + $0x38] sm:$0xf]
        %v1288 = vld [vmem:[%s1 + $0x3c] sm:$0xf]
        %v1289 = vld [vmem:[%s1 + $0x40] sm:$0xf]
        %v1290 = vld [vmem:[%s1 + $0x44] sm:$0xf]
        %v1291 = vld [vmem:[%s1 + $0x48] sm:$0xf]
        %v1292 = vld [vmem:[%s1 + $0x4c] sm:$0xf]
        %v1293 = vld [vmem:[%s1 + $0x50] sm:$0xf]
        %v1294 = vld [vmem:[%s1 + $0x54] sm:$0xf]
        %v1295 = vld [vmem:[%s1 + $0x58] sm:$0xf]
        %v1296 = vld [vmem:[%s1 + $0x5c] sm:$0xf]
        %v1297 = vld [vmem:[%s1 + $0x60] sm:$0xf]
        %v1298 = vld [vmem:[%s1 + $0x64] sm:$0xf]
        %v1299 = vld [vmem:[%s1 + $0x68] sm:$0xf]
        %v1300 = vld [vmem:[%s1 + $0x6c] sm:$0xf]
        %v1301 = vld [vmem:[%s1 + $0x70] sm:$0xf]
        %v1302 = vld [vmem:[%s1 + $0x74] sm:$0xf]
        %v1303 = vld [vmem:[%s1 + $0x78] sm:$0xf]
        %v1304 = vld [vmem:[%s1 + $0x7c] sm:$0xf]
        %v1305 = vld [vmem:[%s1 + $0x80] sm:$0xf]
        %v1306 = vld [vmem:[%s1 + $0x84] sm:$0xf]
        %v1307 = vld [vmem:[%s1 + $0x88] sm:$0xf]
        %v1308 = vld [vmem:[%s1 + $0x8c] sm:$0xf]
        %v1309 = vld [vmem:[%s1 + $0x90] sm:$0xf]
        %v1310 = vld [vmem:[%s1 + $0x94] sm:$0xf]
        %v1311 = vld [vmem:[%s1 + $0x98] sm:$0xf]
        %v1312 = vld [vmem:[%s1 + $0x9c] sm:$0xf]
        %v1313 = vld [vmem:[%s1 + $0xa0] sm:$0xf]
        %v1314 = vld [vmem:[%s1 + $0xa4] sm:$0xf]
        %v1315 = vld [vmem:[%s1 + $0xa8] sm:$0xf]
        %v1316 = vld [vmem:[%s1 + $0xac] sm:$0xf]
        %v1317 = vld [vmem:[%s1 + $0xb0] sm:$0xf]
        %v1318 = vld [vmem:[%s1 + $0xb4] sm:$0xf]
        %v1319 = vld [vmem:[%s1 + $0xb8] sm:$0xf]
        %v1320 = vld [vmem:[%s1 + $0xbc] sm:$0xf]
        %v1321 = vld [vmem:[#allocation2 + $0x180] sm:$0xff]
        %v1322 = vld [vmem:[#allocation2 + $0x188] sm:$0xf]
        %v1323 = vld [vmem:[#allocation2 + $0x18c] sm:$0xff]
        %v1324 = vld [vmem:[#allocation2 + $0x194] sm:$0xf]
        %s1325 = scalar_lea.vmem %s1, 192
        %v1326 = vld [vmem:[%s1325] sm:$0xf]
        %v1327 = vld [vmem:[%s1325 + $0x4] sm:$0xf]
        %v1328 = vld [vmem:[%s1325 + $0x8] sm:$0xf]
        %v1329 = vld [vmem:[%s1325 + $0xc] sm:$0xf]
        %v1330 = vld [vmem:[%s1325 + $0x10] sm:$0xf]
        %v1331 = vld [vmem:[%s1325 + $0x14] sm:$0xf]
        %v1332 = vld [vmem:[%s1325 + $0x18] sm:$0xf]
        %v1333 = vld [vmem:[%s1325 + $0x1c] sm:$0xf]
        %v1334 = vld [vmem:[%s1325 + $0x20] sm:$0xf]
        %v1335 = vld [vmem:[%s1325 + $0x24] sm:$0xf]
        %v1336 = vld [vmem:[%s1325 + $0x28] sm:$0xf]
        %v1337 = vld [vmem:[%s1325 + $0x2c] sm:$0xf]
        %v1338 = vld [vmem:[%s1325 + $0x30] sm:$0xf]
        %v1339 = vld [vmem:[%s1325 + $0x34] sm:$0xf]
        %v1340 = vld [vmem:[%s1325 + $0x38] sm:$0xf]
        %v1341 = vld [vmem:[%s1325 + $0x3c] sm:$0xf]
        %v1342 = vld [vmem:[%s1325 + $0x40] sm:$0xf]
        %v1343 = vld [vmem:[%s1325 + $0x44] sm:$0xf]
        %v1344 = vld [vmem:[%s1325 + $0x48] sm:$0xf]
        %v1345 = vld [vmem:[%s1325 + $0x4c] sm:$0xf]
        %v1346 = vld [vmem:[%s1325 + $0x50] sm:$0xf]
        %v1347 = vld [vmem:[%s1325 + $0x54] sm:$0xf]
        %v1348 = vld [vmem:[%s1325 + $0x58] sm:$0xf]
        %v1349 = vld [vmem:[%s1325 + $0x5c] sm:$0xf]
        %v1350 = vld [vmem:[%s1325 + $0x60] sm:$0xf]
        %v1351 = vld [vmem:[%s1325 + $0x64] sm:$0xf]
        %v1352 = vld [vmem:[%s1325 + $0x68] sm:$0xf]
        %v1353 = vld [vmem:[%s1325 + $0x6c] sm:$0xf]
        %v1354 = vld [vmem:[%s1325 + $0x70] sm:$0xf]
        %v1355 = vld [vmem:[%s1325 + $0x74] sm:$0xf]
        %v1356 = vld [vmem:[%s1325 + $0x78] sm:$0xf]
        %v1357 = vld [vmem:[%s1325 + $0x7c] sm:$0xf]
        %v1358 = vld [vmem:[%s1325 + $0x80] sm:$0xf]
        %v1359 = vld [vmem:[%s1325 + $0x84] sm:$0xf]
        %v1360 = vld [vmem:[%s1325 + $0x88] sm:$0xf]
        %v1361 = vld [vmem:[%s1325 + $0x8c] sm:$0xf]
        %v1362 = vld [vmem:[%s1325 + $0x90] sm:$0xf]
        %v1363 = vld [vmem:[%s1325 + $0x94] sm:$0xf]
        %v1364 = vld [vmem:[%s1325 + $0x98] sm:$0xf]
        %v1365 = vld [vmem:[%s1325 + $0x9c] sm:$0xf]
        %v1366 = vld [vmem:[%s1325 + $0xa0] sm:$0xf]
        %v1367 = vld [vmem:[%s1325 + $0xa4] sm:$0xf]
        %v1368 = vld [vmem:[%s1325 + $0xa8] sm:$0xf]
        %v1369 = vld [vmem:[%s1325 + $0xac] sm:$0xf]
        %v1370 = vld [vmem:[%s1325 + $0xb0] sm:$0xf]
        %v1371 = vld [vmem:[%s1325 + $0xb4] sm:$0xf]
        %v1372 = vld [vmem:[%s1325 + $0xb8] sm:$0xf]
        %v1373 = vld [vmem:[%s1325 + $0xbc] sm:$0xf]
        %v1438 = vunpack.c.l.b16 %v1213
        %v1439 = vunpack.c.h.b16 %v1213
        %v1440 = vunpack.c.l.b16 %v1214
        %v1441 = vunpack.c.l.b16 %v1215
        %v1442 = vunpack.c.h.b16 %v1215
        %v1443 = vunpack.c.l.b16 %v1216
        %v1444 = vunpack.c.l.b16 %v1217
        %v1445 = vunpack.c.h.b16 %v1217
        %v1446 = vunpack.c.l.b16 %v1218
        %v1447 = vunpack.c.l.b16 %v1219
        %v1448 = vunpack.c.h.b16 %v1219
        %v1449 = vunpack.c.l.b16 %v1220
        %v1450 = vunpack.c.l.b16 %v1221
        %v1451 = vunpack.c.h.b16 %v1221
        %v1452 = vunpack.c.l.b16 %v1222
        %v1453 = vunpack.c.l.b16 %v1223
        %v1454 = vunpack.c.h.b16 %v1223
        %v1455 = vunpack.c.l.b16 %v1224
        %v1456 = vunpack.c.l.b16 %v1225
        %v1457 = vunpack.c.h.b16 %v1225
        %v1458 = vunpack.c.l.b16 %v1226
        %v1459 = vunpack.c.l.b16 %v1227
        %v1460 = vunpack.c.h.b16 %v1227
        %v1461 = vunpack.c.l.b16 %v1228
        %v1462 = vunpack.c.l.b16 %v1229
        %v1463 = vunpack.c.h.b16 %v1229
        %v1464 = vunpack.c.l.b16 %v1230
        %v1465 = vunpack.c.l.b16 %v1231
        %v1466 = vunpack.c.h.b16 %v1231
        %v1467 = vunpack.c.l.b16 %v1232
        %v1468 = vunpack.c.l.b16 %v1233
        %v1469 = vunpack.c.h.b16 %v1233
        %v1470 = vunpack.c.l.b16 %v1234
        %v1471 = vunpack.c.l.b16 %v1235
        %v1472 = vunpack.c.h.b16 %v1235
        %v1473 = vunpack.c.l.b16 %v1236
        %v1474 = vunpack.c.l.b16 %v1237
        %v1475 = vunpack.c.h.b16 %v1237
        %v1476 = vunpack.c.l.b16 %v1238
        %v1477 = vunpack.c.l.b16 %v1239
        %v1478 = vunpack.c.h.b16 %v1239
        %v1479 = vunpack.c.l.b16 %v1240
        %v1480 = vunpack.c.l.b16 %v1241
        %v1481 = vunpack.c.h.b16 %v1241
        %v1482 = vunpack.c.l.b16 %v1242
        %v1483 = vunpack.c.l.b16 %v1243
        %v1484 = vunpack.c.h.b16 %v1243
        %v1485 = vunpack.c.l.b16 %v1244
        %v1486 = vunpack.c.l.b16 %v1245
        %v1487 = vunpack.c.h.b16 %v1245
        %v1488 = vunpack.c.l.b16 %v1246
        %v1489 = vunpack.c.l.b16 %v1247
        %v1490 = vunpack.c.h.b16 %v1247
        %v1491 = vunpack.c.l.b16 %v1248
        %v1492 = vunpack.c.l.b16 %v1249
        %v1493 = vunpack.c.h.b16 %v1249
        %v1494 = vunpack.c.l.b16 %v1250
        %v1495 = vunpack.c.l.b16 %v1251
        %v1496 = vunpack.c.h.b16 %v1251
        %v1497 = vunpack.c.l.b16 %v1252
        %v1498 = vunpack.c.l.b16 %v1253
        %v1499 = vunpack.c.h.b16 %v1253
        %v1500 = vunpack.c.l.b16 %v1254
        %v1501 = vunpack.c.l.b16 %v1255
        %v1502 = vunpack.c.h.b16 %v1255
        %v1503 = vunpack.c.l.b16 %v1256
        %v1504 = vunpack.c.l.b16 %v1257
        %v1505 = vunpack.c.h.b16 %v1257
        %v1506 = vunpack.c.l.b16 %v1258
        %v1507 = vunpack.c.l.b16 %v1259
        %v1508 = vunpack.c.h.b16 %v1259
        %v1509 = vunpack.c.l.b16 %v1260
        %v1510 = vunpack.c.l.b16 %v1261
        %v1511 = vunpack.c.h.b16 %v1261
        %v1512 = vunpack.c.l.b16 %v1262
        %v1513 = vunpack.c.l.b16 %v1263
        %v1514 = vunpack.c.h.b16 %v1263
        %v1515 = vunpack.c.l.b16 %v1264
        %v1516 = vunpack.c.l.b16 %v1265
        %v1517 = vunpack.c.h.b16 %v1265
        %v1518 = vunpack.c.l.b16 %v1266
        %v1519 = vunpack.c.l.b16 %v1267
        %v1520 = vunpack.c.h.b16 %v1267
        %v1521 = vunpack.c.l.b16 %v1268
        %v1522 = vunpack.c.l.b16 %v1269
        %v1523 = vunpack.c.h.b16 %v1269
        %v1524 = vunpack.c.l.b16 %v1270
        %v1525 = vunpack.c.l.b16 %v1271
        %v1526 = vunpack.c.h.b16 %v1271
        %v1527 = vunpack.c.l.b16 %v1272
        %v1528 = vunpack.c.l.b16 %v1321
        %v1529 = vunpack.c.h.b16 %v1321
        %v1530 = vunpack.c.l.b16 %v1322
        %v1531 = vunpack.c.l.b16 %v1323
        %v1532 = vunpack.c.h.b16 %v1323
        %v1533 = vunpack.c.l.b16 %v1324
        %v1534 = vpack.c.b16 %v1441, %v1438
        %v1535 = vpack.c.b16 %v1442, %v1439
        %v1536 = vpack.c.b16 %v1443, %v1440
        %v1537 = vpack.c.b16 %v1447, %v1444
        %v1538 = vpack.c.b16 %v1448, %v1445
        %v1539 = vpack.c.b16 %v1449, %v1446
        %v1540 = vpack.c.b16 %v1453, %v1450
        %v1541 = vpack.c.b16 %v1454, %v1451
        %v1542 = vpack.c.b16 %v1455, %v1452
        %v1543 = vpack.c.b16 %v1459, %v1456
        %v1544 = vpack.c.b16 %v1460, %v1457
        %v1545 = vpack.c.b16 %v1461, %v1458
        %v1546 = vpack.c.b16 %v1465, %v1462
        %v1547 = vpack.c.b16 %v1466, %v1463
        %v1548 = vpack.c.b16 %v1467, %v1464
        %v1549 = vpack.c.b16 %v1471, %v1468
        %v1550 = vpack.c.b16 %v1472, %v1469
        %v1551 = vpack.c.b16 %v1473, %v1470
        %v1552 = vpack.c.b16 %v1477, %v1474
        %v1553 = vpack.c.b16 %v1478, %v1475
        %v1554 = vpack.c.b16 %v1479, %v1476
        %v1555 = vpack.c.b16 %v1483, %v1480
        %v1556 = vpack.c.b16 %v1484, %v1481
        %v1557 = vpack.c.b16 %v1485, %v1482
        %v1558 = vpack.c.b16 %v1489, %v1486
        %v1559 = vpack.c.b16 %v1490, %v1487
        %v1560 = vpack.c.b16 %v1491, %v1488
        %v1561 = vpack.c.b16 %v1495, %v1492
        %v1562 = vpack.c.b16 %v1496, %v1493
        %v1563 = vpack.c.b16 %v1497, %v1494
        %v1564 = vpack.c.b16 %v1501, %v1498
        %v1565 = vpack.c.b16 %v1502, %v1499
        %v1566 = vpack.c.b16 %v1503, %v1500
        %v1567 = vpack.c.b16 %v1507, %v1504
        %v1568 = vpack.c.b16 %v1508, %v1505
        %v1569 = vpack.c.b16 %v1509, %v1506
        %v1570 = vpack.c.b16 %v1513, %v1510
        %v1571 = vpack.c.b16 %v1514, %v1511
        %v1572 = vpack.c.b16 %v1515, %v1512
        %v1573 = vpack.c.b16 %v1519, %v1516
        %v1574 = vpack.c.b16 %v1520, %v1517
        %v1575 = vpack.c.b16 %v1521, %v1518
        %v1576 = vpack.c.b16 %v1525, %v1522
        %v1577 = vpack.c.b16 %v1526, %v1523
        %v1578 = vpack.c.b16 %v1527, %v1524
        %v1579 = vpack.c.b16 %v1531, %v1528
        %v1580 = vpack.c.b16 %v1532, %v1529
        %v1581 = vpack.c.b16 %v1533, %v1530
        %v1678 = vunpack.c.l.b16 %v1326
        %v1679 = vunpack.c.l.b16 %v1327
        %v1680 = vunpack.c.l.b16 %v1328
        %v1681 = vunpack.c.l.b16 %v1329
        %v1682 = vunpack.c.l.b16 %v1330
        %v1683 = vunpack.c.l.b16 %v1331
        %v1684 = vunpack.c.l.b16 %v1332
        %v1685 = vunpack.c.l.b16 %v1333
        %v1686 = vunpack.c.l.b16 %v1334
        %v1687 = vunpack.c.l.b16 %v1335
        %v1688 = vunpack.c.l.b16 %v1336
        %v1689 = vunpack.c.l.b16 %v1337
        %v1690 = vunpack.c.l.b16 %v1338
        %v1691 = vunpack.c.l.b16 %v1339
        %v1692 = vunpack.c.l.b16 %v1340
        %v1693 = vunpack.c.l.b16 %v1341
        %v1694 = vunpack.c.l.b16 %v1342
        %v1695 = vunpack.c.l.b16 %v1343
        %v1696 = vunpack.c.l.b16 %v1344
        %v1697 = vunpack.c.l.b16 %v1345
        %v1698 = vunpack.c.l.b16 %v1346
        %v1699 = vunpack.c.l.b16 %v1347
        %v1700 = vunpack.c.l.b16 %v1348
        %v1701 = vunpack.c.l.b16 %v1349
        %v1702 = vunpack.c.l.b16 %v1350
        %v1703 = vunpack.c.l.b16 %v1351
        %v1704 = vunpack.c.l.b16 %v1352
        %v1705 = vunpack.c.l.b16 %v1353
        %v1706 = vunpack.c.l.b16 %v1354
        %v1707 = vunpack.c.l.b16 %v1355
        %v1708 = vunpack.c.l.b16 %v1356
        %v1709 = vunpack.c.l.b16 %v1357
        %v1710 = vunpack.c.l.b16 %v1358
        %v1711 = vunpack.c.l.b16 %v1359
        %v1712 = vunpack.c.l.b16 %v1360
        %v1713 = vunpack.c.l.b16 %v1361
        %v1714 = vunpack.c.l.b16 %v1362
        %v1715 = vunpack.c.l.b16 %v1363
        %v1716 = vunpack.c.l.b16 %v1364
        %v1717 = vunpack.c.l.b16 %v1365
        %v1718 = vunpack.c.l.b16 %v1366
        %v1719 = vunpack.c.l.b16 %v1367
        %v1720 = vunpack.c.l.b16 %v1368
        %v1721 = vunpack.c.l.b16 %v1369
        %v1722 = vunpack.c.l.b16 %v1370
        %v1723 = vunpack.c.l.b16 %v1371
        %v1724 = vunpack.c.l.b16 %v1372
        %v1725 = vunpack.c.l.b16 %v1373
        %v1726 = vpack.c.b16 %v1679, %v1678
        %v1727 = vpack.c.b16 %v1681, %v1680
        %v1728 = vpack.c.b16 %v1683, %v1682
        %v1729 = vpack.c.b16 %v1685, %v1684
        %v1730 = vpack.c.b16 %v1687, %v1686
        %v1731 = vpack.c.b16 %v1689, %v1688
        %v1732 = vpack.c.b16 %v1691, %v1690
        %v1733 = vpack.c.b16 %v1693, %v1692
        %v1734 = vpack.c.b16 %v1695, %v1694
        %v1735 = vpack.c.b16 %v1697, %v1696
        %v1736 = vpack.c.b16 %v1699, %v1698
        %v1737 = vpack.c.b16 %v1701, %v1700
        %v1738 = vpack.c.b16 %v1703, %v1702
        %v1739 = vpack.c.b16 %v1705, %v1704
        %v1740 = vpack.c.b16 %v1707, %v1706
        %v1741 = vpack.c.b16 %v1709, %v1708
        %v1742 = vpack.c.b16 %v1711, %v1710
        %v1743 = vpack.c.b16 %v1713, %v1712
        %v1744 = vpack.c.b16 %v1715, %v1714
        %v1745 = vpack.c.b16 %v1717, %v1716
        %v1746 = vpack.c.b16 %v1719, %v1718
        %v1747 = vpack.c.b16 %v1721, %v1720
        %v1748 = vpack.c.b16 %v1723, %v1722
        %v1749 = vpack.c.b16 %v1725, %v1724
        %1774 = vmatprep.subr.bf16.mxu0 0
        %1775 = vmatpush1.bf16.msra.mxu0 %v1733
        %1776 = vmatprep.subr.bf16.mxu0 0
        %1777 = vmatpush1.bf16.msra.mxu0 %v1732
        %1778 = vmatprep.subr.bf16.mxu0 0
        %1779 = vmatpush1.bf16.msra.mxu0 %v1731
        %1780 = vmatprep.subr.bf16.mxu0 0
        %1781 = vmatpush1.bf16.msra.mxu0 %v1730
        %1782 = vmatprep.subr.bf16.mxu0 0
        %1783 = vmatpush1.bf16.msra.mxu0 %v1729
        %1784 = vmatprep.subr.bf16.mxu0 0
        %1785 = vmatpush1.bf16.msra.mxu0 %v1728
        %1786 = vmatprep.subr.bf16.mxu0 0
        %1787 = vmatpush1.bf16.msra.mxu0 %v1727
        %1788 = vmatprep.subr.bf16.mxu0 0
        %1789 = vmatpush1.bf16.msra.mxu0 %v1726
        %1790 = vmatprep.subr.bf16.mxu0 0
        %1791 = vmatpush2.bf16.msra.mxu0 %v1741
        %1792 = vmatprep.subr.bf16.mxu0 0
        %1793 = vmatpush2.bf16.msra.mxu0 %v1740
        %1794 = vmatprep.subr.bf16.mxu0 0
        %1795 = vmatpush2.bf16.msra.mxu0 %v1739
        %1796 = vmatprep.subr.bf16.mxu0 0
        %1797 = vmatpush2.bf16.msra.mxu0 %v1738
        %1798 = vmatprep.subr.bf16.mxu0 0
        %1799 = vmatpush2.bf16.msra.mxu0 %v1737
        %1800 = vmatprep.subr.bf16.mxu0 0
        %1801 = vmatpush2.bf16.msra.mxu0 %v1736
        %1802 = vmatprep.subr.bf16.mxu0 0
        %1803 = vmatpush2.bf16.msra.mxu0 %v1735
        %1804 = vmatprep.subr.bf16.mxu0 0
        %1805 = vmatpush2.bf16.msra.mxu0 %v1734
        %1806 = vmatprep.mubr.bf16.mxu0 %v1535
        %1807 = vmatmul.mubr.bf16.gmra.mxu0 %v1534
        %v1808 = vpop.f32.mrf.mxu0
        %v1809 = vadd.f32 0.0, %v1808
        %v1810 = vpop.f32.mrf.mxu0
        %v1811 = vpop.f32.mrf.mxu0
        %v1812 = vadd.f32 0.0, %v1811
        %v1813 = vpop.f32.mrf.mxu0
        %1814 = vmatprep.mubr.bf16.mxu0 %v1538
        %1815 = vmatmul.mubr.bf16.gmra.mxu0 %v1537
        %v1816 = vpop.f32.mrf.mxu0
        %v1817 = vadd.f32 0.0, %v1816
        %v1818 = vpop.f32.mrf.mxu0
        %v1819 = vpop.f32.mrf.mxu0
        %v1820 = vadd.f32 0.0, %v1819
        %v1821 = vpop.f32.mrf.mxu0
        %1822 = vmatprep.mubr.bf16.mxu0 %v1541
        %1823 = vmatmul.mubr.bf16.gmra.mxu0 %v1540
        %v1824 = vpop.f32.mrf.mxu0
        %v1825 = vadd.f32 0.0, %v1824
        %v1826 = vpop.f32.mrf.mxu0
        %v1827 = vpop.f32.mrf.mxu0
        %v1828 = vadd.f32 0.0, %v1827
        %v1829 = vpop.f32.mrf.mxu0
        %1830 = vmatprep.mubr.bf16.mxu0 %v1544
        %1831 = vmatmul.mubr.bf16.gmra.mxu0 %v1543
        %v1832 = vpop.f32.mrf.mxu0
        %v1833 = vadd.f32 0.0, %v1832
        %v1834 = vpop.f32.mrf.mxu0
        %v1835 = vpop.f32.mrf.mxu0
        %v1836 = vadd.f32 0.0, %v1835
        %v1837 = vpop.f32.mrf.mxu0
        %1838 = vmatprep.mubr.bf16.mxu0 %v1547
        %1839 = vmatmul.mubr.bf16.gmra.mxu0 %v1546
        %v1840 = vpop.f32.mrf.mxu0
        %v1841 = vadd.f32 0.0, %v1840
        %v1842 = vpop.f32.mrf.mxu0
        %v1843 = vpop.f32.mrf.mxu0
        %v1844 = vadd.f32 0.0, %v1843
        %v1845 = vpop.f32.mrf.mxu0
        %1846 = vmatprep.mubr.bf16.mxu0 %v1550
        %1847 = vmatmul.mubr.bf16.gmra.mxu0 %v1549
        %v1848 = vpop.f32.mrf.mxu0
        %v1849 = vadd.f32 0.0, %v1848
        %v1850 = vpop.f32.mrf.mxu0
        %v1851 = vpop.f32.mrf.mxu0
        %v1852 = vadd.f32 0.0, %v1851
        %v1853 = vpop.f32.mrf.mxu0
        %1854 = vmatprep.mubr.bf16.mxu0 %v1553
        %1855 = vmatmul.mubr.bf16.gmra.mxu0 %v1552
        %v1856 = vpop.f32.mrf.mxu0
        %v1857 = vadd.f32 0.0, %v1856
        %v1858 = vpop.f32.mrf.mxu0
        %v1859 = vpop.f32.mrf.mxu0
        %v1860 = vadd.f32 0.0, %v1859
        %v1861 = vpop.f32.mrf.mxu0
        %1862 = vmatprep.mubr.bf16.mxu0 %v1556
        %1863 = vmatmul.mubr.bf16.gmra.mxu0 %v1555
        %v1864 = vpop.f32.mrf.mxu0
        %v1865 = vadd.f32 0.0, %v1864
        %v1866 = vpop.f32.mrf.mxu0
        %v1867 = vpop.f32.mrf.mxu0
        %v1868 = vadd.f32 0.0, %v1867
        %v1869 = vpop.f32.mrf.mxu0
        %1870 = vmatprep.mubr.bf16.mxu0 %v1559
        %1871 = vmatmul.mubr.bf16.gmra.mxu0 %v1558
        %v1872 = vpop.f32.mrf.mxu0
        %v1873 = vadd.f32 0.0, %v1872
        %v1874 = vpop.f32.mrf.mxu0
        %v1875 = vpop.f32.mrf.mxu0
        %v1876 = vadd.f32 0.0, %v1875
        %v1877 = vpop.f32.mrf.mxu0
        %1878 = vmatprep.mubr.bf16.mxu0 %v1562
        %1879 = vmatmul.mubr.bf16.gmra.mxu0 %v1561
        %v1880 = vpop.f32.mrf.mxu0
        %v1881 = vadd.f32 0.0, %v1880
        %v1882 = vpop.f32.mrf.mxu0
        %v1883 = vpop.f32.mrf.mxu0
        %v1884 = vadd.f32 0.0, %v1883
        %v1885 = vpop.f32.mrf.mxu0
        %1886 = vmatprep.mubr.bf16.mxu0 %v1565
        %1887 = vmatmul.mubr.bf16.gmra.mxu0 %v1564
        %v1888 = vpop.f32.mrf.mxu0
        %v1889 = vadd.f32 0.0, %v1888
        %v1890 = vpop.f32.mrf.mxu0
        %v1891 = vpop.f32.mrf.mxu0
        %v1892 = vadd.f32 0.0, %v1891
        %v1893 = vpop.f32.mrf.mxu0
        %1894 = vmatprep.mubr.bf16.mxu0 %v1568
        %1895 = vmatmul.mubr.bf16.gmra.mxu0 %v1567
        %v1896 = vpop.f32.mrf.mxu0
        %v1897 = vadd.f32 0.0, %v1896
        %v1898 = vpop.f32.mrf.mxu0
        %v1899 = vpop.f32.mrf.mxu0
        %v1900 = vadd.f32 0.0, %v1899
        %v1901 = vpop.f32.mrf.mxu0
        %1902 = vmatprep.mubr.bf16.mxu0 %v1571
        %1903 = vmatmul.mubr.bf16.gmra.mxu0 %v1570
        %v1904 = vpop.f32.mrf.mxu0
        %v1905 = vadd.f32 0.0, %v1904
        %v1906 = vpop.f32.mrf.mxu0
        %v1907 = vpop.f32.mrf.mxu0
        %v1908 = vadd.f32 0.0, %v1907
        %v1909 = vpop.f32.mrf.mxu0
        %1910 = vmatprep.mubr.bf16.mxu0 %v1574
        %1911 = vmatmul.mubr.bf16.gmra.mxu0 %v1573
        %v1912 = vpop.f32.mrf.mxu0
        %v1913 = vadd.f32 0.0, %v1912
        %v1914 = vpop.f32.mrf.mxu0
        %v1915 = vpop.f32.mrf.mxu0
        %v1916 = vadd.f32 0.0, %v1915
        %v1917 = vpop.f32.mrf.mxu0
        %1918 = vmatprep.mubr.bf16.mxu0 %v1577
        %1919 = vmatmul.mubr.bf16.gmra.mxu0 %v1576
        %v1920 = vpop.f32.mrf.mxu0
        %v1921 = vadd.f32 0.0, %v1920
        %v1922 = vpop.f32.mrf.mxu0
        %v1923 = vpop.f32.mrf.mxu0
        %v1924 = vadd.f32 0.0, %v1923
        %v1925 = vpop.f32.mrf.mxu0
        %1926 = vmatprep.mubr.bf16.mxu0 %v1580
        %1927 = vmatmul.mubr.bf16.gmra.mxu0 %v1579
        %v1928 = vpop.f32.mrf.mxu0
        %v1929 = vadd.f32 0.0, %v1928
        %v1930 = vpop.f32.mrf.mxu0
        %v1931 = vpop.f32.mrf.mxu0
        %v1932 = vadd.f32 0.0, %v1931
        %v1933 = vpop.f32.mrf.mxu0
        %1934 = vdwg.mxu0
        %1935 = vmatprep.subr.bf16.mxu0 0
        %1936 = vmatpush1.bf16.msra.mxu0 %v1749
        %1937 = vmatprep.subr.bf16.mxu0 0
        %1938 = vmatpush1.bf16.msra.mxu0 %v1748
        %1939 = vmatprep.subr.bf16.mxu0 0
        %1940 = vmatpush1.bf16.msra.mxu0 %v1747
        %1941 = vmatprep.subr.bf16.mxu0 0
        %1942 = vmatpush1.bf16.msra.mxu0 %v1746
        %1943 = vmatprep.subr.bf16.mxu0 0
        %1944 = vmatpush1.bf16.msra.mxu0 %v1745
        %1945 = vmatprep.subr.bf16.mxu0 0
        %1946 = vmatpush1.bf16.msra.mxu0 %v1744
        %1947 = vmatprep.subr.bf16.mxu0 0
        %1948 = vmatpush1.bf16.msra.mxu0 %v1743
        %1949 = vmatprep.subr.bf16.mxu0 0
        %1950 = vmatpush1.bf16.msra.mxu0 %v1742
        %1951 = vmatprep.subr.bf16.mxu0 0
        %1952 = vmatpush2.bf16.msra.mxu0 0
        %1953 = vmatprep.subr.bf16.mxu0 0
        %1954 = vmatpush2.bf16.msra.mxu0 0
        %1955 = vmatprep.subr.bf16.mxu0 0
        %1956 = vmatpush2.bf16.msra.mxu0 0
        %1957 = vmatprep.subr.bf16.mxu0 0
        %1958 = vmatpush2.bf16.msra.mxu0 0
        %1959 = vmatprep.subr.bf16.mxu0 0
        %1960 = vmatpush2.bf16.msra.mxu0 0
        %1961 = vmatprep.subr.bf16.mxu0 0
        %1962 = vmatpush2.bf16.msra.mxu0 0
        %1963 = vmatprep.subr.bf16.mxu0 0
        %1964 = vmatpush2.bf16.msra.mxu0 0
        %1965 = vmatprep.subr.bf16.mxu0 0
        %1966 = vmatpush2.bf16.msra.mxu0 0
        %1967 = vmatprep.mubr.bf16.mxu0 0
        %1968 = vmatmul.mubr.bf16.gmra.mxu0 %v1536
        %v1969 = vpop.f32.mrf.mxu0
        %v1970 = vadd.f32 %v1809, %v1969
        %v1971 = vpop.f32.mrf.mxu0
        %v1972 = vpop.f32.mrf.mxu0
        %v1973 = vadd.f32 %v1812, %v1972
        %v1974 = vpop.f32.mrf.mxu0
        %1975 = vmatprep.mubr.bf16.mxu0 0
        %1976 = vmatmul.mubr.bf16.gmra.mxu0 %v1539
        %v1977 = vpop.f32.mrf.mxu0
        %v1978 = vadd.f32 %v1817, %v1977
        %v1979 = vpop.f32.mrf.mxu0
        %v1980 = vpop.f32.mrf.mxu0
        %v1981 = vadd.f32 %v1820, %v1980
        %v1982 = vpop.f32.mrf.mxu0
        %1983 = vmatprep.mubr.bf16.mxu0 0
        %1984 = vmatmul.mubr.bf16.gmra.mxu0 %v1542
        %v1985 = vpop.f32.mrf.mxu0
        %v1986 = vadd.f32 %v1825, %v1985
        %v1987 = vpop.f32.mrf.mxu0
        %v1988 = vpop.f32.mrf.mxu0
        %v1989 = vadd.f32 %v1828, %v1988
        %v1990 = vpop.f32.mrf.mxu0
        %1991 = vmatprep.mubr.bf16.mxu0 0
        %1992 = vmatmul.mubr.bf16.gmra.mxu0 %v1545
        %v1993 = vpop.f32.mrf.mxu0
        %v1994 = vadd.f32 %v1833, %v1993
        %v1995 = vpop.f32.mrf.mxu0
        %v1996 = vpop.f32.mrf.mxu0
        %v1997 = vadd.f32 %v1836, %v1996
        %v1998 = vpop.f32.mrf.mxu0
        %1999 = vmatprep.mubr.bf16.mxu0 0
        %2000 = vmatmul.mubr.bf16.gmra.mxu0 %v1548
        %v2001 = vpop.f32.mrf.mxu0
        %v2002 = vadd.f32 %v1841, %v2001
        %v2003 = vpop.f32.mrf.mxu0
        %v2004 = vpop.f32.mrf.mxu0
        %v2005 = vadd.f32 %v1844, %v2004
        %v2006 = vpop.f32.mrf.mxu0
        %2007 = vmatprep.mubr.bf16.mxu0 0
        %2008 = vmatmul.mubr.bf16.gmra.mxu0 %v1551
        %v2009 = vpop.f32.mrf.mxu0
        %v2010 = vadd.f32 %v1849, %v2009
        %v2011 = vpop.f32.mrf.mxu0
        %v2012 = vpop.f32.mrf.mxu0
        %v2013 = vadd.f32 %v1852, %v2012
        %v2014 = vpop.f32.mrf.mxu0
        %2015 = vmatprep.mubr.bf16.mxu0 0
        %2016 = vmatmul.mubr.bf16.gmra.mxu0 %v1554
        %v2017 = vpop.f32.mrf.mxu0
        %v2018 = vadd.f32 %v1857, %v2017
        %v2019 = vpop.f32.mrf.mxu0
        %v2020 = vpop.f32.mrf.mxu0
        %v2021 = vadd.f32 %v1860, %v2020
        %v2022 = vpop.f32.mrf.mxu0
        %2023 = vmatprep.mubr.bf16.mxu0 0
        %2024 = vmatmul.mubr.bf16.gmra.mxu0 %v1557
        %v2025 = vpop.f32.mrf.mxu0
        %v2026 = vadd.f32 %v1865, %v2025
        %v2027 = vpop.f32.mrf.mxu0
        %v2028 = vpop.f32.mrf.mxu0
        %v2029 = vadd.f32 %v1868, %v2028
        %v2030 = vpop.f32.mrf.mxu0
        %2031 = vmatprep.mubr.bf16.mxu0 0
        %2032 = vmatmul.mubr.bf16.gmra.mxu0 %v1560
        %v2033 = vpop.f32.mrf.mxu0
        %v2034 = vadd.f32 %v1873, %v2033
        %v2035 = vpop.f32.mrf.mxu0
        %v2036 = vpop.f32.mrf.mxu0
        %v2037 = vadd.f32 %v1876, %v2036
        %v2038 = vpop.f32.mrf.mxu0
        %2039 = vmatprep.mubr.bf16.mxu0 0
        %2040 = vmatmul.mubr.bf16.gmra.mxu0 %v1563
        %v2041 = vpop.f32.mrf.mxu0
        %v2042 = vadd.f32 %v1881, %v2041
        %v2043 = vpop.f32.mrf.mxu0
        %v2044 = vpop.f32.mrf.mxu0
        %v2045 = vadd.f32 %v1884, %v2044
        %v2046 = vpop.f32.mrf.mxu0
        %2047 = vmatprep.mubr.bf16.mxu0 0
        %2048 = vmatmul.mubr.bf16.gmra.mxu0 %v1566
        %v2049 = vpop.f32.mrf.mxu0
        %v2050 = vadd.f32 %v1889, %v2049
        %v2051 = vpop.f32.mrf.mxu0
        %v2052 = vpop.f32.mrf.mxu0
        %v2053 = vadd.f32 %v1892, %v2052
        %v2054 = vpop.f32.mrf.mxu0
        %2055 = vmatprep.mubr.bf16.mxu0 0
        %2056 = vmatmul.mubr.bf16.gmra.mxu0 %v1569
        %v2057 = vpop.f32.mrf.mxu0
        %v2058 = vadd.f32 %v1897, %v2057
        %v2059 = vpop.f32.mrf.mxu0
        %v2060 = vpop.f32.mrf.mxu0
        %v2061 = vadd.f32 %v1900, %v2060
        %v2062 = vpop.f32.mrf.mxu0
        %2063 = vmatprep.mubr.bf16.mxu0 0
        %2064 = vmatmul.mubr.bf16.gmra.mxu0 %v1572
        %v2065 = vpop.f32.mrf.mxu0
        %v2066 = vadd.f32 %v1905, %v2065
        %v2067 = vpop.f32.mrf.mxu0
        %v2068 = vpop.f32.mrf.mxu0
        %v2069 = vadd.f32 %v1908, %v2068
        %v2070 = vpop.f32.mrf.mxu0
        %2071 = vmatprep.mubr.bf16.mxu0 0
        %2072 = vmatmul.mubr.bf16.gmra.mxu0 %v1575
        %v2073 = vpop.f32.mrf.mxu0
        %v2074 = vadd.f32 %v1913, %v2073
        %v2075 = vpop.f32.mrf.mxu0
        %v2076 = vpop.f32.mrf.mxu0
        %v2077 = vadd.f32 %v1916, %v2076
        %v2078 = vpop.f32.mrf.mxu0
        %2079 = vmatprep.mubr.bf16.mxu0 0
        %2080 = vmatmul.mubr.bf16.gmra.mxu0 %v1578
        %v2081 = vpop.f32.mrf.mxu0
        %v2082 = vadd.f32 %v1921, %v2081
        %v2083 = vpop.f32.mrf.mxu0
        %v2084 = vpop.f32.mrf.mxu0
        %v2085 = vadd.f32 %v1924, %v2084
        %v2086 = vpop.f32.mrf.mxu0
        %2087 = vmatprep.mubr.bf16.mxu0 0
        %2088 = vmatmul.mubr.bf16.gmra.mxu0 %v1581
        %v2089 = vpop.f32.mrf.mxu0
        %v2090 = vadd.f32 %v1929, %v2089
        %v2091 = vpop.f32.mrf.mxu0
        %v2092 = vpop.f32.mrf.mxu0
        %v2093 = vadd.f32 %v1932, %v2092
        %v2094 = vpop.f32.mrf.mxu0
        %2095 = vdwg.mxu0
        %v2100 = vunpack.c.l.b16 %v1209
        %v2101 = vunpack.c.h.b16 %v1209
        %v2102 = vunpack.c.l.b16 %v1210
        %v2103 = vunpack.c.l.b16 %v1211
        %v2104 = vunpack.c.h.b16 %v1211
        %v2105 = vunpack.c.l.b16 %v1212
        %v2106 = vpack.c.b16 %v2103, %v2100
        %v2107 = vpack.c.b16 %v2104, %v2101
        %v2108 = vpack.c.b16 %v2105, %v2102
        %v2160 = vunpack.c.l.b16 %v1273
        %v2161 = vunpack.c.l.b16 %v1274
        %v2162 = vunpack.c.l.b16 %v1275
        %v2163 = vunpack.c.l.b16 %v1276
        %v2164 = vunpack.c.l.b16 %v1277
        %v2165 = vunpack.c.l.b16 %v1278
        %v2166 = vunpack.c.l.b16 %v1279
        %v2167 = vunpack.c.l.b16 %v1280
        %v2168 = vunpack.c.l.b16 %v1281
        %v2169 = vunpack.c.l.b16 %v1282
        %v2170 = vunpack.c.l.b16 %v1283
        %v2171 = vunpack.c.l.b16 %v1284
        %v2172 = vunpack.c.l.b16 %v1285
        %v2173 = vunpack.c.l.b16 %v1286
        %v2174 = vunpack.c.l.b16 %v1287
        %v2175 = vunpack.c.l.b16 %v1288
        %v2176 = vunpack.c.l.b16 %v1289
        %v2177 = vunpack.c.l.b16 %v1290
        %v2178 = vunpack.c.l.b16 %v1291
        %v2179 = vunpack.c.l.b16 %v1292
        %v2180 = vunpack.c.l.b16 %v1293
        %v2181 = vunpack.c.l.b16 %v1294
        %v2182 = vunpack.c.l.b16 %v1295
        %v2183 = vunpack.c.l.b16 %v1296
        %v2184 = vunpack.c.l.b16 %v1297
        %v2185 = vunpack.c.l.b16 %v1298
        %v2186 = vunpack.c.l.b16 %v1299
        %v2187 = vunpack.c.l.b16 %v1300
        %v2188 = vunpack.c.l.b16 %v1301
        %v2189 = vunpack.c.l.b16 %v1302
        %v2190 = vunpack.c.l.b16 %v1303
        %v2191 = vunpack.c.l.b16 %v1304
        %v2192 = vunpack.c.l.b16 %v1305
        %v2193 = vunpack.c.l.b16 %v1306
        %v2194 = vunpack.c.l.b16 %v1307
        %v2195 = vunpack.c.l.b16 %v1308
        %v2196 = vunpack.c.l.b16 %v1309
        %v2197 = vunpack.c.l.b16 %v1310
        %v2198 = vunpack.c.l.b16 %v1311
        %v2199 = vunpack.c.l.b16 %v1312
        %v2200 = vunpack.c.l.b16 %v1313
        %v2201 = vunpack.c.l.b16 %v1314
        %v2202 = vunpack.c.l.b16 %v1315
        %v2203 = vunpack.c.l.b16 %v1316
        %v2204 = vunpack.c.l.b16 %v1317
        %v2205 = vunpack.c.l.b16 %v1318
        %v2206 = vunpack.c.l.b16 %v1319
        %v2207 = vunpack.c.l.b16 %v1320
        %v2208 = vpack.c.b16 %v2161, %v2160
        %v2209 = vpack.c.b16 %v2163, %v2162
        %v2210 = vpack.c.b16 %v2165, %v2164
        %v2211 = vpack.c.b16 %v2167, %v2166
        %v2212 = vpack.c.b16 %v2169, %v2168
        %v2213 = vpack.c.b16 %v2171, %v2170
        %v2214 = vpack.c.b16 %v2173, %v2172
        %v2215 = vpack.c.b16 %v2175, %v2174
        %v2216 = vpack.c.b16 %v2177, %v2176
        %v2217 = vpack.c.b16 %v2179, %v2178
        %v2218 = vpack.c.b16 %v2181, %v2180
        %v2219 = vpack.c.b16 %v2183, %v2182
        %v2220 = vpack.c.b16 %v2185, %v2184
        %v2221 = vpack.c.b16 %v2187, %v2186
        %v2222 = vpack.c.b16 %v2189, %v2188
        %v2223 = vpack.c.b16 %v2191, %v2190
        %v2224 = vpack.c.b16 %v2193, %v2192
        %v2225 = vpack.c.b16 %v2195, %v2194
        %v2226 = vpack.c.b16 %v2197, %v2196
        %v2227 = vpack.c.b16 %v2199, %v2198
        %v2228 = vpack.c.b16 %v2201, %v2200
        %v2229 = vpack.c.b16 %v2203, %v2202
        %v2230 = vpack.c.b16 %v2205, %v2204
        %v2231 = vpack.c.b16 %v2207, %v2206
        %2256 = vmatprep.subr.bf16.mxu0 0
        %2257 = vmatpush1.bf16.msra.mxu0 %v2215
        %2258 = vmatprep.subr.bf16.mxu0 0
        %2259 = vmatpush1.bf16.msra.mxu0 %v2214
        %2260 = vmatprep.subr.bf16.mxu0 0
        %2261 = vmatpush1.bf16.msra.mxu0 %v2213
        %2262 = vmatprep.subr.bf16.mxu0 0
        %2263 = vmatpush1.bf16.msra.mxu0 %v2212
        %2264 = vmatprep.subr.bf16.mxu0 0
        %2265 = vmatpush1.bf16.msra.mxu0 %v2211
        %2266 = vmatprep.subr.bf16.mxu0 0
        %2267 = vmatpush1.bf16.msra.mxu0 %v2210
        %2268 = vmatprep.subr.bf16.mxu0 0
        %2269 = vmatpush1.bf16.msra.mxu0 %v2209
        %2270 = vmatprep.subr.bf16.mxu0 0
        %2271 = vmatpush1.bf16.msra.mxu0 %v2208
        %2272 = vmatprep.subr.bf16.mxu0 0
        %2273 = vmatpush2.bf16.msra.mxu0 %v2223
        %2274 = vmatprep.subr.bf16.mxu0 0
        %2275 = vmatpush2.bf16.msra.mxu0 %v2222
        %2276 = vmatprep.subr.bf16.mxu0 0
        %2277 = vmatpush2.bf16.msra.mxu0 %v2221
        %2278 = vmatprep.subr.bf16.mxu0 0
        %2279 = vmatpush2.bf16.msra.mxu0 %v2220
        %2280 = vmatprep.subr.bf16.mxu0 0
        %2281 = vmatpush2.bf16.msra.mxu0 %v2219
        %2282 = vmatprep.subr.bf16.mxu0 0
        %2283 = vmatpush2.bf16.msra.mxu0 %v2218
        %2284 = vmatprep.subr.bf16.mxu0 0
        %2285 = vmatpush2.bf16.msra.mxu0 %v2217
        %2286 = vmatprep.subr.bf16.mxu0 0
        %2287 = vmatpush2.bf16.msra.mxu0 %v2216
        %2288 = vmatprep.mubr.bf16.mxu0 %v2107
        %2289 = vmatmul.mubr.bf16.gmra.mxu0 %v2106
        %v2290 = vpop.f32.mrf.mxu0
        %v2291 = vadd.f32 %v1970, %v2290
        %v2292 = vpop.f32.mrf.mxu0
        %v2293 = vpop.f32.mrf.mxu0
        %v2294 = vadd.f32 %v1973, %v2293
        %v2295 = vpop.f32.mrf.mxu0
        %2296 = vmatprep.mubr.bf16.mxu0 %v1535
        %2297 = vmatmul.mubr.bf16.gmra.mxu0 %v1534
        %v2298 = vpop.f32.mrf.mxu0
        %v2299 = vadd.f32 %v1978, %v2298
        %v2300 = vpop.f32.mrf.mxu0
        %v2301 = vpop.f32.mrf.mxu0
        %v2302 = vadd.f32 %v1981, %v2301
        %v2303 = vpop.f32.mrf.mxu0
        %2304 = vmatprep.mubr.bf16.mxu0 %v1538
        %2305 = vmatmul.mubr.bf16.gmra.mxu0 %v1537
        %v2306 = vpop.f32.mrf.mxu0
        %v2307 = vadd.f32 %v1986, %v2306
        %v2308 = vpop.f32.mrf.mxu0
        %v2309 = vpop.f32.mrf.mxu0
        %v2310 = vadd.f32 %v1989, %v2309
        %v2311 = vpop.f32.mrf.mxu0
        %2312 = vmatprep.mubr.bf16.mxu0 %v1541
        %2313 = vmatmul.mubr.bf16.gmra.mxu0 %v1540
        %v2314 = vpop.f32.mrf.mxu0
        %v2315 = vadd.f32 %v1994, %v2314
        %v2316 = vpop.f32.mrf.mxu0
        %v2317 = vpop.f32.mrf.mxu0
        %v2318 = vadd.f32 %v1997, %v2317
        %v2319 = vpop.f32.mrf.mxu0
        %2320 = vmatprep.mubr.bf16.mxu0 %v1544
        %2321 = vmatmul.mubr.bf16.gmra.mxu0 %v1543
        %v2322 = vpop.f32.mrf.mxu0
        %v2323 = vadd.f32 %v2002, %v2322
        %v2324 = vpop.f32.mrf.mxu0
        %v2325 = vpop.f32.mrf.mxu0
        %v2326 = vadd.f32 %v2005, %v2325
        %v2327 = vpop.f32.mrf.mxu0
        %2328 = vmatprep.mubr.bf16.mxu0 %v1547
        %2329 = vmatmul.mubr.bf16.gmra.mxu0 %v1546
        %v2330 = vpop.f32.mrf.mxu0
        %v2331 = vadd.f32 %v2010, %v2330
        %v2332 = vpop.f32.mrf.mxu0
        %v2333 = vpop.f32.mrf.mxu0
        %v2334 = vadd.f32 %v2013, %v2333
        %v2335 = vpop.f32.mrf.mxu0
        %2336 = vmatprep.mubr.bf16.mxu0 %v1550
        %2337 = vmatmul.mubr.bf16.gmra.mxu0 %v1549
        %v2338 = vpop.f32.mrf.mxu0
        %v2339 = vadd.f32 %v2018, %v2338
        %v2340 = vpop.f32.mrf.mxu0
        %v2341 = vpop.f32.mrf.mxu0
        %v2342 = vadd.f32 %v2021, %v2341
        %v2343 = vpop.f32.mrf.mxu0
        %2344 = vmatprep.mubr.bf16.mxu0 %v1553
        %2345 = vmatmul.mubr.bf16.gmra.mxu0 %v1552
        %v2346 = vpop.f32.mrf.mxu0
        %v2347 = vadd.f32 %v2026, %v2346
        %v2348 = vpop.f32.mrf.mxu0
        %v2349 = vpop.f32.mrf.mxu0
        %v2350 = vadd.f32 %v2029, %v2349
        %v2351 = vpop.f32.mrf.mxu0
        %2352 = vmatprep.mubr.bf16.mxu0 %v1556
        %2353 = vmatmul.mubr.bf16.gmra.mxu0 %v1555
        %v2354 = vpop.f32.mrf.mxu0
        %v2355 = vadd.f32 %v2034, %v2354
        %v2356 = vpop.f32.mrf.mxu0
        %v2357 = vpop.f32.mrf.mxu0
        %v2358 = vadd.f32 %v2037, %v2357
        %v2359 = vpop.f32.mrf.mxu0
        %2360 = vmatprep.mubr.bf16.mxu0 %v1559
        %2361 = vmatmul.mubr.bf16.gmra.mxu0 %v1558
        %v2362 = vpop.f32.mrf.mxu0
        %v2363 = vadd.f32 %v2042, %v2362
        %v2364 = vpop.f32.mrf.mxu0
        %v2365 = vpop.f32.mrf.mxu0
        %v2366 = vadd.f32 %v2045, %v2365
        %v2367 = vpop.f32.mrf.mxu0
        %2368 = vmatprep.mubr.bf16.mxu0 %v1562
        %2369 = vmatmul.mubr.bf16.gmra.mxu0 %v1561
        %v2370 = vpop.f32.mrf.mxu0
        %v2371 = vadd.f32 %v2050, %v2370
        %v2372 = vpop.f32.mrf.mxu0
        %v2373 = vpop.f32.mrf.mxu0
        %v2374 = vadd.f32 %v2053, %v2373
        %v2375 = vpop.f32.mrf.mxu0
        %2376 = vmatprep.mubr.bf16.mxu0 %v1565
        %2377 = vmatmul.mubr.bf16.gmra.mxu0 %v1564
        %v2378 = vpop.f32.mrf.mxu0
        %v2379 = vadd.f32 %v2058, %v2378
        %v2380 = vpop.f32.mrf.mxu0
        %v2381 = vpop.f32.mrf.mxu0
        %v2382 = vadd.f32 %v2061, %v2381
        %v2383 = vpop.f32.mrf.mxu0
        %2384 = vmatprep.mubr.bf16.mxu0 %v1568
        %2385 = vmatmul.mubr.bf16.gmra.mxu0 %v1567
        %v2386 = vpop.f32.mrf.mxu0
        %v2387 = vadd.f32 %v2066, %v2386
        %v2388 = vpop.f32.mrf.mxu0
        %v2389 = vpop.f32.mrf.mxu0
        %v2390 = vadd.f32 %v2069, %v2389
        %v2391 = vpop.f32.mrf.mxu0
        %2392 = vmatprep.mubr.bf16.mxu0 %v1571
        %2393 = vmatmul.mubr.bf16.gmra.mxu0 %v1570
        %v2394 = vpop.f32.mrf.mxu0
        %v2395 = vadd.f32 %v2074, %v2394
        %v2396 = vpop.f32.mrf.mxu0
        %v2397 = vpop.f32.mrf.mxu0
        %v2398 = vadd.f32 %v2077, %v2397
        %v2399 = vpop.f32.mrf.mxu0
        %2400 = vmatprep.mubr.bf16.mxu0 %v1574
        %2401 = vmatmul.mubr.bf16.gmra.mxu0 %v1573
        %v2402 = vpop.f32.mrf.mxu0
        %v2403 = vadd.f32 %v2082, %v2402
        %v2404 = vpop.f32.mrf.mxu0
        %v2405 = vpop.f32.mrf.mxu0
        %v2406 = vadd.f32 %v2085, %v2405
        %v2407 = vpop.f32.mrf.mxu0
        %2408 = vmatprep.mubr.bf16.mxu0 %v1577
        %2409 = vmatmul.mubr.bf16.gmra.mxu0 %v1576
        %v2410 = vpop.f32.mrf.mxu0
        %v2411 = vadd.f32 %v2090, %v2410
        %v2412 = vpop.f32.mrf.mxu0
        %v2413 = vpop.f32.mrf.mxu0
        %v2414 = vadd.f32 %v2093, %v2413
        %v2415 = vpop.f32.mrf.mxu0
        %2416 = vdwg.mxu0
        %2417 = vmatprep.subr.bf16.mxu0 0
        %2418 = vmatpush1.bf16.msra.mxu0 %v2231
        %2419 = vmatprep.subr.bf16.mxu0 0
        %2420 = vmatpush1.bf16.msra.mxu0 %v2230
        %2421 = vmatprep.subr.bf16.mxu0 0
        %2422 = vmatpush1.bf16.msra.mxu0 %v2229
        %2423 = vmatprep.subr.bf16.mxu0 0
        %2424 = vmatpush1.bf16.msra.mxu0 %v2228
        %2425 = vmatprep.subr.bf16.mxu0 0
        %2426 = vmatpush1.bf16.msra.mxu0 %v2227
        %2427 = vmatprep.subr.bf16.mxu0 0
        %2428 = vmatpush1.bf16.msra.mxu0 %v2226
        %2429 = vmatprep.subr.bf16.mxu0 0
        %2430 = vmatpush1.bf16.msra.mxu0 %v2225
        %2431 = vmatprep.subr.bf16.mxu0 0
        %2432 = vmatpush1.bf16.msra.mxu0 %v2224
        %2433 = vmatprep.subr.bf16.mxu0 0
        %2434 = vmatpush2.bf16.msra.mxu0 0
        %2435 = vmatprep.subr.bf16.mxu0 0
        %2436 = vmatpush2.bf16.msra.mxu0 0
        %2437 = vmatprep.subr.bf16.mxu0 0
        %2438 = vmatpush2.bf16.msra.mxu0 0
        %2439 = vmatprep.subr.bf16.mxu0 0
        %2440 = vmatpush2.bf16.msra.mxu0 0
        %2441 = vmatprep.subr.bf16.mxu0 0
        %2442 = vmatpush2.bf16.msra.mxu0 0
        %2443 = vmatprep.subr.bf16.mxu0 0
        %2444 = vmatpush2.bf16.msra.mxu0 0
        %2445 = vmatprep.subr.bf16.mxu0 0
        %2446 = vmatpush2.bf16.msra.mxu0 0
        %2447 = vmatprep.subr.bf16.mxu0 0
        %2448 = vmatpush2.bf16.msra.mxu0 0
        %2449 = vmatprep.mubr.bf16.mxu0 0
        %2450 = vmatmul.mubr.bf16.gmra.mxu0 %v2108
        %v2451 = vpop.f32.mrf.mxu0
        %v2452 = vadd.f32 %v2291, %v2451
        %v2453 = vpop.f32.mrf.mxu0
        %v2454 = vpop.f32.mrf.mxu0
        %v2455 = vadd.f32 %v2294, %v2454
        %v2456 = vpop.f32.mrf.mxu0
        %2457 = vmatprep.mubr.bf16.mxu0 0
        %2458 = vmatmul.mubr.bf16.gmra.mxu0 %v1536
        %v2459 = vpop.f32.mrf.mxu0
        %v2460 = vadd.f32 %v2299, %v2459
        %v2461 = vpop.f32.mrf.mxu0
        %v2462 = vpop.f32.mrf.mxu0
        %v2463 = vadd.f32 %v2302, %v2462
        %v2464 = vpop.f32.mrf.mxu0
        %2465 = vmatprep.mubr.bf16.mxu0 0
        %2466 = vmatmul.mubr.bf16.gmra.mxu0 %v1539
        %v2467 = vpop.f32.mrf.mxu0
        %v2468 = vadd.f32 %v2307, %v2467
        %v2469 = vpop.f32.mrf.mxu0
        %v2470 = vpop.f32.mrf.mxu0
        %v2471 = vadd.f32 %v2310, %v2470
        %v2472 = vpop.f32.mrf.mxu0
        %2473 = vmatprep.mubr.bf16.mxu0 0
        %2474 = vmatmul.mubr.bf16.gmra.mxu0 %v1542
        %v2475 = vpop.f32.mrf.mxu0
        %v2476 = vadd.f32 %v2315, %v2475
        %v2477 = vpop.f32.mrf.mxu0
        %v2478 = vpop.f32.mrf.mxu0
        %v2479 = vadd.f32 %v2318, %v2478
        %v2480 = vpop.f32.mrf.mxu0
        %2481 = vmatprep.mubr.bf16.mxu0 0
        %2482 = vmatmul.mubr.bf16.gmra.mxu0 %v1545
        %v2483 = vpop.f32.mrf.mxu0
        %v2484 = vadd.f32 %v2323, %v2483
        %v2485 = vpop.f32.mrf.mxu0
        %v2486 = vpop.f32.mrf.mxu0
        %v2487 = vadd.f32 %v2326, %v2486
        %v2488 = vpop.f32.mrf.mxu0
        %2489 = vmatprep.mubr.bf16.mxu0 0
        %2490 = vmatmul.mubr.bf16.gmra.mxu0 %v1548
        %v2491 = vpop.f32.mrf.mxu0
        %v2492 = vadd.f32 %v2331, %v2491
        %v2493 = vpop.f32.mrf.mxu0
        %v2494 = vpop.f32.mrf.mxu0
        %v2495 = vadd.f32 %v2334, %v2494
        %v2496 = vpop.f32.mrf.mxu0
        %2497 = vmatprep.mubr.bf16.mxu0 0
        %2498 = vmatmul.mubr.bf16.gmra.mxu0 %v1551
        %v2499 = vpop.f32.mrf.mxu0
        %v2500 = vadd.f32 %v2339, %v2499
        %v2501 = vpop.f32.mrf.mxu0
        %v2502 = vpop.f32.mrf.mxu0
        %v2503 = vadd.f32 %v2342, %v2502
        %v2504 = vpop.f32.mrf.mxu0
        %2505 = vmatprep.mubr.bf16.mxu0 0
        %2506 = vmatmul.mubr.bf16.gmra.mxu0 %v1554
        %v2507 = vpop.f32.mrf.mxu0
        %v2508 = vadd.f32 %v2347, %v2507
        %v2509 = vpop.f32.mrf.mxu0
        %v2510 = vpop.f32.mrf.mxu0
        %v2511 = vadd.f32 %v2350, %v2510
        %v2512 = vpop.f32.mrf.mxu0
        %2513 = vmatprep.mubr.bf16.mxu0 0
        %2514 = vmatmul.mubr.bf16.gmra.mxu0 %v1557
        %v2515 = vpop.f32.mrf.mxu0
        %v2516 = vadd.f32 %v2355, %v2515
        %v2517 = vpop.f32.mrf.mxu0
        %v2518 = vpop.f32.mrf.mxu0
        %v2519 = vadd.f32 %v2358, %v2518
        %v2520 = vpop.f32.mrf.mxu0
        %2521 = vmatprep.mubr.bf16.mxu0 0
        %2522 = vmatmul.mubr.bf16.gmra.mxu0 %v1560
        %v2523 = vpop.f32.mrf.mxu0
        %v2524 = vadd.f32 %v2363, %v2523
        %v2525 = vpop.f32.mrf.mxu0
        %v2526 = vpop.f32.mrf.mxu0
        %v2527 = vadd.f32 %v2366, %v2526
        %v2528 = vpop.f32.mrf.mxu0
        %2529 = vmatprep.mubr.bf16.mxu0 0
        %2530 = vmatmul.mubr.bf16.gmra.mxu0 %v1563
        %v2531 = vpop.f32.mrf.mxu0
        %v2532 = vadd.f32 %v2371, %v2531
        %v2533 = vpop.f32.mrf.mxu0
        %v2534 = vpop.f32.mrf.mxu0
        %v2535 = vadd.f32 %v2374, %v2534
        %v2536 = vpop.f32.mrf.mxu0
        %2537 = vmatprep.mubr.bf16.mxu0 0
        %2538 = vmatmul.mubr.bf16.gmra.mxu0 %v1566
        %v2539 = vpop.f32.mrf.mxu0
        %v2540 = vadd.f32 %v2379, %v2539
        %v2541 = vpop.f32.mrf.mxu0
        %v2542 = vpop.f32.mrf.mxu0
        %v2543 = vadd.f32 %v2382, %v2542
        %v2544 = vpop.f32.mrf.mxu0
        %2545 = vmatprep.mubr.bf16.mxu0 0
        %2546 = vmatmul.mubr.bf16.gmra.mxu0 %v1569
        %v2547 = vpop.f32.mrf.mxu0
        %v2548 = vadd.f32 %v2387, %v2547
        %v2549 = vpop.f32.mrf.mxu0
        %v2550 = vpop.f32.mrf.mxu0
        %v2551 = vadd.f32 %v2390, %v2550
        %v2552 = vpop.f32.mrf.mxu0
        %2553 = vmatprep.mubr.bf16.mxu0 0
        %2554 = vmatmul.mubr.bf16.gmra.mxu0 %v1572
        %v2555 = vpop.f32.mrf.mxu0
        %v2556 = vadd.f32 %v2395, %v2555
        %v2557 = vpop.f32.mrf.mxu0
        %v2558 = vpop.f32.mrf.mxu0
        %v2559 = vadd.f32 %v2398, %v2558
        %v2560 = vpop.f32.mrf.mxu0
        %2561 = vmatprep.mubr.bf16.mxu0 0
        %2562 = vmatmul.mubr.bf16.gmra.mxu0 %v1575
        %v2563 = vpop.f32.mrf.mxu0
        %v2564 = vadd.f32 %v2403, %v2563
        %v2565 = vpop.f32.mrf.mxu0
        %v2566 = vpop.f32.mrf.mxu0
        %v2567 = vadd.f32 %v2406, %v2566
        %v2568 = vpop.f32.mrf.mxu0
        %2569 = vmatprep.mubr.bf16.mxu0 0
        %2570 = vmatmul.mubr.bf16.gmra.mxu0 %v1578
        %v2571 = vpop.f32.mrf.mxu0
        %v2572 = vadd.f32 %v2411, %v2571
        %v2573 = vpop.f32.mrf.mxu0
        %v2574 = vpop.f32.mrf.mxu0
        %v2575 = vadd.f32 %v2414, %v2574
        %v2576 = vpop.f32.mrf.mxu0
        %2577 = vdwg.mxu0
        %v2578 = vld [vmem:[#allocation2 + $0x30] sm:$0xff]
        %v2579 = vld [vmem:[#allocation2 + $0x38] sm:$0xf]
        %v2580 = vld [vmem:[#allocation2 + $0x3c] sm:$0xff]
        %v2581 = vld [vmem:[#allocation2 + $0x44] sm:$0xf]
        %v2582 = vld [vmem:[#allocation2 + $0x48] sm:$0xff]
        %v2583 = vld [vmem:[#allocation2 + $0x50] sm:$0xf]
        %v2584 = vld [vmem:[#allocation2 + $0x54] sm:$0xff]
        %v2585 = vld [vmem:[#allocation2 + $0x5c] sm:$0xf]
        %v2586 = vld [vmem:[#allocation2 + $0x60] sm:$0xff]
        %v2587 = vld [vmem:[#allocation2 + $0x68] sm:$0xf]
        %v2588 = vld [vmem:[#allocation2 + $0x6c] sm:$0xff]
        %v2589 = vld [vmem:[#allocation2 + $0x74] sm:$0xf]
        %v2590 = vld [vmem:[#allocation2 + $0x78] sm:$0xff]
        %v2591 = vld [vmem:[#allocation2 + $0x80] sm:$0xf]
        %v2592 = vld [vmem:[#allocation2 + $0x84] sm:$0xff]
        %v2593 = vld [vmem:[#allocation2 + $0x8c] sm:$0xf]
        %v2594 = vld [vmem:[#allocation2 + $0x90] sm:$0xff]
        %v2595 = vld [vmem:[#allocation2 + $0x98] sm:$0xf]
        %v2596 = vld [vmem:[#allocation2 + $0x9c] sm:$0xff]
        %v2597 = vld [vmem:[#allocation2 + $0xa4] sm:$0xf]
        %v2598 = vld [vmem:[#allocation2 + $0xa8] sm:$0xff]
        %v2599 = vld [vmem:[#allocation2 + $0xb0] sm:$0xf]
        %v2600 = vld [vmem:[#allocation2 + $0xb4] sm:$0xff]
        %v2601 = vld [vmem:[#allocation2 + $0xbc] sm:$0xf]
        %v2602 = vld [vmem:[#allocation2 + $0xc0] sm:$0xff]
        %v2603 = vld [vmem:[#allocation2 + $0xc8] sm:$0xf]
        %v2604 = vld [vmem:[#allocation2 + $0xcc] sm:$0xff]
        %v2605 = vld [vmem:[#allocation2 + $0xd4] sm:$0xf]
        %v2606 = vld [vmem:[#allocation2 + $0xd8] sm:$0xff]
        %v2607 = vld [vmem:[#allocation2 + $0xe0] sm:$0xf]
        %v2608 = vld [vmem:[#allocation2 + $0xe4] sm:$0xff]
        %v2609 = vld [vmem:[#allocation2 + $0xec] sm:$0xf]
        %v2610 = vld [vmem:[#allocation2 + $0xf0] sm:$0xff]
        %v2611 = vld [vmem:[#allocation2 + $0xf8] sm:$0xf]
        %v2612 = vld [vmem:[#allocation2 + $0xfc] sm:$0xff]
        %v2613 = vld [vmem:[#allocation2 + $0x104] sm:$0xf]
        %v2614 = vld [vmem:[#allocation2 + $0x108] sm:$0xff]
        %v2615 = vld [vmem:[#allocation2 + $0x110] sm:$0xf]
        %v2616 = vld [vmem:[#allocation2 + $0x114] sm:$0xff]
        %v2617 = vld [vmem:[#allocation2 + $0x11c] sm:$0xf]
        %v2618 = vld [vmem:[#allocation2 + $0x120] sm:$0xff]
        %v2619 = vld [vmem:[#allocation2 + $0x128] sm:$0xf]
        %v2620 = vld [vmem:[#allocation2 + $0x12c] sm:$0xff]
        %v2621 = vld [vmem:[#allocation2 + $0x134] sm:$0xf]
        %v2622 = vld [vmem:[#allocation2 + $0x138] sm:$0xff]
        %v2623 = vld [vmem:[#allocation2 + $0x140] sm:$0xf]
        %v2624 = vld [vmem:[#allocation2 + $0x144] sm:$0xff]
        %v2625 = vld [vmem:[#allocation2 + $0x14c] sm:$0xf]
        %v2626 = vld [vmem:[#allocation2 + $0x150] sm:$0xff]
        %v2627 = vld [vmem:[#allocation2 + $0x158] sm:$0xf]
        %v2628 = vld [vmem:[#allocation2 + $0x15c] sm:$0xff]
        %v2629 = vld [vmem:[#allocation2 + $0x164] sm:$0xf]
        %v2630 = vld [vmem:[#allocation2 + $0x168] sm:$0xff]
        %v2631 = vld [vmem:[#allocation2 + $0x170] sm:$0xf]
        %v2632 = vld [vmem:[#allocation2 + $0x174] sm:$0xff]
        %v2633 = vld [vmem:[#allocation2 + $0x17c] sm:$0xf]
        %v2634 = vld [vmem:[#allocation2 + $0x180] sm:$0xff]
        %v2635 = vld [vmem:[#allocation2 + $0x188] sm:$0xf]
        %v2636 = vld [vmem:[#allocation2 + $0x18c] sm:$0xff]
        %v2637 = vld [vmem:[#allocation2 + $0x194] sm:$0xf]
        %v2638 = vld [vmem:[#allocation2 + $0x198] sm:$0xff]
        %v2639 = vld [vmem:[#allocation2 + $0x1a0] sm:$0xf]
        %v2640 = vld [vmem:[#allocation2 + $0x1a4] sm:$0xff]
        %v2641 = vld [vmem:[#allocation2 + $0x1ac] sm:$0xf]
        %s2642 = scalar_lea.vmem %s1, 384
        %v2643 = vld [vmem:[%s2642] sm:$0xf]
        %v2644 = vld [vmem:[%s2642 + $0x4] sm:$0xf]
        %v2645 = vld [vmem:[%s2642 + $0x8] sm:$0xf]
        %v2646 = vld [vmem:[%s2642 + $0xc] sm:$0xf]
        %v2647 = vld [vmem:[%s2642 + $0x10] sm:$0xf]
        %v2648 = vld [vmem:[%s2642 + $0x14] sm:$0xf]
        %v2649 = vld [vmem:[%s2642 + $0x18] sm:$0xf]
        %v2650 = vld [vmem:[%s2642 + $0x1c] sm:$0xf]
        %v2651 = vld [vmem:[%s2642 + $0x20] sm:$0xf]
        %v2652 = vld [vmem:[%s2642 + $0x24] sm:$0xf]
        %v2653 = vld [vmem:[%s2642 + $0x28] sm:$0xf]
        %v2654 = vld [vmem:[%s2642 + $0x2c] sm:$0xf]
        %v2655 = vld [vmem:[%s2642 + $0x30] sm:$0xf]
        %v2656 = vld [vmem:[%s2642 + $0x34] sm:$0xf]
        %v2657 = vld [vmem:[%s2642 + $0x38] sm:$0xf]
        %v2658 = vld [vmem:[%s2642 + $0x3c] sm:$0xf]
        %v2659 = vld [vmem:[%s2642 + $0x40] sm:$0xf]
        %v2660 = vld [vmem:[%s2642 + $0x44] sm:$0xf]
        %v2661 = vld [vmem:[%s2642 + $0x48] sm:$0xf]
        %v2662 = vld [vmem:[%s2642 + $0x4c] sm:$0xf]
        %v2663 = vld [vmem:[%s2642 + $0x50] sm:$0xf]
        %v2664 = vld [vmem:[%s2642 + $0x54] sm:$0xf]
        %v2665 = vld [vmem:[%s2642 + $0x58] sm:$0xf]
        %v2666 = vld [vmem:[%s2642 + $0x5c] sm:$0xf]
        %v2667 = vld [vmem:[%s2642 + $0x60] sm:$0xf]
        %v2668 = vld [vmem:[%s2642 + $0x64] sm:$0xf]
        %v2669 = vld [vmem:[%s2642 + $0x68] sm:$0xf]
        %v2670 = vld [vmem:[%s2642 + $0x6c] sm:$0xf]
        %v2671 = vld [vmem:[%s2642 + $0x70] sm:$0xf]
        %v2672 = vld [vmem:[%s2642 + $0x74] sm:$0xf]
        %v2673 = vld [vmem:[%s2642 + $0x78] sm:$0xf]
        %v2674 = vld [vmem:[%s2642 + $0x7c] sm:$0xf]
        %v2675 = vld [vmem:[%s2642 + $0x80] sm:$0xf]
        %v2676 = vld [vmem:[%s2642 + $0x84] sm:$0xf]
        %v2677 = vld [vmem:[%s2642 + $0x88] sm:$0xf]
        %v2678 = vld [vmem:[%s2642 + $0x8c] sm:$0xf]
        %v2679 = vld [vmem:[%s2642 + $0x90] sm:$0xf]
        %v2680 = vld [vmem:[%s2642 + $0x94] sm:$0xf]
        %v2681 = vld [vmem:[%s2642 + $0x98] sm:$0xf]
        %v2682 = vld [vmem:[%s2642 + $0x9c] sm:$0xf]
        %v2683 = vld [vmem:[%s2642 + $0xa0] sm:$0xf]
        %v2684 = vld [vmem:[%s2642 + $0xa4] sm:$0xf]
        %v2685 = vld [vmem:[%s2642 + $0xa8] sm:$0xf]
        %v2686 = vld [vmem:[%s2642 + $0xac] sm:$0xf]
        %v2687 = vld [vmem:[%s2642 + $0xb0] sm:$0xf]
        %v2688 = vld [vmem:[%s2642 + $0xb4] sm:$0xf]
        %v2689 = vld [vmem:[%s2642 + $0xb8] sm:$0xf]
        %v2690 = vld [vmem:[%s2642 + $0xbc] sm:$0xf]
        %v2755 = vunpack.c.l.b16 %v2578
        %v2756 = vunpack.c.h.b16 %v2578
        %v2757 = vunpack.c.l.b16 %v2579
        %v2758 = vunpack.c.l.b16 %v2580
        %v2759 = vunpack.c.h.b16 %v2580
        %v2760 = vunpack.c.l.b16 %v2581
        %v2761 = vunpack.c.l.b16 %v2582
        %v2762 = vunpack.c.h.b16 %v2582
        %v2763 = vunpack.c.l.b16 %v2583
        %v2764 = vunpack.c.l.b16 %v2584
        %v2765 = vunpack.c.h.b16 %v2584
        %v2766 = vunpack.c.l.b16 %v2585
        %v2767 = vunpack.c.l.b16 %v2586
        %v2768 = vunpack.c.h.b16 %v2586
        %v2769 = vunpack.c.l.b16 %v2587
        %v2770 = vunpack.c.l.b16 %v2588
        %v2771 = vunpack.c.h.b16 %v2588
        %v2772 = vunpack.c.l.b16 %v2589
        %v2773 = vunpack.c.l.b16 %v2590
        %v2774 = vunpack.c.h.b16 %v2590
        %v2775 = vunpack.c.l.b16 %v2591
        %v2776 = vunpack.c.l.b16 %v2592
        %v2777 = vunpack.c.h.b16 %v2592
        %v2778 = vunpack.c.l.b16 %v2593
        %v2779 = vunpack.c.l.b16 %v2594
        %v2780 = vunpack.c.h.b16 %v2594
        %v2781 = vunpack.c.l.b16 %v2595
        %v2782 = vunpack.c.l.b16 %v2596
        %v2783 = vunpack.c.h.b16 %v2596
        %v2784 = vunpack.c.l.b16 %v2597
        %v2785 = vunpack.c.l.b16 %v2598
        %v2786 = vunpack.c.h.b16 %v2598
        %v2787 = vunpack.c.l.b16 %v2599
        %v2788 = vunpack.c.l.b16 %v2600
        %v2789 = vunpack.c.h.b16 %v2600
        %v2790 = vunpack.c.l.b16 %v2601
        %v2791 = vunpack.c.l.b16 %v2602
        %v2792 = vunpack.c.h.b16 %v2602
        %v2793 = vunpack.c.l.b16 %v2603
        %v2794 = vunpack.c.l.b16 %v2604
        %v2795 = vunpack.c.h.b16 %v2604
        %v2796 = vunpack.c.l.b16 %v2605
        %v2797 = vunpack.c.l.b16 %v2606
        %v2798 = vunpack.c.h.b16 %v2606
        %v2799 = vunpack.c.l.b16 %v2607
        %v2800 = vunpack.c.l.b16 %v2608
        %v2801 = vunpack.c.h.b16 %v2608
        %v2802 = vunpack.c.l.b16 %v2609
        %v2803 = vunpack.c.l.b16 %v2610
        %v2804 = vunpack.c.h.b16 %v2610
        %v2805 = vunpack.c.l.b16 %v2611
        %v2806 = vunpack.c.l.b16 %v2612
        %v2807 = vunpack.c.h.b16 %v2612
        %v2808 = vunpack.c.l.b16 %v2613
        %v2809 = vunpack.c.l.b16 %v2614
        %v2810 = vunpack.c.h.b16 %v2614
        %v2811 = vunpack.c.l.b16 %v2615
        %v2812 = vunpack.c.l.b16 %v2616
        %v2813 = vunpack.c.h.b16 %v2616
        %v2814 = vunpack.c.l.b16 %v2617
        %v2815 = vunpack.c.l.b16 %v2618
        %v2816 = vunpack.c.h.b16 %v2618
        %v2817 = vunpack.c.l.b16 %v2619
        %v2818 = vunpack.c.l.b16 %v2620
        %v2819 = vunpack.c.h.b16 %v2620
        %v2820 = vunpack.c.l.b16 %v2621
        %v2821 = vunpack.c.l.b16 %v2622
        %v2822 = vunpack.c.h.b16 %v2622
        %v2823 = vunpack.c.l.b16 %v2623
        %v2824 = vunpack.c.l.b16 %v2624
        %v2825 = vunpack.c.h.b16 %v2624
        %v2826 = vunpack.c.l.b16 %v2625
        %v2827 = vunpack.c.l.b16 %v2626
        %v2828 = vunpack.c.h.b16 %v2626
        %v2829 = vunpack.c.l.b16 %v2627
        %v2830 = vunpack.c.l.b16 %v2628
        %v2831 = vunpack.c.h.b16 %v2628
        %v2832 = vunpack.c.l.b16 %v2629
        %v2833 = vunpack.c.l.b16 %v2630
        %v2834 = vunpack.c.h.b16 %v2630
        %v2835 = vunpack.c.l.b16 %v2631
        %v2836 = vunpack.c.l.b16 %v2632
        %v2837 = vunpack.c.h.b16 %v2632
        %v2838 = vunpack.c.l.b16 %v2633
        %v2839 = vunpack.c.l.b16 %v2634
        %v2840 = vunpack.c.h.b16 %v2634
        %v2841 = vunpack.c.l.b16 %v2635
        %v2842 = vunpack.c.l.b16 %v2636
        %v2843 = vunpack.c.h.b16 %v2636
        %v2844 = vunpack.c.l.b16 %v2637
        %v2845 = vunpack.c.l.b16 %v2638
        %v2846 = vunpack.c.h.b16 %v2638
        %v2847 = vunpack.c.l.b16 %v2639
        %v2848 = vunpack.c.l.b16 %v2640
        %v2849 = vunpack.c.h.b16 %v2640
        %v2850 = vunpack.c.l.b16 %v2641
        %v2851 = vpack.c.b16 %v2758, %v2755
        %v2852 = vpack.c.b16 %v2759, %v2756
        %v2853 = vpack.c.b16 %v2760, %v2757
        %v2854 = vpack.c.b16 %v2764, %v2761
        %v2855 = vpack.c.b16 %v2765, %v2762
        %v2856 = vpack.c.b16 %v2766, %v2763
        %v2857 = vpack.c.b16 %v2770, %v2767
        %v2858 = vpack.c.b16 %v2771, %v2768
        %v2859 = vpack.c.b16 %v2772, %v2769
        %v2860 = vpack.c.b16 %v2776, %v2773
        %v2861 = vpack.c.b16 %v2777, %v2774
        %v2862 = vpack.c.b16 %v2778, %v2775
        %v2863 = vpack.c.b16 %v2782, %v2779
        %v2864 = vpack.c.b16 %v2783, %v2780
        %v2865 = vpack.c.b16 %v2784, %v2781
        %v2866 = vpack.c.b16 %v2788, %v2785
        %v2867 = vpack.c.b16 %v2789, %v2786
        %v2868 = vpack.c.b16 %v2790, %v2787
        %v2869 = vpack.c.b16 %v2794, %v2791
        %v2870 = vpack.c.b16 %v2795, %v2792
        %v2871 = vpack.c.b16 %v2796, %v2793
        %v2872 = vpack.c.b16 %v2800, %v2797
        %v2873 = vpack.c.b16 %v2801, %v2798
        %v2874 = vpack.c.b16 %v2802, %v2799
        %v2875 = vpack.c.b16 %v2806, %v2803
        %v2876 = vpack.c.b16 %v2807, %v2804
        %v2877 = vpack.c.b16 %v2808, %v2805
        %v2878 = vpack.c.b16 %v2812, %v2809
        %v2879 = vpack.c.b16 %v2813, %v2810
        %v2880 = vpack.c.b16 %v2814, %v2811
        %v2881 = vpack.c.b16 %v2818, %v2815
        %v2882 = vpack.c.b16 %v2819, %v2816
        %v2883 = vpack.c.b16 %v2820, %v2817
        %v2884 = vpack.c.b16 %v2824, %v2821
        %v2885 = vpack.c.b16 %v2825, %v2822
        %v2886 = vpack.c.b16 %v2826, %v2823
        %v2887 = vpack.c.b16 %v2830, %v2827
        %v2888 = vpack.c.b16 %v2831, %v2828
        %v2889 = vpack.c.b16 %v2832, %v2829
        %v2890 = vpack.c.b16 %v2836, %v2833
        %v2891 = vpack.c.b16 %v2837, %v2834
        %v2892 = vpack.c.b16 %v2838, %v2835
        %v2893 = vpack.c.b16 %v2842, %v2839
        %v2894 = vpack.c.b16 %v2843, %v2840
        %v2895 = vpack.c.b16 %v2844, %v2841
        %v2896 = vpack.c.b16 %v2848, %v2845
        %v2897 = vpack.c.b16 %v2849, %v2846
        %v2898 = vpack.c.b16 %v2850, %v2847
        %v2995 = vunpack.c.l.b16 %v2643
        %v2996 = vunpack.c.l.b16 %v2644
        %v2997 = vunpack.c.l.b16 %v2645
        %v2998 = vunpack.c.l.b16 %v2646
        %v2999 = vunpack.c.l.b16 %v2647
        %v3000 = vunpack.c.l.b16 %v2648
        %v3001 = vunpack.c.l.b16 %v2649
        %v3002 = vunpack.c.l.b16 %v2650
        %v3003 = vunpack.c.l.b16 %v2651
        %v3004 = vunpack.c.l.b16 %v2652
        %v3005 = vunpack.c.l.b16 %v2653
        %v3006 = vunpack.c.l.b16 %v2654
        %v3007 = vunpack.c.l.b16 %v2655
        %v3008 = vunpack.c.l.b16 %v2656
        %v3009 = vunpack.c.l.b16 %v2657
        %v3010 = vunpack.c.l.b16 %v2658
        %v3011 = vunpack.c.l.b16 %v2659
        %v3012 = vunpack.c.l.b16 %v2660
        %v3013 = vunpack.c.l.b16 %v2661
        %v3014 = vunpack.c.l.b16 %v2662
        %v3015 = vunpack.c.l.b16 %v2663
        %v3016 = vunpack.c.l.b16 %v2664
        %v3017 = vunpack.c.l.b16 %v2665
        %v3018 = vunpack.c.l.b16 %v2666
        %v3019 = vunpack.c.l.b16 %v2667
        %v3020 = vunpack.c.l.b16 %v2668
        %v3021 = vunpack.c.l.b16 %v2669
        %v3022 = vunpack.c.l.b16 %v2670
        %v3023 = vunpack.c.l.b16 %v2671
        %v3024 = vunpack.c.l.b16 %v2672
        %v3025 = vunpack.c.l.b16 %v2673
        %v3026 = vunpack.c.l.b16 %v2674
        %v3027 = vunpack.c.l.b16 %v2675
        %v3028 = vunpack.c.l.b16 %v2676
        %v3029 = vunpack.c.l.b16 %v2677
        %v3030 = vunpack.c.l.b16 %v2678
        %v3031 = vunpack.c.l.b16 %v2679
        %v3032 = vunpack.c.l.b16 %v2680
        %v3033 = vunpack.c.l.b16 %v2681
        %v3034 = vunpack.c.l.b16 %v2682
        %v3035 = vunpack.c.l.b16 %v2683
        %v3036 = vunpack.c.l.b16 %v2684
        %v3037 = vunpack.c.l.b16 %v2685
        %v3038 = vunpack.c.l.b16 %v2686
        %v3039 = vunpack.c.l.b16 %v2687
        %v3040 = vunpack.c.l.b16 %v2688
        %v3041 = vunpack.c.l.b16 %v2689
        %v3042 = vunpack.c.l.b16 %v2690
        %v3043 = vpack.c.b16 %v2996, %v2995
        %v3044 = vpack.c.b16 %v2998, %v2997
        %v3045 = vpack.c.b16 %v3000, %v2999
        %v3046 = vpack.c.b16 %v3002, %v3001
        %v3047 = vpack.c.b16 %v3004, %v3003
        %v3048 = vpack.c.b16 %v3006, %v3005
        %v3049 = vpack.c.b16 %v3008, %v3007
        %v3050 = vpack.c.b16 %v3010, %v3009
        %v3051 = vpack.c.b16 %v3012, %v3011
        %v3052 = vpack.c.b16 %v3014, %v3013
        %v3053 = vpack.c.b16 %v3016, %v3015
        %v3054 = vpack.c.b16 %v3018, %v3017
        %v3055 = vpack.c.b16 %v3020, %v3019
        %v3056 = vpack.c.b16 %v3022, %v3021
        %v3057 = vpack.c.b16 %v3024, %v3023
        %v3058 = vpack.c.b16 %v3026, %v3025
        %v3059 = vpack.c.b16 %v3028, %v3027
        %v3060 = vpack.c.b16 %v3030, %v3029
        %v3061 = vpack.c.b16 %v3032, %v3031
        %v3062 = vpack.c.b16 %v3034, %v3033
        %v3063 = vpack.c.b16 %v3036, %v3035
        %v3064 = vpack.c.b16 %v3038, %v3037
        %v3065 = vpack.c.b16 %v3040, %v3039
        %v3066 = vpack.c.b16 %v3042, %v3041
        %3091 = vmatprep.subr.bf16.mxu0 0
        %3092 = vmatpush1.bf16.msra.mxu0 %v3050
        %3093 = vmatprep.subr.bf16.mxu0 0
        %3094 = vmatpush1.bf16.msra.mxu0 %v3049
        %3095 = vmatprep.subr.bf16.mxu0 0
        %3096 = vmatpush1.bf16.msra.mxu0 %v3048
        %3097 = vmatprep.subr.bf16.mxu0 0
        %3098 = vmatpush1.bf16.msra.mxu0 %v3047
        %3099 = vmatprep.subr.bf16.mxu0 0
        %3100 = vmatpush1.bf16.msra.mxu0 %v3046
        %3101 = vmatprep.subr.bf16.mxu0 0
        %3102 = vmatpush1.bf16.msra.mxu0 %v3045
        %3103 = vmatprep.subr.bf16.mxu0 0
        %3104 = vmatpush1.bf16.msra.mxu0 %v3044
        %3105 = vmatprep.subr.bf16.mxu0 0
        %3106 = vmatpush1.bf16.msra.mxu0 %v3043
        %3107 = vmatprep.subr.bf16.mxu0 0
        %3108 = vmatpush2.bf16.msra.mxu0 %v3058
        %3109 = vmatprep.subr.bf16.mxu0 0
        %3110 = vmatpush2.bf16.msra.mxu0 %v3057
        %3111 = vmatprep.subr.bf16.mxu0 0
        %3112 = vmatpush2.bf16.msra.mxu0 %v3056
        %3113 = vmatprep.subr.bf16.mxu0 0
        %3114 = vmatpush2.bf16.msra.mxu0 %v3055
        %3115 = vmatprep.subr.bf16.mxu0 0
        %3116 = vmatpush2.bf16.msra.mxu0 %v3054
        %3117 = vmatprep.subr.bf16.mxu0 0
        %3118 = vmatpush2.bf16.msra.mxu0 %v3053
        %3119 = vmatprep.subr.bf16.mxu0 0
        %3120 = vmatpush2.bf16.msra.mxu0 %v3052
        %3121 = vmatprep.subr.bf16.mxu0 0
        %3122 = vmatpush2.bf16.msra.mxu0 %v3051
        %3123 = vmatprep.mubr.bf16.mxu0 %v2852
        %3124 = vmatmul.mubr.bf16.gmra.mxu0 %v2851
        %v3125 = vpop.f32.mrf.mxu0
        %v3126 = vadd.f32 0.0, %v3125
        %v3127 = vpop.f32.mrf.mxu0
        %v3128 = vpop.f32.mrf.mxu0
        %v3129 = vadd.f32 0.0, %v3128
        %v3130 = vpop.f32.mrf.mxu0
        %3131 = vmatprep.mubr.bf16.mxu0 %v2855
        %3132 = vmatmul.mubr.bf16.gmra.mxu0 %v2854
        %v3133 = vpop.f32.mrf.mxu0
        %v3134 = vadd.f32 0.0, %v3133
        %v3135 = vpop.f32.mrf.mxu0
        %v3136 = vpop.f32.mrf.mxu0
        %v3137 = vadd.f32 0.0, %v3136
        %v3138 = vpop.f32.mrf.mxu0
        %3139 = vmatprep.mubr.bf16.mxu0 %v2858
        %3140 = vmatmul.mubr.bf16.gmra.mxu0 %v2857
        %v3141 = vpop.f32.mrf.mxu0
        %v3142 = vadd.f32 0.0, %v3141
        %v3143 = vpop.f32.mrf.mxu0
        %v3144 = vpop.f32.mrf.mxu0
        %v3145 = vadd.f32 0.0, %v3144
        %v3146 = vpop.f32.mrf.mxu0
        %3147 = vmatprep.mubr.bf16.mxu0 %v2861
        %3148 = vmatmul.mubr.bf16.gmra.mxu0 %v2860
        %v3149 = vpop.f32.mrf.mxu0
        %v3150 = vadd.f32 0.0, %v3149
        %v3151 = vpop.f32.mrf.mxu0
        %v3152 = vpop.f32.mrf.mxu0
        %v3153 = vadd.f32 0.0, %v3152
        %v3154 = vpop.f32.mrf.mxu0
        %3155 = vmatprep.mubr.bf16.mxu0 %v2864
        %3156 = vmatmul.mubr.bf16.gmra.mxu0 %v2863
        %v3157 = vpop.f32.mrf.mxu0
        %v3158 = vadd.f32 0.0, %v3157
        %v3159 = vpop.f32.mrf.mxu0
        %v3160 = vpop.f32.mrf.mxu0
        %v3161 = vadd.f32 0.0, %v3160
        %v3162 = vpop.f32.mrf.mxu0
        %3163 = vmatprep.mubr.bf16.mxu0 %v2867
        %3164 = vmatmul.mubr.bf16.gmra.mxu0 %v2866
        %v3165 = vpop.f32.mrf.mxu0
        %v3166 = vadd.f32 0.0, %v3165
        %v3167 = vpop.f32.mrf.mxu0
        %v3168 = vpop.f32.mrf.mxu0
        %v3169 = vadd.f32 0.0, %v3168
        %v3170 = vpop.f32.mrf.mxu0
        %3171 = vmatprep.mubr.bf16.mxu0 %v2870
        %3172 = vmatmul.mubr.bf16.gmra.mxu0 %v2869
        %v3173 = vpop.f32.mrf.mxu0
        %v3174 = vadd.f32 0.0, %v3173
        %v3175 = vpop.f32.mrf.mxu0
        %v3176 = vpop.f32.mrf.mxu0
        %v3177 = vadd.f32 0.0, %v3176
        %v3178 = vpop.f32.mrf.mxu0
        %3179 = vmatprep.mubr.bf16.mxu0 %v2873
        %3180 = vmatmul.mubr.bf16.gmra.mxu0 %v2872
        %v3181 = vpop.f32.mrf.mxu0
        %v3182 = vadd.f32 0.0, %v3181
        %v3183 = vpop.f32.mrf.mxu0
        %v3184 = vpop.f32.mrf.mxu0
        %v3185 = vadd.f32 0.0, %v3184
        %v3186 = vpop.f32.mrf.mxu0
        %3187 = vmatprep.mubr.bf16.mxu0 %v2876
        %3188 = vmatmul.mubr.bf16.gmra.mxu0 %v2875
        %v3189 = vpop.f32.mrf.mxu0
        %v3190 = vadd.f32 0.0, %v3189
        %v3191 = vpop.f32.mrf.mxu0
        %v3192 = vpop.f32.mrf.mxu0
        %v3193 = vadd.f32 0.0, %v3192
        %v3194 = vpop.f32.mrf.mxu0
        %3195 = vmatprep.mubr.bf16.mxu0 %v2879
        %3196 = vmatmul.mubr.bf16.gmra.mxu0 %v2878
        %v3197 = vpop.f32.mrf.mxu0
        %v3198 = vadd.f32 0.0, %v3197
        %v3199 = vpop.f32.mrf.mxu0
        %v3200 = vpop.f32.mrf.mxu0
        %v3201 = vadd.f32 0.0, %v3200
        %v3202 = vpop.f32.mrf.mxu0
        %3203 = vmatprep.mubr.bf16.mxu0 %v2882
        %3204 = vmatmul.mubr.bf16.gmra.mxu0 %v2881
        %v3205 = vpop.f32.mrf.mxu0
        %v3206 = vadd.f32 0.0, %v3205
        %v3207 = vpop.f32.mrf.mxu0
        %v3208 = vpop.f32.mrf.mxu0
        %v3209 = vadd.f32 0.0, %v3208
        %v3210 = vpop.f32.mrf.mxu0
        %3211 = vmatprep.mubr.bf16.mxu0 %v2885
        %3212 = vmatmul.mubr.bf16.gmra.mxu0 %v2884
        %v3213 = vpop.f32.mrf.mxu0
        %v3214 = vadd.f32 0.0, %v3213
        %v3215 = vpop.f32.mrf.mxu0
        %v3216 = vpop.f32.mrf.mxu0
        %v3217 = vadd.f32 0.0, %v3216
        %v3218 = vpop.f32.mrf.mxu0
        %3219 = vmatprep.mubr.bf16.mxu0 %v2888
        %3220 = vmatmul.mubr.bf16.gmra.mxu0 %v2887
        %v3221 = vpop.f32.mrf.mxu0
        %v3222 = vadd.f32 0.0, %v3221
        %v3223 = vpop.f32.mrf.mxu0
        %v3224 = vpop.f32.mrf.mxu0
        %v3225 = vadd.f32 0.0, %v3224
        %v3226 = vpop.f32.mrf.mxu0
        %3227 = vmatprep.mubr.bf16.mxu0 %v2891
        %3228 = vmatmul.mubr.bf16.gmra.mxu0 %v2890
        %v3229 = vpop.f32.mrf.mxu0
        %v3230 = vadd.f32 0.0, %v3229
        %v3231 = vpop.f32.mrf.mxu0
        %v3232 = vpop.f32.mrf.mxu0
        %v3233 = vadd.f32 0.0, %v3232
        %v3234 = vpop.f32.mrf.mxu0
        %3235 = vmatprep.mubr.bf16.mxu0 %v2894
        %3236 = vmatmul.mubr.bf16.gmra.mxu0 %v2893
        %v3237 = vpop.f32.mrf.mxu0
        %v3238 = vadd.f32 0.0, %v3237
        %v3239 = vpop.f32.mrf.mxu0
        %v3240 = vpop.f32.mrf.mxu0
        %v3241 = vadd.f32 0.0, %v3240
        %v3242 = vpop.f32.mrf.mxu0
        %3243 = vmatprep.mubr.bf16.mxu0 %v2897
        %3244 = vmatmul.mubr.bf16.gmra.mxu0 %v2896
        %v3245 = vpop.f32.mrf.mxu0
        %v3246 = vadd.f32 0.0, %v3245
        %v3247 = vpop.f32.mrf.mxu0
        %v3248 = vpop.f32.mrf.mxu0
        %v3249 = vadd.f32 0.0, %v3248
        %v3250 = vpop.f32.mrf.mxu0
        %3251 = vdwg.mxu0
        %3252 = vmatprep.subr.bf16.mxu0 0
        %3253 = vmatpush1.bf16.msra.mxu0 %v3066
        %3254 = vmatprep.subr.bf16.mxu0 0
        %3255 = vmatpush1.bf16.msra.mxu0 %v3065
        %3256 = vmatprep.subr.bf16.mxu0 0
        %3257 = vmatpush1.bf16.msra.mxu0 %v3064
        %3258 = vmatprep.subr.bf16.mxu0 0
        %3259 = vmatpush1.bf16.msra.mxu0 %v3063
        %3260 = vmatprep.subr.bf16.mxu0 0
        %3261 = vmatpush1.bf16.msra.mxu0 %v3062
        %3262 = vmatprep.subr.bf16.mxu0 0
        %3263 = vmatpush1.bf16.msra.mxu0 %v3061
        %3264 = vmatprep.subr.bf16.mxu0 0
        %3265 = vmatpush1.bf16.msra.mxu0 %v3060
        %3266 = vmatprep.subr.bf16.mxu0 0
        %3267 = vmatpush1.bf16.msra.mxu0 %v3059
        %3268 = vmatprep.subr.bf16.mxu0 0
        %3269 = vmatpush2.bf16.msra.mxu0 0
        %3270 = vmatprep.subr.bf16.mxu0 0
        %3271 = vmatpush2.bf16.msra.mxu0 0
        %3272 = vmatprep.subr.bf16.mxu0 0
        %3273 = vmatpush2.bf16.msra.mxu0 0
        %3274 = vmatprep.subr.bf16.mxu0 0
        %3275 = vmatpush2.bf16.msra.mxu0 0
        %3276 = vmatprep.subr.bf16.mxu0 0
        %3277 = vmatpush2.bf16.msra.mxu0 0
        %3278 = vmatprep.subr.bf16.mxu0 0
        %3279 = vmatpush2.bf16.msra.mxu0 0
        %3280 = vmatprep.subr.bf16.mxu0 0
        %3281 = vmatpush2.bf16.msra.mxu0 0
        %3282 = vmatprep.subr.bf16.mxu0 0
        %3283 = vmatpush2.bf16.msra.mxu0 0
        %3284 = vmatprep.mubr.bf16.mxu0 0
        %3285 = vmatmul.mubr.bf16.gmra.mxu0 %v2853
        %v3286 = vpop.f32.mrf.mxu0
        %v3287 = vadd.f32 %v3126, %v3286
        %v3288 = vpop.f32.mrf.mxu0
        %v3289 = vpop.f32.mrf.mxu0
        %v3290 = vadd.f32 %v3129, %v3289
        %v3291 = vpop.f32.mrf.mxu0
        %3292 = vmatprep.mubr.bf16.mxu0 0
        %3293 = vmatmul.mubr.bf16.gmra.mxu0 %v2856
        %v3294 = vpop.f32.mrf.mxu0
        %v3295 = vadd.f32 %v3134, %v3294
        %v3296 = vpop.f32.mrf.mxu0
        %v3297 = vpop.f32.mrf.mxu0
        %v3298 = vadd.f32 %v3137, %v3297
        %v3299 = vpop.f32.mrf.mxu0
        %3300 = vmatprep.mubr.bf16.mxu0 0
        %3301 = vmatmul.mubr.bf16.gmra.mxu0 %v2859
        %v3302 = vpop.f32.mrf.mxu0
        %v3303 = vadd.f32 %v3142, %v3302
        %v3304 = vpop.f32.mrf.mxu0
        %v3305 = vpop.f32.mrf.mxu0
        %v3306 = vadd.f32 %v3145, %v3305
        %v3307 = vpop.f32.mrf.mxu0
        %3308 = vmatprep.mubr.bf16.mxu0 0
        %3309 = vmatmul.mubr.bf16.gmra.mxu0 %v2862
        %v3310 = vpop.f32.mrf.mxu0
        %v3311 = vadd.f32 %v3150, %v3310
        %v3312 = vpop.f32.mrf.mxu0
        %v3313 = vpop.f32.mrf.mxu0
        %v3314 = vadd.f32 %v3153, %v3313
        %v3315 = vpop.f32.mrf.mxu0
        %3316 = vmatprep.mubr.bf16.mxu0 0
        %3317 = vmatmul.mubr.bf16.gmra.mxu0 %v2865
        %v3318 = vpop.f32.mrf.mxu0
        %v3319 = vadd.f32 %v3158, %v3318
        %v3320 = vpop.f32.mrf.mxu0
        %v3321 = vpop.f32.mrf.mxu0
        %v3322 = vadd.f32 %v3161, %v3321
        %v3323 = vpop.f32.mrf.mxu0
        %3324 = vmatprep.mubr.bf16.mxu0 0
        %3325 = vmatmul.mubr.bf16.gmra.mxu0 %v2868
        %v3326 = vpop.f32.mrf.mxu0
        %v3327 = vadd.f32 %v3166, %v3326
        %v3328 = vpop.f32.mrf.mxu0
        %v3329 = vpop.f32.mrf.mxu0
        %v3330 = vadd.f32 %v3169, %v3329
        %v3331 = vpop.f32.mrf.mxu0
        %3332 = vmatprep.mubr.bf16.mxu0 0
        %3333 = vmatmul.mubr.bf16.gmra.mxu0 %v2871
        %v3334 = vpop.f32.mrf.mxu0
        %v3335 = vadd.f32 %v3174, %v3334
        %v3336 = vpop.f32.mrf.mxu0
        %v3337 = vpop.f32.mrf.mxu0
        %v3338 = vadd.f32 %v3177, %v3337
        %v3339 = vpop.f32.mrf.mxu0
        %3340 = vmatprep.mubr.bf16.mxu0 0
        %3341 = vmatmul.mubr.bf16.gmra.mxu0 %v2874
        %v3342 = vpop.f32.mrf.mxu0
        %v3343 = vadd.f32 %v3182, %v3342
        %v3344 = vpop.f32.mrf.mxu0
        %v3345 = vpop.f32.mrf.mxu0
        %v3346 = vadd.f32 %v3185, %v3345
        %v3347 = vpop.f32.mrf.mxu0
        %3348 = vmatprep.mubr.bf16.mxu0 0
        %3349 = vmatmul.mubr.bf16.gmra.mxu0 %v2877
        %v3350 = vpop.f32.mrf.mxu0
        %v3351 = vadd.f32 %v3190, %v3350
        %v3352 = vpop.f32.mrf.mxu0
        %v3353 = vpop.f32.mrf.mxu0
        %v3354 = vadd.f32 %v3193, %v3353
        %v3355 = vpop.f32.mrf.mxu0
        %3356 = vmatprep.mubr.bf16.mxu0 0
        %3357 = vmatmul.mubr.bf16.gmra.mxu0 %v2880
        %v3358 = vpop.f32.mrf.mxu0
        %v3359 = vadd.f32 %v3198, %v3358
        %v3360 = vpop.f32.mrf.mxu0
        %v3361 = vpop.f32.mrf.mxu0
        %v3362 = vadd.f32 %v3201, %v3361
        %v3363 = vpop.f32.mrf.mxu0
        %3364 = vmatprep.mubr.bf16.mxu0 0
        %3365 = vmatmul.mubr.bf16.gmra.mxu0 %v2883
        %v3366 = vpop.f32.mrf.mxu0
        %v3367 = vadd.f32 %v3206, %v3366
        %v3368 = vpop.f32.mrf.mxu0
        %v3369 = vpop.f32.mrf.mxu0
        %v3370 = vadd.f32 %v3209, %v3369
        %v3371 = vpop.f32.mrf.mxu0
        %3372 = vmatprep.mubr.bf16.mxu0 0
        %3373 = vmatmul.mubr.bf16.gmra.mxu0 %v2886
        %v3374 = vpop.f32.mrf.mxu0
        %v3375 = vadd.f32 %v3214, %v3374
        %v3376 = vpop.f32.mrf.mxu0
        %v3377 = vpop.f32.mrf.mxu0
        %v3378 = vadd.f32 %v3217, %v3377
        %v3379 = vpop.f32.mrf.mxu0
        %3380 = vmatprep.mubr.bf16.mxu0 0
        %3381 = vmatmul.mubr.bf16.gmra.mxu0 %v2889
        %v3382 = vpop.f32.mrf.mxu0
        %v3383 = vadd.f32 %v3222, %v3382
        %v3384 = vpop.f32.mrf.mxu0
        %v3385 = vpop.f32.mrf.mxu0
        %v3386 = vadd.f32 %v3225, %v3385
        %v3387 = vpop.f32.mrf.mxu0
        %3388 = vmatprep.mubr.bf16.mxu0 0
        %3389 = vmatmul.mubr.bf16.gmra.mxu0 %v2892
        %v3390 = vpop.f32.mrf.mxu0
        %v3391 = vadd.f32 %v3230, %v3390
        %v3392 = vpop.f32.mrf.mxu0
        %v3393 = vpop.f32.mrf.mxu0
        %v3394 = vadd.f32 %v3233, %v3393
        %v3395 = vpop.f32.mrf.mxu0
        %3396 = vmatprep.mubr.bf16.mxu0 0
        %3397 = vmatmul.mubr.bf16.gmra.mxu0 %v2895
        %v3398 = vpop.f32.mrf.mxu0
        %v3399 = vadd.f32 %v3238, %v3398
        %v3400 = vpop.f32.mrf.mxu0
        %v3401 = vpop.f32.mrf.mxu0
        %v3402 = vadd.f32 %v3241, %v3401
        %v3403 = vpop.f32.mrf.mxu0
        %3404 = vmatprep.mubr.bf16.mxu0 0
        %3405 = vmatmul.mubr.bf16.gmra.mxu0 %v2898
        %v3406 = vpop.f32.mrf.mxu0
        %v3407 = vadd.f32 %v3246, %v3406
        %v3408 = vpop.f32.mrf.mxu0
        %v3409 = vpop.f32.mrf.mxu0
        %v3410 = vadd.f32 %v3249, %v3409
        %v3411 = vpop.f32.mrf.mxu0
        %3412 = vdwg.mxu0
        %v3413 = vadd.f32 %v2452, %v3287
        %v3414 = vadd.f32 %v2455, %v3290
        %v3415 = vadd.f32 %v2460, %v3295
        %v3416 = vadd.f32 %v2463, %v3298
        %v3417 = vadd.f32 %v2468, %v3303
        %v3418 = vadd.f32 %v2471, %v3306
        %v3419 = vadd.f32 %v2476, %v3311
        %v3420 = vadd.f32 %v2479, %v3314
        %v3421 = vadd.f32 %v2484, %v3319
        %v3422 = vadd.f32 %v2487, %v3322
        %v3423 = vadd.f32 %v2492, %v3327
        %v3424 = vadd.f32 %v2495, %v3330
        %v3425 = vadd.f32 %v2500, %v3335
        %v3426 = vadd.f32 %v2503, %v3338
        %v3427 = vadd.f32 %v2508, %v3343
        %v3428 = vadd.f32 %v2511, %v3346
        %v3429 = vadd.f32 %v2516, %v3351
        %v3430 = vadd.f32 %v2519, %v3354
        %v3431 = vadd.f32 %v2524, %v3359
        %v3432 = vadd.f32 %v2527, %v3362
        %v3433 = vadd.f32 %v2532, %v3367
        %v3434 = vadd.f32 %v2535, %v3370
        %v3435 = vadd.f32 %v2540, %v3375
        %v3436 = vadd.f32 %v2543, %v3378
        %v3437 = vadd.f32 %v2548, %v3383
        %v3438 = vadd.f32 %v2551, %v3386
        %v3439 = vadd.f32 %v2556, %v3391
        %v3440 = vadd.f32 %v2559, %v3394
        %v3441 = vadd.f32 %v2564, %v3399
        %v3442 = vadd.f32 %v2567, %v3402
        %v3443 = vadd.f32 %v2572, %v3407
        %v3444 = vadd.f32 %v2575, %v3410
        %v3445 = vld [vmem:[%s3] sm:$0x1]
        %v3447 = vlaneseq
        %v3448 = vshrl.u32 %v3447, 7
        %v3449 = vsub.s32 0, %v3448
        %v3450 = vrot.slane %v3445, %v3449
        %v3452 = vadd.f32 %v3413, %v3450
        %v3453 = vadd.f32 %v3414, %v3450
        %v3454 = vadd.f32 %v3415, %v3450
        %v3455 = vadd.f32 %v3416, %v3450
        %v3456 = vadd.f32 %v3417, %v3450
        %v3457 = vadd.f32 %v3418, %v3450
        %v3458 = vadd.f32 %v3419, %v3450
        %v3459 = vadd.f32 %v3420, %v3450
        %v3460 = vadd.f32 %v3421, %v3450
        %v3461 = vadd.f32 %v3422, %v3450
        %v3462 = vadd.f32 %v3423, %v3450
        %v3463 = vadd.f32 %v3424, %v3450
        %v3464 = vadd.f32 %v3425, %v3450
        %v3465 = vadd.f32 %v3426, %v3450
        %v3466 = vadd.f32 %v3427, %v3450
        %v3467 = vadd.f32 %v3428, %v3450
        %v3468 = vadd.f32 %v3429, %v3450
        %v3469 = vadd.f32 %v3430, %v3450
        %v3470 = vadd.f32 %v3431, %v3450
        %v3471 = vadd.f32 %v3432, %v3450
        %v3472 = vadd.f32 %v3433, %v3450
        %v3473 = vadd.f32 %v3434, %v3450
        %v3474 = vadd.f32 %v3435, %v3450
        %v3475 = vadd.f32 %v3436, %v3450
        %v3476 = vadd.f32 %v3437, %v3450
        %v3477 = vadd.f32 %v3438, %v3450
        %v3478 = vadd.f32 %v3439, %v3450
        %v3479 = vadd.f32 %v3440, %v3450
        %v3480 = vadd.f32 %v3441, %v3450
        %v3481 = vadd.f32 %v3442, %v3450
        %v3482 = vadd.f32 %v3443, %v3450
        %v3483 = vadd.f32 %v3444, %v3450
        %v3484 = vmax.f32 %v3452, 0.0
        %v3485 = vmax.f32 %v3453, 0.0
        %v3486 = vmax.f32 %v3454, 0.0
        %v3487 = vmax.f32 %v3455, 0.0
        %v3488 = vmax.f32 %v3456, 0.0
        %v3489 = vmax.f32 %v3457, 0.0
        %v3490 = vmax.f32 %v3458, 0.0
        %v3491 = vmax.f32 %v3459, 0.0
        %v3492 = vmax.f32 %v3460, 0.0
        %v3493 = vmax.f32 %v3461, 0.0
        %v3494 = vmax.f32 %v3462, 0.0
        %v3495 = vmax.f32 %v3463, 0.0
        %v3496 = vmax.f32 %v3464, 0.0
        %v3497 = vmax.f32 %v3465, 0.0
        %v3498 = vmax.f32 %v3466, 0.0
        %v3499 = vmax.f32 %v3467, 0.0
        %v3500 = vmax.f32 %v3468, 0.0
        %v3501 = vmax.f32 %v3469, 0.0
        %v3502 = vmax.f32 %v3470, 0.0
        %v3503 = vmax.f32 %v3471, 0.0
        %v3504 = vmax.f32 %v3472, 0.0
        %v3505 = vmax.f32 %v3473, 0.0
        %v3506 = vmax.f32 %v3474, 0.0
        %v3507 = vmax.f32 %v3475, 0.0
        %v3508 = vmax.f32 %v3476, 0.0
        %v3509 = vmax.f32 %v3477, 0.0
        %v3510 = vmax.f32 %v3478, 0.0
        %v3511 = vmax.f32 %v3479, 0.0
        %v3512 = vmax.f32 %v3480, 0.0
        %v3513 = vmax.f32 %v3481, 0.0
        %v3514 = vmax.f32 %v3482, 0.0
        %v3515 = vmax.f32 %v3483, 0.0
        %v3516 = vpack.c.bf16 %v3485, %v3484
        %v3517 = vpack.c.bf16 %v3487, %v3486
        %v3518 = vpack.c.bf16 %v3489, %v3488
        %v3519 = vpack.c.bf16 %v3491, %v3490
        %v3520 = vpack.c.bf16 %v3493, %v3492
        %v3521 = vpack.c.bf16 %v3495, %v3494
        %v3522 = vpack.c.bf16 %v3497, %v3496
        %v3523 = vpack.c.bf16 %v3499, %v3498
        %v3524 = vpack.c.bf16 %v3501, %v3500
        %v3525 = vpack.c.bf16 %v3503, %v3502
        %v3526 = vpack.c.bf16 %v3505, %v3504
        %v3527 = vpack.c.bf16 %v3507, %v3506
        %v3528 = vpack.c.bf16 %v3509, %v3508
        %v3529 = vpack.c.bf16 %v3511, %v3510
        %v3530 = vpack.c.bf16 %v3513, %v3512
        %v3531 = vpack.c.bf16 %v3515, %v3514
        %v3548 = vunpack.c.l.b16 %v3516
        %v3549 = vunpack.c.h.b16 %v3516
        %v3550 = vunpack.c.l.b16 %v3517
        %v3551 = vunpack.c.h.b16 %v3517
        %v3552 = vunpack.c.l.b16 %v3518
        %v3553 = vunpack.c.h.b16 %v3518
        %v3554 = vunpack.c.l.b16 %v3519
        %v3555 = vunpack.c.h.b16 %v3519
        %v3556 = vunpack.c.l.b16 %v3520
        %v3557 = vunpack.c.h.b16 %v3520
        %v3558 = vunpack.c.l.b16 %v3521
        %v3559 = vunpack.c.h.b16 %v3521
        %v3560 = vunpack.c.l.b16 %v3522
        %v3561 = vunpack.c.h.b16 %v3522
        %v3562 = vunpack.c.l.b16 %v3523
        %v3563 = vunpack.c.h.b16 %v3523
        %v3564 = vunpack.c.l.b16 %v3524
        %v3565 = vunpack.c.h.b16 %v3524
        %v3566 = vunpack.c.l.b16 %v3525
        %v3567 = vunpack.c.h.b16 %v3525
        %v3568 = vunpack.c.l.b16 %v3526
        %v3569 = vunpack.c.h.b16 %v3526
        %v3570 = vunpack.c.l.b16 %v3527
        %v3571 = vunpack.c.h.b16 %v3527
        %v3572 = vunpack.c.l.b16 %v3528
        %v3573 = vunpack.c.h.b16 %v3528
        %v3574 = vunpack.c.l.b16 %v3529
        %v3575 = vunpack.c.h.b16 %v3529
        %v3576 = vunpack.c.l.b16 %v3530
        %v3577 = vunpack.c.h.b16 %v3530
        %v3578 = vunpack.c.l.b16 %v3531
        %v3579 = vunpack.c.h.b16 %v3531
        %v3580 = vpack.c.b16 %v3548, %v3548
        %v3581 = vpack.c.b16 %v3549, %v3549
        %v3582 = vpack.c.b16 %v3550, %v3550
        %v3583 = vpack.c.b16 %v3551, %v3551
        %v3584 = vpack.c.b16 %v3552, %v3552
        %v3585 = vpack.c.b16 %v3553, %v3553
        %v3586 = vpack.c.b16 %v3554, %v3554
        %v3587 = vpack.c.b16 %v3555, %v3555
        %v3588 = vpack.c.b16 %v3556, %v3556
        %v3589 = vpack.c.b16 %v3557, %v3557
        %v3590 = vpack.c.b16 %v3558, %v3558
        %v3591 = vpack.c.b16 %v3559, %v3559
        %v3592 = vpack.c.b16 %v3560, %v3560
        %v3593 = vpack.c.b16 %v3561, %v3561
        %v3594 = vpack.c.b16 %v3562, %v3562
        %v3595 = vpack.c.b16 %v3563, %v3563
        %v3596 = vpack.c.b16 %v3564, %v3564
        %v3597 = vpack.c.b16 %v3565, %v3565
        %v3598 = vpack.c.b16 %v3566, %v3566
        %v3599 = vpack.c.b16 %v3567, %v3567
        %v3600 = vpack.c.b16 %v3568, %v3568
        %v3601 = vpack.c.b16 %v3569, %v3569
        %v3602 = vpack.c.b16 %v3570, %v3570
        %v3603 = vpack.c.b16 %v3571, %v3571
        %v3604 = vpack.c.b16 %v3572, %v3572
        %v3605 = vpack.c.b16 %v3573, %v3573
        %v3606 = vpack.c.b16 %v3574, %v3574
        %v3607 = vpack.c.b16 %v3575, %v3575
        %v3608 = vpack.c.b16 %v3576, %v3576
        %v3609 = vpack.c.b16 %v3577, %v3577
        %v3610 = vpack.c.b16 %v3578, %v3578
        %v3611 = vpack.c.b16 %v3579, %v3579
        %3644 = vst [vmem:[#allocation2 + $0x1c] sm:$0xf] %v3580
        %3645 = vst [vmem:[#allocation2 + $0x28] sm:$0xf] %v3581
        %3646 = vst [vmem:[#allocation2 + $0x34] sm:$0xf] %v3582
        %3647 = vst [vmem:[#allocation2 + $0x40] sm:$0xf] %v3583
        %3648 = vst [vmem:[#allocation2 + $0x4c] sm:$0xf] %v3584
        %3649 = vst [vmem:[#allocation2 + $0x58] sm:$0xf] %v3585
        %3650 = vst [vmem:[#allocation2 + $0x64] sm:$0xf] %v3586
        %3651 = vst [vmem:[#allocation2 + $0x70] sm:$0xf] %v3587
        %3652 = vst [vmem:[#allocation2 + $0x7c] sm:$0xf] %v3588
        %3653 = vst [vmem:[#allocation2 + $0x88] sm:$0xf] %v3589
        %3654 = vst [vmem:[#allocation2 + $0x94] sm:$0xf] %v3590
        %3655 = vst [vmem:[#allocation2 + $0xa0] sm:$0xf] %v3591
        %3656 = vst [vmem:[#allocation2 + $0xac] sm:$0xf] %v3592
        %3657 = vst [vmem:[#allocation2 + $0xb8] sm:$0xf] %v3593
        %3658 = vst [vmem:[#allocation2 + $0xc4] sm:$0xf] %v3594
        %3659 = vst [vmem:[#allocation2 + $0xd0] sm:$0xf] %v3595
        %3660 = vst [vmem:[#allocation2 + $0xdc] sm:$0xf] %v3596
        %3661 = vst [vmem:[#allocation2 + $0xe8] sm:$0xf] %v3597
        %3662 = vst [vmem:[#allocation2 + $0xf4] sm:$0xf] %v3598
        %3663 = vst [vmem:[#allocation2 + $0x100] sm:$0xf] %v3599
        %3664 = vst [vmem:[#allocation2 + $0x10c] sm:$0xf] %v3600
        %3665 = vst [vmem:[#allocation2 + $0x118] sm:$0xf] %v3601
        %3666 = vst [vmem:[#allocation2 + $0x124] sm:$0xf] %v3602
        %3667 = vst [vmem:[#allocation2 + $0x130] sm:$0xf] %v3603
        %3668 = vst [vmem:[#allocation2 + $0x13c] sm:$0xf] %v3604
        %3669 = vst [vmem:[#allocation2 + $0x148] sm:$0xf] %v3605
        %3670 = vst [vmem:[#allocation2 + $0x154] sm:$0xf] %v3606
        %3671 = vst [vmem:[#allocation2 + $0x160] sm:$0xf] %v3607
        %3672 = vst [vmem:[#allocation2 + $0x16c] sm:$0xf] %v3608
        %3673 = vst [vmem:[#allocation2 + $0x178] sm:$0xf] %v3609
        %3674 = vst [vmem:[#allocation2 + $0x184] sm:$0xf] %v3610
        %3675 = vst [vmem:[#allocation2 + $0x190] sm:$0xf] %v3611
        %v3676 = vld [vmem:[#allocation2 + $0x10] sm:$0x8]
        %v3677 = vld [vmem:[#allocation2 + $0x1c] sm:$0xf]
        %v3678 = vld [vmem:[#allocation2 + $0x28] sm:$0xf]
        %v3679 = vld [vmem:[#allocation2 + $0x34] sm:$0xf]
        %v3680 = vld [vmem:[#allocation2 + $0x40] sm:$0xf]
        %v3681 = vld [vmem:[#allocation2 + $0x4c] sm:$0xf]
        %v3682 = vld [vmem:[#allocation2 + $0x58] sm:$0xf]
        %v3683 = vld [vmem:[#allocation2 + $0x64] sm:$0xf]
        %v3684 = vld [vmem:[#allocation2 + $0x70] sm:$0xf]
        %v3685 = vld [vmem:[#allocation2 + $0x7c] sm:$0xf]
        %v3686 = vld [vmem:[#allocation2 + $0x88] sm:$0xf]
        %v3687 = vld [vmem:[#allocation2 + $0x94] sm:$0xf]
        %v3688 = vld [vmem:[#allocation2 + $0xa0] sm:$0xf]
        %v3689 = vld [vmem:[#allocation2 + $0xac] sm:$0xf]
        %v3690 = vld [vmem:[#allocation2 + $0xb8] sm:$0xf]
        %v3691 = vld [vmem:[#allocation2 + $0xc4] sm:$0xf]
        %v3692 = vld [vmem:[#allocation2 + $0xd0] sm:$0xf]
        %v3693 = vld [vmem:[#allocation2 + $0xdc] sm:$0xf]
        %v3694 = vld [vmem:[#allocation2 + $0xe8] sm:$0xf]
        %v3695 = vld [vmem:[#allocation2 + $0xf4] sm:$0xf]
        %v3696 = vld [vmem:[#allocation2 + $0x100] sm:$0xf]
        %v3697 = vld [vmem:[#allocation2 + $0x10c] sm:$0xf]
        %v3698 = vld [vmem:[#allocation2 + $0x118] sm:$0xf]
        %v3699 = vld [vmem:[#allocation2 + $0x124] sm:$0xf]
        %v3700 = vld [vmem:[#allocation2 + $0x130] sm:$0xf]
        %v3701 = vld [vmem:[#allocation2 + $0x13c] sm:$0xf]
        %v3702 = vld [vmem:[#allocation2 + $0x148] sm:$0xf]
        %v3703 = vld [vmem:[#allocation2 + $0x154] sm:$0xf]
        %v3704 = vld [vmem:[#allocation2 + $0x160] sm:$0xf]
        %v3705 = vld [vmem:[#allocation2 + $0x16c] sm:$0xf]
        %v3706 = vld [vmem:[#allocation2 + $0x178] sm:$0xf]
        %v3707 = vld [vmem:[#allocation2 + $0x184] sm:$0xf]
        %v3708 = vld [vmem:[#allocation2 + $0x190] sm:$0xf]
        %v3709 = vsel %vm365, %v3676, 0
        %v3710 = vsel %vm366, %v3677, 0
        %v3711 = vsel %vm367, %v3678, 0
        %v3712 = vsel %vm366, %v3679, 0
        %v3713 = vsel %vm367, %v3680, 0
        %v3714 = vsel %vm366, %v3681, 0
        %v3715 = vsel %vm367, %v3682, 0
        %v3716 = vsel %vm366, %v3683, 0
        %v3717 = vsel %vm367, %v3684, 0
        %v3718 = vsel %vm366, %v3685, 0
        %v3719 = vsel %vm367, %v3686, 0
        %v3720 = vsel %vm366, %v3687, 0
        %v3721 = vsel %vm367, %v3688, 0
        %v3722 = vsel %vm366, %v3689, 0
        %v3723 = vsel %vm367, %v3690, 0
        %v3724 = vsel %vm366, %v3691, 0
        %v3725 = vsel %vm367, %v3692, 0
        %v3726 = vsel %vm366, %v3693, 0
        %v3727 = vsel %vm367, %v3694, 0
        %v3728 = vsel %vm366, %v3695, 0
        %v3729 = vsel %vm367, %v3696, 0
        %v3730 = vsel %vm366, %v3697, 0
        %v3731 = vsel %vm367, %v3698, 0
        %v3732 = vsel %vm366, %v3699, 0
        %v3733 = vsel %vm367, %v3700, 0
        %v3734 = vsel %vm366, %v3701, 0
        %v3735 = vsel %vm367, %v3702, 0
        %v3736 = vsel %vm366, %v3703, 0
        %v3737 = vsel %vm367, %v3704, 0
        %v3738 = vsel %vm366, %v3705, 0
        %v3739 = vsel %vm367, %v3706, 0
        %v3740 = vsel %vm366, %v3707, 0
        %v3741 = vsel %vm368, %v3708, 0
        %v3742 = vld [vmem:[#allocation2 + $0x19c] sm:$0x1]
        %v3743 = vsel %vm428, %v3677, 0
        %v3744 = vsel %vm429, %v3678, 0
        %v3745 = vsel %vm430, %v3679, 0
        %v3746 = vsel %vm429, %v3680, 0
        %v3747 = vsel %vm430, %v3681, 0
        %v3748 = vsel %vm429, %v3682, 0
        %v3749 = vsel %vm430, %v3683, 0
        %v3750 = vsel %vm429, %v3684, 0
        %v3751 = vsel %vm430, %v3685, 0
        %v3752 = vsel %vm429, %v3686, 0
        %v3753 = vsel %vm430, %v3687, 0
        %v3754 = vsel %vm429, %v3688, 0
        %v3755 = vsel %vm430, %v3689, 0
        %v3756 = vsel %vm429, %v3690, 0
        %v3757 = vsel %vm430, %v3691, 0
        %v3758 = vsel %vm429, %v3692, 0
        %v3759 = vsel %vm430, %v3693, 0
        %v3760 = vsel %vm429, %v3694, 0
        %v3761 = vsel %vm430, %v3695, 0
        %v3762 = vsel %vm429, %v3696, 0
        %v3763 = vsel %vm430, %v3697, 0
        %v3764 = vsel %vm429, %v3698, 0
        %v3765 = vsel %vm430, %v3699, 0
        %v3766 = vsel %vm429, %v3700, 0
        %v3767 = vsel %vm430, %v3701, 0
        %v3768 = vsel %vm429, %v3702, 0
        %v3769 = vsel %vm430, %v3703, 0
        %v3770 = vsel %vm429, %v3704, 0
        %v3771 = vsel %vm430, %v3705, 0
        %v3772 = vsel %vm429, %v3706, 0
        %v3773 = vsel %vm430, %v3707, 0
        %v3774 = vsel %vm429, %v3708, 0
        %v3775 = vsel %vm431, %v3742, 0
        %v3777 = vshrl.u32 %v3709, 16
        %v3779 = vrot.slane %v3777, 7
        %v3780 = vrot.slane %v3779, 4
        %v3782 = vshrl.u32 %v3710, 16
        %v3784 = vrot.slane %v3782, 7
        %v3785 = vshll.u32 %v3710, 16
        %v3787 = vor.u32 %v3784, %v3785
        %v3788 = vsel %vm409, %v3780, %v3787
        %v3789 = vrot.slane %v3784, 4
        %v3791 = vshrl.u32 %v3711, 16
        %v3793 = vrot.slane %v3791, 7
        %v3794 = vshll.u32 %v3711, 16
        %v3796 = vor.u32 %v3793, %v3794
        %v3797 = vsel %vm409, %v3789, %v3796
        %v3798 = vrot.slane %v3793, 4
        %v3800 = vshrl.u32 %v3712, 16
        %v3802 = vrot.slane %v3800, 7
        %v3803 = vshll.u32 %v3712, 16
        %v3805 = vor.u32 %v3802, %v3803
        %v3806 = vsel %vm409, %v3798, %v3805
        %v3807 = vrot.slane %v3802, 4
        %v3809 = vshrl.u32 %v3713, 16
        %v3811 = vrot.slane %v3809, 7
        %v3812 = vshll.u32 %v3713, 16
        %v3814 = vor.u32 %v3811, %v3812
        %v3815 = vsel %vm409, %v3807, %v3814
        %v3816 = vrot.slane %v3811, 4
        %v3818 = vshrl.u32 %v3714, 16
        %v3820 = vrot.slane %v3818, 7
        %v3821 = vshll.u32 %v3714, 16
        %v3823 = vor.u32 %v3820, %v3821
        %v3824 = vsel %vm409, %v3816, %v3823
        %v3825 = vrot.slane %v3820, 4
        %v3827 = vshrl.u32 %v3715, 16
        %v3829 = vrot.slane %v3827, 7
        %v3830 = vshll.u32 %v3715, 16
        %v3832 = vor.u32 %v3829, %v3830
        %v3833 = vsel %vm409, %v3825, %v3832
        %v3834 = vrot.slane %v3829, 4
        %v3836 = vshrl.u32 %v3716, 16
        %v3838 = vrot.slane %v3836, 7
        %v3839 = vshll.u32 %v3716, 16
        %v3841 = vor.u32 %v3838, %v3839
        %v3842 = vsel %vm409, %v3834, %v3841
        %v3843 = vrot.slane %v3838, 4
        %v3845 = vshrl.u32 %v3717, 16
        %v3847 = vrot.slane %v3845, 7
        %v3848 = vshll.u32 %v3717, 16
        %v3850 = vor.u32 %v3847, %v3848
        %v3851 = vsel %vm409, %v3843, %v3850
        %v3852 = vrot.slane %v3847, 4
        %v3854 = vshrl.u32 %v3718, 16
        %v3856 = vrot.slane %v3854, 7
        %v3857 = vshll.u32 %v3718, 16
        %v3859 = vor.u32 %v3856, %v3857
        %v3860 = vsel %vm409, %v3852, %v3859
        %v3861 = vrot.slane %v3856, 4
        %v3863 = vshrl.u32 %v3719, 16
        %v3865 = vrot.slane %v3863, 7
        %v3866 = vshll.u32 %v3719, 16
        %v3868 = vor.u32 %v3865, %v3866
        %v3869 = vsel %vm409, %v3861, %v3868
        %v3870 = vrot.slane %v3865, 4
        %v3872 = vshrl.u32 %v3720, 16
        %v3874 = vrot.slane %v3872, 7
        %v3875 = vshll.u32 %v3720, 16
        %v3877 = vor.u32 %v3874, %v3875
        %v3878 = vsel %vm409, %v3870, %v3877
        %v3879 = vrot.slane %v3874, 4
        %v3881 = vshrl.u32 %v3721, 16
        %v3883 = vrot.slane %v3881, 7
        %v3884 = vshll.u32 %v3721, 16
        %v3886 = vor.u32 %v3883, %v3884
        %v3887 = vsel %vm409, %v3879, %v3886
        %v3888 = vrot.slane %v3883, 4
        %v3890 = vshrl.u32 %v3722, 16
        %v3892 = vrot.slane %v3890, 7
        %v3893 = vshll.u32 %v3722, 16
        %v3895 = vor.u32 %v3892, %v3893
        %v3896 = vsel %vm409, %v3888, %v3895
        %v3897 = vrot.slane %v3892, 4
        %v3899 = vshrl.u32 %v3723, 16
        %v3901 = vrot.slane %v3899, 7
        %v3902 = vshll.u32 %v3723, 16
        %v3904 = vor.u32 %v3901, %v3902
        %v3905 = vsel %vm409, %v3897, %v3904
        %v3906 = vrot.slane %v3901, 4
        %v3908 = vshrl.u32 %v3724, 16
        %v3910 = vrot.slane %v3908, 7
        %v3911 = vshll.u32 %v3724, 16
        %v3913 = vor.u32 %v3910, %v3911
        %v3914 = vsel %vm409, %v3906, %v3913
        %v3915 = vrot.slane %v3910, 4
        %v3917 = vshrl.u32 %v3725, 16
        %v3919 = vrot.slane %v3917, 7
        %v3920 = vshll.u32 %v3725, 16
        %v3922 = vor.u32 %v3919, %v3920
        %v3923 = vsel %vm409, %v3915, %v3922
        %v3924 = vrot.slane %v3919, 4
        %v3926 = vshrl.u32 %v3726, 16
        %v3928 = vrot.slane %v3926, 7
        %v3929 = vshll.u32 %v3726, 16
        %v3931 = vor.u32 %v3928, %v3929
        %v3932 = vsel %vm409, %v3924, %v3931
        %v3933 = vrot.slane %v3928, 4
        %v3935 = vshrl.u32 %v3727, 16
        %v3937 = vrot.slane %v3935, 7
        %v3938 = vshll.u32 %v3727, 16
        %v3940 = vor.u32 %v3937, %v3938
        %v3941 = vsel %vm409, %v3933, %v3940
        %v3942 = vrot.slane %v3937, 4
        %v3944 = vshrl.u32 %v3728, 16
        %v3946 = vrot.slane %v3944, 7
        %v3947 = vshll.u32 %v3728, 16
        %v3949 = vor.u32 %v3946, %v3947
        %v3950 = vsel %vm409, %v3942, %v3949
        %v3951 = vrot.slane %v3946, 4
        %v3953 = vshrl.u32 %v3729, 16
        %v3955 = vrot.slane %v3953, 7
        %v3956 = vshll.u32 %v3729, 16
        %v3958 = vor.u32 %v3955, %v3956
        %v3959 = vsel %vm409, %v3951, %v3958
        %v3960 = vrot.slane %v3955, 4
        %v3962 = vshrl.u32 %v3730, 16
        %v3964 = vrot.slane %v3962, 7
        %v3965 = vshll.u32 %v3730, 16
        %v3967 = vor.u32 %v3964, %v3965
        %v3968 = vsel %vm409, %v3960, %v3967
        %v3969 = vrot.slane %v3964, 4
        %v3971 = vshrl.u32 %v3731, 16
        %v3973 = vrot.slane %v3971, 7
        %v3974 = vshll.u32 %v3731, 16
        %v3976 = vor.u32 %v3973, %v3974
        %v3977 = vsel %vm409, %v3969, %v3976
        %v3978 = vrot.slane %v3973, 4
        %v3980 = vshrl.u32 %v3732, 16
        %v3982 = vrot.slane %v3980, 7
        %v3983 = vshll.u32 %v3732, 16
        %v3985 = vor.u32 %v3982, %v3983
        %v3986 = vsel %vm409, %v3978, %v3985
        %v3987 = vrot.slane %v3982, 4
        %v3989 = vshrl.u32 %v3733, 16
        %v3991 = vrot.slane %v3989, 7
        %v3992 = vshll.u32 %v3733, 16
        %v3994 = vor.u32 %v3991, %v3992
        %v3995 = vsel %vm409, %v3987, %v3994
        %v3996 = vrot.slane %v3991, 4
        %v3998 = vshrl.u32 %v3734, 16
        %v4000 = vrot.slane %v3998, 7
        %v4001 = vshll.u32 %v3734, 16
        %v4003 = vor.u32 %v4000, %v4001
        %v4004 = vsel %vm409, %v3996, %v4003
        %v4005 = vrot.slane %v4000, 4
        %v4007 = vshrl.u32 %v3735, 16
        %v4009 = vrot.slane %v4007, 7
        %v4010 = vshll.u32 %v3735, 16
        %v4012 = vor.u32 %v4009, %v4010
        %v4013 = vsel %vm409, %v4005, %v4012
        %v4014 = vrot.slane %v4009, 4
        %v4016 = vshrl.u32 %v3736, 16
        %v4018 = vrot.slane %v4016, 7
        %v4019 = vshll.u32 %v3736, 16
        %v4021 = vor.u32 %v4018, %v4019
        %v4022 = vsel %vm409, %v4014, %v4021
        %v4023 = vrot.slane %v4018, 4
        %v4025 = vshrl.u32 %v3737, 16
        %v4027 = vrot.slane %v4025, 7
        %v4028 = vshll.u32 %v3737, 16
        %v4030 = vor.u32 %v4027, %v4028
        %v4031 = vsel %vm409, %v4023, %v4030
        %v4032 = vrot.slane %v4027, 4
        %v4034 = vshrl.u32 %v3738, 16
        %v4036 = vrot.slane %v4034, 7
        %v4037 = vshll.u32 %v3738, 16
        %v4039 = vor.u32 %v4036, %v4037
        %v4040 = vsel %vm409, %v4032, %v4039
        %v4041 = vrot.slane %v4036, 4
        %v4043 = vshrl.u32 %v3739, 16
        %v4045 = vrot.slane %v4043, 7
        %v4046 = vshll.u32 %v3739, 16
        %v4048 = vor.u32 %v4045, %v4046
        %v4049 = vsel %vm409, %v4041, %v4048
        %v4050 = vrot.slane %v4045, 4
        %v4052 = vshrl.u32 %v3740, 16
        %v4054 = vrot.slane %v4052, 7
        %v4055 = vshll.u32 %v3740, 16
        %v4057 = vor.u32 %v4054, %v4055
        %v4058 = vsel %vm409, %v4050, %v4057
        %v4059 = vrot.slane %v4054, 4
        %v4061 = vshrl.u32 %v3741, 16
        %v4063 = vrot.slane %v4061, 7
        %v4064 = vshll.u32 %v3741, 16
        %v4066 = vor.u32 %v4063, %v4064
        %v4067 = vsel %vm409, %v4059, %v4066
        %4100 = vst [vmem:[#allocation2 + $0x18] sm:$0xf] %v3788
        %4101 = vst [vmem:[#allocation2 + $0x24] sm:$0xf] %v3797
        %4102 = vst [vmem:[#allocation2 + $0x30] sm:$0xf] %v3806
        %4103 = vst [vmem:[#allocation2 + $0x3c] sm:$0xf] %v3815
        %4104 = vst [vmem:[#allocation2 + $0x48] sm:$0xf] %v3824
        %4105 = vst [vmem:[#allocation2 + $0x54] sm:$0xf] %v3833
        %4106 = vst [vmem:[#allocation2 + $0x60] sm:$0xf] %v3842
        %4107 = vst [vmem:[#allocation2 + $0x6c] sm:$0xf] %v3851
        %4108 = vst [vmem:[#allocation2 + $0x78] sm:$0xf] %v3860
        %4109 = vst [vmem:[#allocation2 + $0x84] sm:$0xf] %v3869
        %4110 = vst [vmem:[#allocation2 + $0x90] sm:$0xf] %v3878
        %4111 = vst [vmem:[#allocation2 + $0x9c] sm:$0xf] %v3887
        %4112 = vst [vmem:[#allocation2 + $0xa8] sm:$0xf] %v3896
        %4113 = vst [vmem:[#allocation2 + $0xb4] sm:$0xf] %v3905
        %4114 = vst [vmem:[#allocation2 + $0xc0] sm:$0xf] %v3914
        %4115 = vst [vmem:[#allocation2 + $0xcc] sm:$0xf] %v3923
        %4116 = vst [vmem:[#allocation2 + $0xd8] sm:$0xf] %v3932
        %4117 = vst [vmem:[#allocation2 + $0xe4] sm:$0xf] %v3941
        %4118 = vst [vmem:[#allocation2 + $0xf0] sm:$0xf] %v3950
        %4119 = vst [vmem:[#allocation2 + $0xfc] sm:$0xf] %v3959
        %4120 = vst [vmem:[#allocation2 + $0x108] sm:$0xf] %v3968
        %4121 = vst [vmem:[#allocation2 + $0x114] sm:$0xf] %v3977
        %4122 = vst [vmem:[#allocation2 + $0x120] sm:$0xf] %v3986
        %4123 = vst [vmem:[#allocation2 + $0x12c] sm:$0xf] %v3995
        %4124 = vst [vmem:[#allocation2 + $0x138] sm:$0xf] %v4004
        %4125 = vst [vmem:[#allocation2 + $0x144] sm:$0xf] %v4013
        %4126 = vst [vmem:[#allocation2 + $0x150] sm:$0xf] %v4022
        %4127 = vst [vmem:[#allocation2 + $0x15c] sm:$0xf] %v4031
        %4128 = vst [vmem:[#allocation2 + $0x168] sm:$0xf] %v4040
        %4129 = vst [vmem:[#allocation2 + $0x174] sm:$0xf] %v4049
        %4130 = vst [vmem:[#allocation2 + $0x180] sm:$0xf] %v4058
        %4131 = vst [vmem:[#allocation2 + $0x18c] sm:$0xf] %v4067
        %v4133 = vshrl.u32 %v3743, 16
        %v4135 = vrot.slane %v4133, 4
        %v4136 = vshll.u32 %v3743, 16
        %v4138 = vrot.slane %v4136, 5
        %v4139 = vor.u32 %v4135, %v4138
        %v4140 = vrot.slane %v4139, 4
        %v4142 = vshll.u32 %v3744, 16
        %v4144 = vrot.slane %v4142, 5
        %v4145 = vsel %vm344, %v4140, %v4144
        %v4146 = vshrl.u32 %v3744, 16
        %v4148 = vrot.slane %v4146, 4
        %v4149 = vor.u32 %v4148, %v4144
        %v4150 = vrot.slane %v4149, 4
        %v4152 = vshll.u32 %v3745, 16
        %v4154 = vrot.slane %v4152, 5
        %v4155 = vsel %vm344, %v4150, %v4154
        %v4156 = vshrl.u32 %v3745, 16
        %v4158 = vrot.slane %v4156, 4
        %v4159 = vor.u32 %v4158, %v4154
        %v4160 = vrot.slane %v4159, 4
        %v4162 = vshll.u32 %v3746, 16
        %v4164 = vrot.slane %v4162, 5
        %v4165 = vsel %vm344, %v4160, %v4164
        %v4166 = vshrl.u32 %v3746, 16
        %v4168 = vrot.slane %v4166, 4
        %v4169 = vor.u32 %v4168, %v4164
        %v4170 = vrot.slane %v4169, 4
        %v4172 = vshll.u32 %v3747, 16
        %v4174 = vrot.slane %v4172, 5
        %v4175 = vsel %vm344, %v4170, %v4174
        %v4176 = vshrl.u32 %v3747, 16
        %v4178 = vrot.slane %v4176, 4
        %v4179 = vor.u32 %v4178, %v4174
        %v4180 = vrot.slane %v4179, 4
        %v4182 = vshll.u32 %v3748, 16
        %v4184 = vrot.slane %v4182, 5
        %v4185 = vsel %vm344, %v4180, %v4184
        %v4186 = vshrl.u32 %v3748, 16
        %v4188 = vrot.slane %v4186, 4
        %v4189 = vor.u32 %v4188, %v4184
        %v4190 = vrot.slane %v4189, 4
        %v4192 = vshll.u32 %v3749, 16
        %v4194 = vrot.slane %v4192, 5
        %v4195 = vsel %vm344, %v4190, %v4194
        %v4196 = vshrl.u32 %v3749, 16
        %v4198 = vrot.slane %v4196, 4
        %v4199 = vor.u32 %v4198, %v4194
        %v4200 = vrot.slane %v4199, 4
        %v4202 = vshll.u32 %v3750, 16
        %v4204 = vrot.slane %v4202, 5
        %v4205 = vsel %vm344, %v4200, %v4204
        %v4206 = vshrl.u32 %v3750, 16
        %v4208 = vrot.slane %v4206, 4
        %v4209 = vor.u32 %v4208, %v4204
        %v4210 = vrot.slane %v4209, 4
        %v4212 = vshll.u32 %v3751, 16
        %v4214 = vrot.slane %v4212, 5
        %v4215 = vsel %vm344, %v4210, %v4214
        %v4216 = vshrl.u32 %v3751, 16
        %v4218 = vrot.slane %v4216, 4
        %v4219 = vor.u32 %v4218, %v4214
        %v4220 = vrot.slane %v4219, 4
        %v4222 = vshll.u32 %v3752, 16
        %v4224 = vrot.slane %v4222, 5
        %v4225 = vsel %vm344, %v4220, %v4224
        %v4226 = vshrl.u32 %v3752, 16
        %v4228 = vrot.slane %v4226, 4
        %v4229 = vor.u32 %v4228, %v4224
        %v4230 = vrot.slane %v4229, 4
        %v4232 = vshll.u32 %v3753, 16
        %v4234 = vrot.slane %v4232, 5
        %v4235 = vsel %vm344, %v4230, %v4234
        %v4236 = vshrl.u32 %v3753, 16
        %v4238 = vrot.slane %v4236, 4
        %v4239 = vor.u32 %v4238, %v4234
        %v4240 = vrot.slane %v4239, 4
        %v4242 = vshll.u32 %v3754, 16
        %v4244 = vrot.slane %v4242, 5
        %v4245 = vsel %vm344, %v4240, %v4244
        %v4246 = vshrl.u32 %v3754, 16
        %v4248 = vrot.slane %v4246, 4
        %v4249 = vor.u32 %v4248, %v4244
        %v4250 = vrot.slane %v4249, 4
        %v4252 = vshll.u32 %v3755, 16
        %v4254 = vrot.slane %v4252, 5
        %v4255 = vsel %vm344, %v4250, %v4254
        %v4256 = vshrl.u32 %v3755, 16
        %v4258 = vrot.slane %v4256, 4
        %v4259 = vor.u32 %v4258, %v4254
        %v4260 = vrot.slane %v4259, 4
        %v4262 = vshll.u32 %v3756, 16
        %v4264 = vrot.slane %v4262, 5
        %v4265 = vsel %vm344, %v4260, %v4264
        %v4266 = vshrl.u32 %v3756, 16
        %v4268 = vrot.slane %v4266, 4
        %v4269 = vor.u32 %v4268, %v4264
        %v4270 = vrot.slane %v4269, 4
        %v4272 = vshll.u32 %v3757, 16
        %v4274 = vrot.slane %v4272, 5
        %v4275 = vsel %vm344, %v4270, %v4274
        %v4276 = vshrl.u32 %v3757, 16
        %v4278 = vrot.slane %v4276, 4
        %v4279 = vor.u32 %v4278, %v4274
        %v4280 = vrot.slane %v4279, 4
        %v4282 = vshll.u32 %v3758, 16
        %v4284 = vrot.slane %v4282, 5
        %v4285 = vsel %vm344, %v4280, %v4284
        %v4286 = vshrl.u32 %v3758, 16
        %v4288 = vrot.slane %v4286, 4
        %v4289 = vor.u32 %v4288, %v4284
        %v4290 = vrot.slane %v4289, 4
        %v4292 = vshll.u32 %v3759, 16
        %v4294 = vrot.slane %v4292, 5
        %v4295 = vsel %vm344, %v4290, %v4294
        %v4296 = vshrl.u32 %v3759, 16
        %v4298 = vrot.slane %v4296, 4
        %v4299 = vor.u32 %v4298, %v4294
        %v4300 = vrot.slane %v4299, 4
        %v4302 = vshll.u32 %v3760, 16
        %v4304 = vrot.slane %v4302, 5
        %v4305 = vsel %vm344, %v4300, %v4304
        %v4306 = vshrl.u32 %v3760, 16
        %v4308 = vrot.slane %v4306, 4
        %v4309 = vor.u32 %v4308, %v4304
        %v4310 = vrot.slane %v4309, 4
        %v4312 = vshll.u32 %v3761, 16
        %v4314 = vrot.slane %v4312, 5
        %v4315 = vsel %vm344, %v4310, %v4314
        %v4316 = vshrl.u32 %v3761, 16
        %v4318 = vrot.slane %v4316, 4
        %v4319 = vor.u32 %v4318, %v4314
        %v4320 = vrot.slane %v4319, 4
        %v4322 = vshll.u32 %v3762, 16
        %v4324 = vrot.slane %v4322, 5
        %v4325 = vsel %vm344, %v4320, %v4324
        %v4326 = vshrl.u32 %v3762, 16
        %v4328 = vrot.slane %v4326, 4
        %v4329 = vor.u32 %v4328, %v4324
        %v4330 = vrot.slane %v4329, 4
        %v4332 = vshll.u32 %v3763, 16
        %v4334 = vrot.slane %v4332, 5
        %v4335 = vsel %vm344, %v4330, %v4334
        %v4336 = vshrl.u32 %v3763, 16
        %v4338 = vrot.slane %v4336, 4
        %v4339 = vor.u32 %v4338, %v4334
        %v4340 = vrot.slane %v4339, 4
        %v4342 = vshll.u32 %v3764, 16
        %v4344 = vrot.slane %v4342, 5
        %v4345 = vsel %vm344, %v4340, %v4344
        %v4346 = vshrl.u32 %v3764, 16
        %v4348 = vrot.slane %v4346, 4
        %v4349 = vor.u32 %v4348, %v4344
        %v4350 = vrot.slane %v4349, 4
        %v4352 = vshll.u32 %v3765, 16
        %v4354 = vrot.slane %v4352, 5
        %v4355 = vsel %vm344, %v4350, %v4354
        %v4356 = vshrl.u32 %v3765, 16
        %v4358 = vrot.slane %v4356, 4
        %v4359 = vor.u32 %v4358, %v4354
        %v4360 = vrot.slane %v4359, 4
        %v4362 = vshll.u32 %v3766, 16
        %v4364 = vrot.slane %v4362, 5
        %v4365 = vsel %vm344, %v4360, %v4364
        %v4366 = vshrl.u32 %v3766, 16
        %v4368 = vrot.slane %v4366, 4
        %v4369 = vor.u32 %v4368, %v4364
        %v4370 = vrot.slane %v4369, 4
        %v4372 = vshll.u32 %v3767, 16
        %v4374 = vrot.slane %v4372, 5
        %v4375 = vsel %vm344, %v4370, %v4374
        %v4376 = vshrl.u32 %v3767, 16
        %v4378 = vrot.slane %v4376, 4
        %v4379 = vor.u32 %v4378, %v4374
        %v4380 = vrot.slane %v4379, 4
        %v4382 = vshll.u32 %v3768, 16
        %v4384 = vrot.slane %v4382, 5
        %v4385 = vsel %vm344, %v4380, %v4384
        %v4386 = vshrl.u32 %v3768, 16
        %v4388 = vrot.slane %v4386, 4
        %v4389 = vor.u32 %v4388, %v4384
        %v4390 = vrot.slane %v4389, 4
        %v4392 = vshll.u32 %v3769, 16
        %v4394 = vrot.slane %v4392, 5
        %v4395 = vsel %vm344, %v4390, %v4394
        %v4396 = vshrl.u32 %v3769, 16
        %v4398 = vrot.slane %v4396, 4
        %v4399 = vor.u32 %v4398, %v4394
        %v4400 = vrot.slane %v4399, 4
        %v4402 = vshll.u32 %v3770, 16
        %v4404 = vrot.slane %v4402, 5
        %v4405 = vsel %vm344, %v4400, %v4404
        %v4406 = vshrl.u32 %v3770, 16
        %v4408 = vrot.slane %v4406, 4
        %v4409 = vor.u32 %v4408, %v4404
        %v4410 = vrot.slane %v4409, 4
        %v4412 = vshll.u32 %v3771, 16
        %v4414 = vrot.slane %v4412, 5
        %v4415 = vsel %vm344, %v4410, %v4414
        %v4416 = vshrl.u32 %v3771, 16
        %v4418 = vrot.slane %v4416, 4
        %v4419 = vor.u32 %v4418, %v4414
        %v4420 = vrot.slane %v4419, 4
        %v4422 = vshll.u32 %v3772, 16
        %v4424 = vrot.slane %v4422, 5
        %v4425 = vsel %vm344, %v4420, %v4424
        %v4426 = vshrl.u32 %v3772, 16
        %v4428 = vrot.slane %v4426, 4
        %v4429 = vor.u32 %v4428, %v4424
        %v4430 = vrot.slane %v4429, 4
        %v4432 = vshll.u32 %v3773, 16
        %v4434 = vrot.slane %v4432, 5
        %v4435 = vsel %vm344, %v4430, %v4434
        %v4436 = vshrl.u32 %v3773, 16
        %v4438 = vrot.slane %v4436, 4
        %v4439 = vor.u32 %v4438, %v4434
        %v4440 = vrot.slane %v4439, 4
        %v4442 = vshll.u32 %v3774, 16
        %v4444 = vrot.slane %v4442, 5
        %v4445 = vsel %vm344, %v4440, %v4444
        %v4446 = vshrl.u32 %v3774, 16
        %v4448 = vrot.slane %v4446, 4
        %v4449 = vor.u32 %v4448, %v4444
        %v4450 = vrot.slane %v4449, 4
        %v4452 = vshll.u32 %v3775, 16
        %v4454 = vrot.slane %v4452, 5
        %v4455 = vsel %vm344, %v4450, %v4454
        %4488 = vst [vmem:[#allocation2 + $0x20] sm:$0xf] %v4145
        %4489 = vst [vmem:[#allocation2 + $0x2c] sm:$0xf] %v4155
        %4490 = vst [vmem:[#allocation2 + $0x38] sm:$0xf] %v4165
        %4491 = vst [vmem:[#allocation2 + $0x44] sm:$0xf] %v4175
        %4492 = vst [vmem:[#allocation2 + $0x50] sm:$0xf] %v4185
        %4493 = vst [vmem:[#allocation2 + $0x5c] sm:$0xf] %v4195
        %4494 = vst [vmem:[#allocation2 + $0x68] sm:$0xf] %v4205
        %4495 = vst [vmem:[#allocation2 + $0x74] sm:$0xf] %v4215
        %4496 = vst [vmem:[#allocation2 + $0x80] sm:$0xf] %v4225
        %4497 = vst [vmem:[#allocation2 + $0x8c] sm:$0xf] %v4235
        %4498 = vst [vmem:[#allocation2 + $0x98] sm:$0xf] %v4245
        %4499 = vst [vmem:[#allocation2 + $0xa4] sm:$0xf] %v4255
        %4500 = vst [vmem:[#allocation2 + $0xb0] sm:$0xf] %v4265
        %4501 = vst [vmem:[#allocation2 + $0xbc] sm:$0xf] %v4275
        %4502 = vst [vmem:[#allocation2 + $0xc8] sm:$0xf] %v4285
        %4503 = vst [vmem:[#allocation2 + $0xd4] sm:$0xf] %v4295
        %4504 = vst [vmem:[#allocation2 + $0xe0] sm:$0xf] %v4305
        %4505 = vst [vmem:[#allocation2 + $0xec] sm:$0xf] %v4315
        %4506 = vst [vmem:[#allocation2 + $0xf8] sm:$0xf] %v4325
        %4507 = vst [vmem:[#allocation2 + $0x104] sm:$0xf] %v4335
        %4508 = vst [vmem:[#allocation2 + $0x110] sm:$0xf] %v4345
        %4509 = vst [vmem:[#allocation2 + $0x11c] sm:$0xf] %v4355
        %4510 = vst [vmem:[#allocation2 + $0x128] sm:$0xf] %v4365
        %4511 = vst [vmem:[#allocation2 + $0x134] sm:$0xf] %v4375
        %4512 = vst [vmem:[#allocation2 + $0x140] sm:$0xf] %v4385
        %4513 = vst [vmem:[#allocation2 + $0x14c] sm:$0xf] %v4395
        %4514 = vst [vmem:[#allocation2 + $0x158] sm:$0xf] %v4405
        %4515 = vst [vmem:[#allocation2 + $0x164] sm:$0xf] %v4415
        %4516 = vst [vmem:[#allocation2 + $0x170] sm:$0xf] %v4425
        %4517 = vst [vmem:[#allocation2 + $0x17c] sm:$0xf] %v4435
        %4518 = vst [vmem:[#allocation2 + $0x188] sm:$0xf] %v4445
        %4519 = vst [vmem:[#allocation2 + $0x194] sm:$0xf] %v4455
        %v4520 = vld [vmem:[#allocation2] sm:$0xff]
        %v4521 = vld [vmem:[#allocation2 + $0x8] sm:$0xf]
        %v4522 = vld [vmem:[#allocation2 + $0xc] sm:$0xff]
        %v4523 = vld [vmem:[#allocation2 + $0x14] sm:$0xf]
        %v4524 = vld [vmem:[#allocation2 + $0x18] sm:$0xff]
        %v4525 = vld [vmem:[#allocation2 + $0x20] sm:$0xf]
        %v4526 = vld [vmem:[#allocation2 + $0x24] sm:$0xff]
        %v4527 = vld [vmem:[#allocation2 + $0x2c] sm:$0xf]
        %v4528 = vld [vmem:[#allocation2 + $0x30] sm:$0xff]
        %v4529 = vld [vmem:[#allocation2 + $0x38] sm:$0xf]
        %v4530 = vld [vmem:[#allocation2 + $0x3c] sm:$0xff]
        %v4531 = vld [vmem:[#allocation2 + $0x44] sm:$0xf]
        %v4532 = vld [vmem:[#allocation2 + $0x48] sm:$0xff]
        %v4533 = vld [vmem:[#allocation2 + $0x50] sm:$0xf]
        %v4534 = vld [vmem:[#allocation2 + $0x54] sm:$0xff]
        %v4535 = vld [vmem:[#allocation2 + $0x5c] sm:$0xf]
        %v4536 = vld [vmem:[#allocation2 + $0x60] sm:$0xff]
        %v4537 = vld [vmem:[#allocation2 + $0x68] sm:$0xf]
        %v4538 = vld [vmem:[#allocation2 + $0x6c] sm:$0xff]
        %v4539 = vld [vmem:[#allocation2 + $0x74] sm:$0xf]
        %v4540 = vld [vmem:[#allocation2 + $0x78] sm:$0xff]
        %v4541 = vld [vmem:[#allocation2 + $0x80] sm:$0xf]
        %v4542 = vld [vmem:[#allocation2 + $0x84] sm:$0xff]
        %v4543 = vld [vmem:[#allocation2 + $0x8c] sm:$0xf]
        %v4544 = vld [vmem:[#allocation2 + $0x90] sm:$0xff]
        %v4545 = vld [vmem:[#allocation2 + $0x98] sm:$0xf]
        %v4546 = vld [vmem:[#allocation2 + $0x9c] sm:$0xff]
        %v4547 = vld [vmem:[#allocation2 + $0xa4] sm:$0xf]
        %v4548 = vld [vmem:[#allocation2 + $0xa8] sm:$0xff]
        %v4549 = vld [vmem:[#allocation2 + $0xb0] sm:$0xf]
        %v4550 = vld [vmem:[#allocation2 + $0xb4] sm:$0xff]
        %v4551 = vld [vmem:[#allocation2 + $0xbc] sm:$0xf]
        %v4552 = vld [vmem:[#allocation2 + $0xc0] sm:$0xff]
        %v4553 = vld [vmem:[#allocation2 + $0xc8] sm:$0xf]
        %v4554 = vld [vmem:[#allocation2 + $0xcc] sm:$0xff]
        %v4555 = vld [vmem:[#allocation2 + $0xd4] sm:$0xf]
        %v4556 = vld [vmem:[#allocation2 + $0xd8] sm:$0xff]
        %v4557 = vld [vmem:[#allocation2 + $0xe0] sm:$0xf]
        %v4558 = vld [vmem:[#allocation2 + $0xe4] sm:$0xff]
        %v4559 = vld [vmem:[#allocation2 + $0xec] sm:$0xf]
        %v4560 = vld [vmem:[#allocation2 + $0xf0] sm:$0xff]
        %v4561 = vld [vmem:[#allocation2 + $0xf8] sm:$0xf]
        %v4562 = vld [vmem:[#allocation2 + $0xfc] sm:$0xff]
        %v4563 = vld [vmem:[#allocation2 + $0x104] sm:$0xf]
        %v4564 = vld [vmem:[#allocation2 + $0x108] sm:$0xff]
        %v4565 = vld [vmem:[#allocation2 + $0x110] sm:$0xf]
        %v4566 = vld [vmem:[#allocation2 + $0x114] sm:$0xff]
        %v4567 = vld [vmem:[#allocation2 + $0x11c] sm:$0xf]
        %v4568 = vld [vmem:[#allocation2 + $0x120] sm:$0xff]
        %v4569 = vld [vmem:[#allocation2 + $0x128] sm:$0xf]
        %v4570 = vld [vmem:[#allocation2 + $0x12c] sm:$0xff]
        %v4571 = vld [vmem:[#allocation2 + $0x134] sm:$0xf]
        %v4572 = vld [vmem:[#allocation2 + $0x138] sm:$0xff]
        %v4573 = vld [vmem:[#allocation2 + $0x140] sm:$0xf]
        %v4574 = vld [vmem:[#allocation2 + $0x144] sm:$0xff]
        %v4575 = vld [vmem:[#allocation2 + $0x14c] sm:$0xf]
        %v4576 = vld [vmem:[#allocation2 + $0x150] sm:$0xff]
        %v4577 = vld [vmem:[#allocation2 + $0x158] sm:$0xf]
        %v4578 = vld [vmem:[#allocation2 + $0x15c] sm:$0xff]
        %v4579 = vld [vmem:[#allocation2 + $0x164] sm:$0xf]
        %v4580 = vld [vmem:[#allocation2 + $0x168] sm:$0xff]
        %v4581 = vld [vmem:[#allocation2 + $0x170] sm:$0xf]
        %v4582 = vld [vmem:[#allocation2 + $0x174] sm:$0xff]
        %v4583 = vld [vmem:[#allocation2 + $0x17c] sm:$0xf]
        %v4584 = vld [vmem:[%s2] sm:$0xf]
        %v4585 = vld [vmem:[%s2 + $0x4] sm:$0xf]
        %v4586 = vld [vmem:[%s2 + $0x8] sm:$0xf]
        %v4587 = vld [vmem:[%s2 + $0xc] sm:$0xf]
        %v4588 = vld [vmem:[%s2 + $0x10] sm:$0xf]
        %v4589 = vld [vmem:[%s2 + $0x14] sm:$0xf]
        %v4590 = vld [vmem:[%s2 + $0x18] sm:$0xf]
        %v4591 = vld [vmem:[%s2 + $0x1c] sm:$0xf]
        %v4592 = vld [vmem:[%s2 + $0x20] sm:$0xf]
        %v4593 = vld [vmem:[%s2 + $0x24] sm:$0xf]
        %v4594 = vld [vmem:[%s2 + $0x28] sm:$0xf]
        %v4595 = vld [vmem:[%s2 + $0x2c] sm:$0xf]
        %v4596 = vld [vmem:[%s2 + $0x30] sm:$0xf]
        %v4597 = vld [vmem:[%s2 + $0x34] sm:$0xf]
        %v4598 = vld [vmem:[%s2 + $0x38] sm:$0xf]
        %v4599 = vld [vmem:[%s2 + $0x3c] sm:$0xf]
        %v4600 = vld [vmem:[%s2 + $0x40] sm:$0xf]
        %v4601 = vld [vmem:[%s2 + $0x44] sm:$0xf]
        %v4602 = vld [vmem:[%s2 + $0x48] sm:$0xf]
        %v4603 = vld [vmem:[%s2 + $0x4c] sm:$0xf]
        %v4604 = vld [vmem:[%s2 + $0x50] sm:$0xf]
        %v4605 = vld [vmem:[%s2 + $0x54] sm:$0xf]
        %v4606 = vld [vmem:[%s2 + $0x58] sm:$0xf]
        %v4607 = vld [vmem:[%s2 + $0x5c] sm:$0xf]
        %v4608 = vld [vmem:[%s2 + $0x60] sm:$0xf]
        %v4609 = vld [vmem:[%s2 + $0x64] sm:$0xf]
        %v4610 = vld [vmem:[%s2 + $0x68] sm:$0xf]
        %v4611 = vld [vmem:[%s2 + $0x6c] sm:$0xf]
        %v4612 = vld [vmem:[%s2 + $0x70] sm:$0xf]
        %v4613 = vld [vmem:[%s2 + $0x74] sm:$0xf]
        %v4614 = vld [vmem:[%s2 + $0x78] sm:$0xf]
        %v4615 = vld [vmem:[%s2 + $0x7c] sm:$0xf]
        %v4616 = vld [vmem:[%s2 + $0x80] sm:$0xf]
        %v4617 = vld [vmem:[%s2 + $0x84] sm:$0xf]
        %v4618 = vld [vmem:[%s2 + $0x88] sm:$0xf]
        %v4619 = vld [vmem:[%s2 + $0x8c] sm:$0xf]
        %v4620 = vld [vmem:[%s2 + $0x90] sm:$0xf]
        %v4621 = vld [vmem:[%s2 + $0x94] sm:$0xf]
        %v4622 = vld [vmem:[%s2 + $0x98] sm:$0xf]
        %v4623 = vld [vmem:[%s2 + $0x9c] sm:$0xf]
        %v4624 = vld [vmem:[%s2 + $0xa0] sm:$0xf]
        %v4625 = vld [vmem:[%s2 + $0xa4] sm:$0xf]
        %v4626 = vld [vmem:[%s2 + $0xa8] sm:$0xf]
        %v4627 = vld [vmem:[%s2 + $0xac] sm:$0xf]
        %v4628 = vld [vmem:[%s2 + $0xb0] sm:$0xf]
        %v4629 = vld [vmem:[%s2 + $0xb4] sm:$0xf]
        %v4630 = vld [vmem:[%s2 + $0xb8] sm:$0xf]
        %v4631 = vld [vmem:[%s2 + $0xbc] sm:$0xf]
        %v4632 = vld [vmem:[#allocation2 + $0x180] sm:$0xff]
        %v4633 = vld [vmem:[#allocation2 + $0x188] sm:$0xf]
        %v4634 = vld [vmem:[#allocation2 + $0x18c] sm:$0xff]
        %v4635 = vld [vmem:[#allocation2 + $0x194] sm:$0xf]
        %s4636 = scalar_lea.vmem %s2, 192
        %v4637 = vld [vmem:[%s4636] sm:$0xf]
        %v4638 = vld [vmem:[%s4636 + $0x4] sm:$0xf]
        %v4639 = vld [vmem:[%s4636 + $0x8] sm:$0xf]
        %v4640 = vld [vmem:[%s4636 + $0xc] sm:$0xf]
        %v4641 = vld [vmem:[%s4636 + $0x10] sm:$0xf]
        %v4642 = vld [vmem:[%s4636 + $0x14] sm:$0xf]
        %v4643 = vld [vmem:[%s4636 + $0x18] sm:$0xf]
        %v4644 = vld [vmem:[%s4636 + $0x1c] sm:$0xf]
        %v4645 = vld [vmem:[%s4636 + $0x20] sm:$0xf]
        %v4646 = vld [vmem:[%s4636 + $0x24] sm:$0xf]
        %v4647 = vld [vmem:[%s4636 + $0x28] sm:$0xf]
        %v4648 = vld [vmem:[%s4636 + $0x2c] sm:$0xf]
        %v4649 = vld [vmem:[%s4636 + $0x30] sm:$0xf]
        %v4650 = vld [vmem:[%s4636 + $0x34] sm:$0xf]
        %v4651 = vld [vmem:[%s4636 + $0x38] sm:$0xf]
        %v4652 = vld [vmem:[%s4636 + $0x3c] sm:$0xf]
        %v4653 = vld [vmem:[%s4636 + $0x40] sm:$0xf]
        %v4654 = vld [vmem:[%s4636 + $0x44] sm:$0xf]
        %v4655 = vld [vmem:[%s4636 + $0x48] sm:$0xf]
        %v4656 = vld [vmem:[%s4636 + $0x4c] sm:$0xf]
        %v4657 = vld [vmem:[%s4636 + $0x50] sm:$0xf]
        %v4658 = vld [vmem:[%s4636 + $0x54] sm:$0xf]
        %v4659 = vld [vmem:[%s4636 + $0x58] sm:$0xf]
        %v4660 = vld [vmem:[%s4636 + $0x5c] sm:$0xf]
        %v4661 = vld [vmem:[%s4636 + $0x60] sm:$0xf]
        %v4662 = vld [vmem:[%s4636 + $0x64] sm:$0xf]
        %v4663 = vld [vmem:[%s4636 + $0x68] sm:$0xf]
        %v4664 = vld [vmem:[%s4636 + $0x6c] sm:$0xf]
        %v4665 = vld [vmem:[%s4636 + $0x70] sm:$0xf]
        %v4666 = vld [vmem:[%s4636 + $0x74] sm:$0xf]
        %v4667 = vld [vmem:[%s4636 + $0x78] sm:$0xf]
        %v4668 = vld [vmem:[%s4636 + $0x7c] sm:$0xf]
        %v4669 = vld [vmem:[%s4636 + $0x80] sm:$0xf]
        %v4670 = vld [vmem:[%s4636 + $0x84] sm:$0xf]
        %v4671 = vld [vmem:[%s4636 + $0x88] sm:$0xf]
        %v4672 = vld [vmem:[%s4636 + $0x8c] sm:$0xf]
        %v4673 = vld [vmem:[%s4636 + $0x90] sm:$0xf]
        %v4674 = vld [vmem:[%s4636 + $0x94] sm:$0xf]
        %v4675 = vld [vmem:[%s4636 + $0x98] sm:$0xf]
        %v4676 = vld [vmem:[%s4636 + $0x9c] sm:$0xf]
        %v4677 = vld [vmem:[%s4636 + $0xa0] sm:$0xf]
        %v4678 = vld [vmem:[%s4636 + $0xa4] sm:$0xf]
        %v4679 = vld [vmem:[%s4636 + $0xa8] sm:$0xf]
        %v4680 = vld [vmem:[%s4636 + $0xac] sm:$0xf]
        %v4681 = vld [vmem:[%s4636 + $0xb0] sm:$0xf]
        %v4682 = vld [vmem:[%s4636 + $0xb4] sm:$0xf]
        %v4683 = vld [vmem:[%s4636 + $0xb8] sm:$0xf]
        %v4684 = vld [vmem:[%s4636 + $0xbc] sm:$0xf]
        %v4749 = vunpack.c.l.b16 %v4524
        %v4750 = vunpack.c.h.b16 %v4524
        %v4751 = vunpack.c.l.b16 %v4525
        %v4752 = vunpack.c.l.b16 %v4526
        %v4753 = vunpack.c.h.b16 %v4526
        %v4754 = vunpack.c.l.b16 %v4527
        %v4755 = vunpack.c.l.b16 %v4528
        %v4756 = vunpack.c.h.b16 %v4528
        %v4757 = vunpack.c.l.b16 %v4529
        %v4758 = vunpack.c.l.b16 %v4530
        %v4759 = vunpack.c.h.b16 %v4530
        %v4760 = vunpack.c.l.b16 %v4531
        %v4761 = vunpack.c.l.b16 %v4532
        %v4762 = vunpack.c.h.b16 %v4532
        %v4763 = vunpack.c.l.b16 %v4533
        %v4764 = vunpack.c.l.b16 %v4534
        %v4765 = vunpack.c.h.b16 %v4534
        %v4766 = vunpack.c.l.b16 %v4535
        %v4767 = vunpack.c.l.b16 %v4536
        %v4768 = vunpack.c.h.b16 %v4536
        %v4769 = vunpack.c.l.b16 %v4537
        %v4770 = vunpack.c.l.b16 %v4538
        %v4771 = vunpack.c.h.b16 %v4538
        %v4772 = vunpack.c.l.b16 %v4539
        %v4773 = vunpack.c.l.b16 %v4540
        %v4774 = vunpack.c.h.b16 %v4540
        %v4775 = vunpack.c.l.b16 %v4541
        %v4776 = vunpack.c.l.b16 %v4542
        %v4777 = vunpack.c.h.b16 %v4542
        %v4778 = vunpack.c.l.b16 %v4543
        %v4779 = vunpack.c.l.b16 %v4544
        %v4780 = vunpack.c.h.b16 %v4544
        %v4781 = vunpack.c.l.b16 %v4545
        %v4782 = vunpack.c.l.b16 %v4546
        %v4783 = vunpack.c.h.b16 %v4546
        %v4784 = vunpack.c.l.b16 %v4547
        %v4785 = vunpack.c.l.b16 %v4548
        %v4786 = vunpack.c.h.b16 %v4548
        %v4787 = vunpack.c.l.b16 %v4549
        %v4788 = vunpack.c.l.b16 %v4550
        %v4789 = vunpack.c.h.b16 %v4550
        %v4790 = vunpack.c.l.b16 %v4551
        %v4791 = vunpack.c.l.b16 %v4552
        %v4792 = vunpack.c.h.b16 %v4552
        %v4793 = vunpack.c.l.b16 %v4553
        %v4794 = vunpack.c.l.b16 %v4554
        %v4795 = vunpack.c.h.b16 %v4554
        %v4796 = vunpack.c.l.b16 %v4555
        %v4797 = vunpack.c.l.b16 %v4556
        %v4798 = vunpack.c.h.b16 %v4556
        %v4799 = vunpack.c.l.b16 %v4557
        %v4800 = vunpack.c.l.b16 %v4558
        %v4801 = vunpack.c.h.b16 %v4558
        %v4802 = vunpack.c.l.b16 %v4559
        %v4803 = vunpack.c.l.b16 %v4560
        %v4804 = vunpack.c.h.b16 %v4560
        %v4805 = vunpack.c.l.b16 %v4561
        %v4806 = vunpack.c.l.b16 %v4562
        %v4807 = vunpack.c.h.b16 %v4562
        %v4808 = vunpack.c.l.b16 %v4563
        %v4809 = vunpack.c.l.b16 %v4564
        %v4810 = vunpack.c.h.b16 %v4564
        %v4811 = vunpack.c.l.b16 %v4565
        %v4812 = vunpack.c.l.b16 %v4566
        %v4813 = vunpack.c.h.b16 %v4566
        %v4814 = vunpack.c.l.b16 %v4567
        %v4815 = vunpack.c.l.b16 %v4568
        %v4816 = vunpack.c.h.b16 %v4568
        %v4817 = vunpack.c.l.b16 %v4569
        %v4818 = vunpack.c.l.b16 %v4570
        %v4819 = vunpack.c.h.b16 %v4570
        %v4820 = vunpack.c.l.b16 %v4571
        %v4821 = vunpack.c.l.b16 %v4572
        %v4822 = vunpack.c.h.b16 %v4572
        %v4823 = vunpack.c.l.b16 %v4573
        %v4824 = vunpack.c.l.b16 %v4574
        %v4825 = vunpack.c.h.b16 %v4574
        %v4826 = vunpack.c.l.b16 %v4575
        %v4827 = vunpack.c.l.b16 %v4576
        %v4828 = vunpack.c.h.b16 %v4576
        %v4829 = vunpack.c.l.b16 %v4577
        %v4830 = vunpack.c.l.b16 %v4578
        %v4831 = vunpack.c.h.b16 %v4578
        %v4832 = vunpack.c.l.b16 %v4579
        %v4833 = vunpack.c.l.b16 %v4580
        %v4834 = vunpack.c.h.b16 %v4580
        %v4835 = vunpack.c.l.b16 %v4581
        %v4836 = vunpack.c.l.b16 %v4582
        %v4837 = vunpack.c.h.b16 %v4582
        %v4838 = vunpack.c.l.b16 %v4583
        %v4839 = vunpack.c.l.b16 %v4632
        %v4840 = vunpack.c.h.b16 %v4632
        %v4841 = vunpack.c.l.b16 %v4633
        %v4842 = vunpack.c.l.b16 %v4634
        %v4843 = vunpack.c.h.b16 %v4634
        %v4844 = vunpack.c.l.b16 %v4635
        %v4845 = vpack.c.b16 %v4752, %v4749
        %v4846 = vpack.c.b16 %v4753, %v4750
        %v4847 = vpack.c.b16 %v4754, %v4751
        %v4848 = vpack.c.b16 %v4758, %v4755
        %v4849 = vpack.c.b16 %v4759, %v4756
        %v4850 = vpack.c.b16 %v4760, %v4757
        %v4851 = vpack.c.b16 %v4764, %v4761
        %v4852 = vpack.c.b16 %v4765, %v4762
        %v4853 = vpack.c.b16 %v4766, %v4763
        %v4854 = vpack.c.b16 %v4770, %v4767
        %v4855 = vpack.c.b16 %v4771, %v4768
        %v4856 = vpack.c.b16 %v4772, %v4769
        %v4857 = vpack.c.b16 %v4776, %v4773
        %v4858 = vpack.c.b16 %v4777, %v4774
        %v4859 = vpack.c.b16 %v4778, %v4775
        %v4860 = vpack.c.b16 %v4782, %v4779
        %v4861 = vpack.c.b16 %v4783, %v4780
        %v4862 = vpack.c.b16 %v4784, %v4781
        %v4863 = vpack.c.b16 %v4788, %v4785
        %v4864 = vpack.c.b16 %v4789, %v4786
        %v4865 = vpack.c.b16 %v4790, %v4787
        %v4866 = vpack.c.b16 %v4794, %v4791
        %v4867 = vpack.c.b16 %v4795, %v4792
        %v4868 = vpack.c.b16 %v4796, %v4793
        %v4869 = vpack.c.b16 %v4800, %v4797
        %v4870 = vpack.c.b16 %v4801, %v4798
        %v4871 = vpack.c.b16 %v4802, %v4799
        %v4872 = vpack.c.b16 %v4806, %v4803
        %v4873 = vpack.c.b16 %v4807, %v4804
        %v4874 = vpack.c.b16 %v4808, %v4805
        %v4875 = vpack.c.b16 %v4812, %v4809
        %v4876 = vpack.c.b16 %v4813, %v4810
        %v4877 = vpack.c.b16 %v4814, %v4811
        %v4878 = vpack.c.b16 %v4818, %v4815
        %v4879 = vpack.c.b16 %v4819, %v4816
        %v4880 = vpack.c.b16 %v4820, %v4817
        %v4881 = vpack.c.b16 %v4824, %v4821
        %v4882 = vpack.c.b16 %v4825, %v4822
        %v4883 = vpack.c.b16 %v4826, %v4823
        %v4884 = vpack.c.b16 %v4830, %v4827
        %v4885 = vpack.c.b16 %v4831, %v4828
        %v4886 = vpack.c.b16 %v4832, %v4829
        %v4887 = vpack.c.b16 %v4836, %v4833
        %v4888 = vpack.c.b16 %v4837, %v4834
        %v4889 = vpack.c.b16 %v4838, %v4835
        %v4890 = vpack.c.b16 %v4842, %v4839
        %v4891 = vpack.c.b16 %v4843, %v4840
        %v4892 = vpack.c.b16 %v4844, %v4841
        %v4989 = vunpack.c.l.b16 %v4637
        %v4990 = vunpack.c.l.b16 %v4638
        %v4991 = vunpack.c.l.b16 %v4639
        %v4992 = vunpack.c.l.b16 %v4640
        %v4993 = vunpack.c.l.b16 %v4641
        %v4994 = vunpack.c.l.b16 %v4642
        %v4995 = vunpack.c.l.b16 %v4643
        %v4996 = vunpack.c.l.b16 %v4644
        %v4997 = vunpack.c.l.b16 %v4645
        %v4998 = vunpack.c.l.b16 %v4646
        %v4999 = vunpack.c.l.b16 %v4647
        %v5000 = vunpack.c.l.b16 %v4648
        %v5001 = vunpack.c.l.b16 %v4649
        %v5002 = vunpack.c.l.b16 %v4650
        %v5003 = vunpack.c.l.b16 %v4651
        %v5004 = vunpack.c.l.b16 %v4652
        %v5005 = vunpack.c.l.b16 %v4653
        %v5006 = vunpack.c.l.b16 %v4654
        %v5007 = vunpack.c.l.b16 %v4655
        %v5008 = vunpack.c.l.b16 %v4656
        %v5009 = vunpack.c.l.b16 %v4657
        %v5010 = vunpack.c.l.b16 %v4658
        %v5011 = vunpack.c.l.b16 %v4659
        %v5012 = vunpack.c.l.b16 %v4660
        %v5013 = vunpack.c.l.b16 %v4661
        %v5014 = vunpack.c.l.b16 %v4662
        %v5015 = vunpack.c.l.b16 %v4663
        %v5016 = vunpack.c.l.b16 %v4664
        %v5017 = vunpack.c.l.b16 %v4665
        %v5018 = vunpack.c.l.b16 %v4666
        %v5019 = vunpack.c.l.b16 %v4667
        %v5020 = vunpack.c.l.b16 %v4668
        %v5021 = vunpack.c.l.b16 %v4669
        %v5022 = vunpack.c.l.b16 %v4670
        %v5023 = vunpack.c.l.b16 %v4671
        %v5024 = vunpack.c.l.b16 %v4672
        %v5025 = vunpack.c.l.b16 %v4673
        %v5026 = vunpack.c.l.b16 %v4674
        %v5027 = vunpack.c.l.b16 %v4675
        %v5028 = vunpack.c.l.b16 %v4676
        %v5029 = vunpack.c.l.b16 %v4677
        %v5030 = vunpack.c.l.b16 %v4678
        %v5031 = vunpack.c.l.b16 %v4679
        %v5032 = vunpack.c.l.b16 %v4680
        %v5033 = vunpack.c.l.b16 %v4681
        %v5034 = vunpack.c.l.b16 %v4682
        %v5035 = vunpack.c.l.b16 %v4683
        %v5036 = vunpack.c.l.b16 %v4684
        %v5037 = vpack.c.b16 %v4990, %v4989
        %v5038 = vpack.c.b16 %v4992, %v4991
        %v5039 = vpack.c.b16 %v4994, %v4993
        %v5040 = vpack.c.b16 %v4996, %v4995
        %v5041 = vpack.c.b16 %v4998, %v4997
        %v5042 = vpack.c.b16 %v5000, %v4999
        %v5043 = vpack.c.b16 %v5002, %v5001
        %v5044 = vpack.c.b16 %v5004, %v5003
        %v5045 = vpack.c.b16 %v5006, %v5005
        %v5046 = vpack.c.b16 %v5008, %v5007
        %v5047 = vpack.c.b16 %v5010, %v5009
        %v5048 = vpack.c.b16 %v5012, %v5011
        %v5049 = vpack.c.b16 %v5014, %v5013
        %v5050 = vpack.c.b16 %v5016, %v5015
        %v5051 = vpack.c.b16 %v5018, %v5017
        %v5052 = vpack.c.b16 %v5020, %v5019
        %v5053 = vpack.c.b16 %v5022, %v5021
        %v5054 = vpack.c.b16 %v5024, %v5023
        %v5055 = vpack.c.b16 %v5026, %v5025
        %v5056 = vpack.c.b16 %v5028, %v5027
        %v5057 = vpack.c.b16 %v5030, %v5029
        %v5058 = vpack.c.b16 %v5032, %v5031
        %v5059 = vpack.c.b16 %v5034, %v5033
        %v5060 = vpack.c.b16 %v5036, %v5035
        %5085 = vmatprep.subr.bf16.mxu0 0
        %5086 = vmatpush1.bf16.msra.mxu0 %v5044
        %5087 = vmatprep.subr.bf16.mxu0 0
        %5088 = vmatpush1.bf16.msra.mxu0 %v5043
        %5089 = vmatprep.subr.bf16.mxu0 0
        %5090 = vmatpush1.bf16.msra.mxu0 %v5042
        %5091 = vmatprep.subr.bf16.mxu0 0
        %5092 = vmatpush1.bf16.msra.mxu0 %v5041
        %5093 = vmatprep.subr.bf16.mxu0 0
        %5094 = vmatpush1.bf16.msra.mxu0 %v5040
        %5095 = vmatprep.subr.bf16.mxu0 0
        %5096 = vmatpush1.bf16.msra.mxu0 %v5039
        %5097 = vmatprep.subr.bf16.mxu0 0
        %5098 = vmatpush1.bf16.msra.mxu0 %v5038
        %5099 = vmatprep.subr.bf16.mxu0 0
        %5100 = vmatpush1.bf16.msra.mxu0 %v5037
        %5101 = vmatprep.subr.bf16.mxu0 0
        %5102 = vmatpush2.bf16.msra.mxu0 %v5052
        %5103 = vmatprep.subr.bf16.mxu0 0
        %5104 = vmatpush2.bf16.msra.mxu0 %v5051
        %5105 = vmatprep.subr.bf16.mxu0 0
        %5106 = vmatpush2.bf16.msra.mxu0 %v5050
        %5107 = vmatprep.subr.bf16.mxu0 0
        %5108 = vmatpush2.bf16.msra.mxu0 %v5049
        %5109 = vmatprep.subr.bf16.mxu0 0
        %5110 = vmatpush2.bf16.msra.mxu0 %v5048
        %5111 = vmatprep.subr.bf16.mxu0 0
        %5112 = vmatpush2.bf16.msra.mxu0 %v5047
        %5113 = vmatprep.subr.bf16.mxu0 0
        %5114 = vmatpush2.bf16.msra.mxu0 %v5046
        %5115 = vmatprep.subr.bf16.mxu0 0
        %5116 = vmatpush2.bf16.msra.mxu0 %v5045
        %5117 = vmatprep.mubr.bf16.mxu0 %v4846
        %5118 = vmatmul.mubr.bf16.gmra.mxu0 %v4845
        %v5119 = vpop.f32.mrf.mxu0
        %v5120 = vadd.f32 0.0, %v5119
        %v5121 = vpop.f32.mrf.mxu0
        %v5122 = vpop.f32.mrf.mxu0
        %v5123 = vadd.f32 0.0, %v5122
        %v5124 = vpop.f32.mrf.mxu0
        %5125 = vmatprep.mubr.bf16.mxu0 %v4849
        %5126 = vmatmul.mubr.bf16.gmra.mxu0 %v4848
        %v5127 = vpop.f32.mrf.mxu0
        %v5128 = vadd.f32 0.0, %v5127
        %v5129 = vpop.f32.mrf.mxu0
        %v5130 = vpop.f32.mrf.mxu0
        %v5131 = vadd.f32 0.0, %v5130
        %v5132 = vpop.f32.mrf.mxu0
        %5133 = vmatprep.mubr.bf16.mxu0 %v4852
        %5134 = vmatmul.mubr.bf16.gmra.mxu0 %v4851
        %v5135 = vpop.f32.mrf.mxu0
        %v5136 = vadd.f32 0.0, %v5135
        %v5137 = vpop.f32.mrf.mxu0
        %v5138 = vpop.f32.mrf.mxu0
        %v5139 = vadd.f32 0.0, %v5138
        %v5140 = vpop.f32.mrf.mxu0
        %5141 = vmatprep.mubr.bf16.mxu0 %v4855
        %5142 = vmatmul.mubr.bf16.gmra.mxu0 %v4854
        %v5143 = vpop.f32.mrf.mxu0
        %v5144 = vadd.f32 0.0, %v5143
        %v5145 = vpop.f32.mrf.mxu0
        %v5146 = vpop.f32.mrf.mxu0
        %v5147 = vadd.f32 0.0, %v5146
        %v5148 = vpop.f32.mrf.mxu0
        %5149 = vmatprep.mubr.bf16.mxu0 %v4858
        %5150 = vmatmul.mubr.bf16.gmra.mxu0 %v4857
        %v5151 = vpop.f32.mrf.mxu0
        %v5152 = vadd.f32 0.0, %v5151
        %v5153 = vpop.f32.mrf.mxu0
        %v5154 = vpop.f32.mrf.mxu0
        %v5155 = vadd.f32 0.0, %v5154
        %v5156 = vpop.f32.mrf.mxu0
        %5157 = vmatprep.mubr.bf16.mxu0 %v4861
        %5158 = vmatmul.mubr.bf16.gmra.mxu0 %v4860
        %v5159 = vpop.f32.mrf.mxu0
        %v5160 = vadd.f32 0.0, %v5159
        %v5161 = vpop.f32.mrf.mxu0
        %v5162 = vpop.f32.mrf.mxu0
        %v5163 = vadd.f32 0.0, %v5162
        %v5164 = vpop.f32.mrf.mxu0
        %5165 = vmatprep.mubr.bf16.mxu0 %v4864
        %5166 = vmatmul.mubr.bf16.gmra.mxu0 %v4863
        %v5167 = vpop.f32.mrf.mxu0
        %v5168 = vadd.f32 0.0, %v5167
        %v5169 = vpop.f32.mrf.mxu0
        %v5170 = vpop.f32.mrf.mxu0
        %v5171 = vadd.f32 0.0, %v5170
        %v5172 = vpop.f32.mrf.mxu0
        %5173 = vmatprep.mubr.bf16.mxu0 %v4867
        %5174 = vmatmul.mubr.bf16.gmra.mxu0 %v4866
        %v5175 = vpop.f32.mrf.mxu0
        %v5176 = vadd.f32 0.0, %v5175
        %v5177 = vpop.f32.mrf.mxu0
        %v5178 = vpop.f32.mrf.mxu0
        %v5179 = vadd.f32 0.0, %v5178
        %v5180 = vpop.f32.mrf.mxu0
        %5181 = vmatprep.mubr.bf16.mxu0 %v4870
        %5182 = vmatmul.mubr.bf16.gmra.mxu0 %v4869
        %v5183 = vpop.f32.mrf.mxu0
        %v5184 = vadd.f32 0.0, %v5183
        %v5185 = vpop.f32.mrf.mxu0
        %v5186 = vpop.f32.mrf.mxu0
        %v5187 = vadd.f32 0.0, %v5186
        %v5188 = vpop.f32.mrf.mxu0
        %5189 = vmatprep.mubr.bf16.mxu0 %v4873
        %5190 = vmatmul.mubr.bf16.gmra.mxu0 %v4872
        %v5191 = vpop.f32.mrf.mxu0
        %v5192 = vadd.f32 0.0, %v5191
        %v5193 = vpop.f32.mrf.mxu0
        %v5194 = vpop.f32.mrf.mxu0
        %v5195 = vadd.f32 0.0, %v5194
        %v5196 = vpop.f32.mrf.mxu0
        %5197 = vmatprep.mubr.bf16.mxu0 %v4876
        %5198 = vmatmul.mubr.bf16.gmra.mxu0 %v4875
        %v5199 = vpop.f32.mrf.mxu0
        %v5200 = vadd.f32 0.0, %v5199
        %v5201 = vpop.f32.mrf.mxu0
        %v5202 = vpop.f32.mrf.mxu0
        %v5203 = vadd.f32 0.0, %v5202
        %v5204 = vpop.f32.mrf.mxu0
        %5205 = vmatprep.mubr.bf16.mxu0 %v4879
        %5206 = vmatmul.mubr.bf16.gmra.mxu0 %v4878
        %v5207 = vpop.f32.mrf.mxu0
        %v5208 = vadd.f32 0.0, %v5207
        %v5209 = vpop.f32.mrf.mxu0
        %v5210 = vpop.f32.mrf.mxu0
        %v5211 = vadd.f32 0.0, %v5210
        %v5212 = vpop.f32.mrf.mxu0
        %5213 = vmatprep.mubr.bf16.mxu0 %v4882
        %5214 = vmatmul.mubr.bf16.gmra.mxu0 %v4881
        %v5215 = vpop.f32.mrf.mxu0
        %v5216 = vadd.f32 0.0, %v5215
        %v5217 = vpop.f32.mrf.mxu0
        %v5218 = vpop.f32.mrf.mxu0
        %v5219 = vadd.f32 0.0, %v5218
        %v5220 = vpop.f32.mrf.mxu0
        %5221 = vmatprep.mubr.bf16.mxu0 %v4885
        %5222 = vmatmul.mubr.bf16.gmra.mxu0 %v4884
        %v5223 = vpop.f32.mrf.mxu0
        %v5224 = vadd.f32 0.0, %v5223
        %v5225 = vpop.f32.mrf.mxu0
        %v5226 = vpop.f32.mrf.mxu0
        %v5227 = vadd.f32 0.0, %v5226
        %v5228 = vpop.f32.mrf.mxu0
        %5229 = vmatprep.mubr.bf16.mxu0 %v4888
        %5230 = vmatmul.mubr.bf16.gmra.mxu0 %v4887
        %v5231 = vpop.f32.mrf.mxu0
        %v5232 = vadd.f32 0.0, %v5231
        %v5233 = vpop.f32.mrf.mxu0
        %v5234 = vpop.f32.mrf.mxu0
        %v5235 = vadd.f32 0.0, %v5234
        %v5236 = vpop.f32.mrf.mxu0
        %5237 = vmatprep.mubr.bf16.mxu0 %v4891
        %5238 = vmatmul.mubr.bf16.gmra.mxu0 %v4890
        %v5239 = vpop.f32.mrf.mxu0
        %v5240 = vadd.f32 0.0, %v5239
        %v5241 = vpop.f32.mrf.mxu0
        %v5242 = vpop.f32.mrf.mxu0
        %v5243 = vadd.f32 0.0, %v5242
        %v5244 = vpop.f32.mrf.mxu0
        %5245 = vdwg.mxu0
        %5246 = vmatprep.subr.bf16.mxu0 0
        %5247 = vmatpush1.bf16.msra.mxu0 %v5060
        %5248 = vmatprep.subr.bf16.mxu0 0
        %5249 = vmatpush1.bf16.msra.mxu0 %v5059
        %5250 = vmatprep.subr.bf16.mxu0 0
        %5251 = vmatpush1.bf16.msra.mxu0 %v5058
        %5252 = vmatprep.subr.bf16.mxu0 0
        %5253 = vmatpush1.bf16.msra.mxu0 %v5057
        %5254 = vmatprep.subr.bf16.mxu0 0
        %5255 = vmatpush1.bf16.msra.mxu0 %v5056
        %5256 = vmatprep.subr.bf16.mxu0 0
        %5257 = vmatpush1.bf16.msra.mxu0 %v5055
        %5258 = vmatprep.subr.bf16.mxu0 0
        %5259 = vmatpush1.bf16.msra.mxu0 %v5054
        %5260 = vmatprep.subr.bf16.mxu0 0
        %5261 = vmatpush1.bf16.msra.mxu0 %v5053
        %5262 = vmatprep.subr.bf16.mxu0 0
        %5263 = vmatpush2.bf16.msra.mxu0 0
        %5264 = vmatprep.subr.bf16.mxu0 0
        %5265 = vmatpush2.bf16.msra.mxu0 0
        %5266 = vmatprep.subr.bf16.mxu0 0
        %5267 = vmatpush2.bf16.msra.mxu0 0
        %5268 = vmatprep.subr.bf16.mxu0 0
        %5269 = vmatpush2.bf16.msra.mxu0 0
        %5270 = vmatprep.subr.bf16.mxu0 0
        %5271 = vmatpush2.bf16.msra.mxu0 0
        %5272 = vmatprep.subr.bf16.mxu0 0
        %5273 = vmatpush2.bf16.msra.mxu0 0
        %5274 = vmatprep.subr.bf16.mxu0 0
        %5275 = vmatpush2.bf16.msra.mxu0 0
        %5276 = vmatprep.subr.bf16.mxu0 0
        %5277 = vmatpush2.bf16.msra.mxu0 0
        %5278 = vmatprep.mubr.bf16.mxu0 0
        %5279 = vmatmul.mubr.bf16.gmra.mxu0 %v4847
        %v5280 = vpop.f32.mrf.mxu0
        %v5281 = vadd.f32 %v5120, %v5280
        %v5282 = vpop.f32.mrf.mxu0
        %v5283 = vpop.f32.mrf.mxu0
        %v5284 = vadd.f32 %v5123, %v5283
        %v5285 = vpop.f32.mrf.mxu0
        %5286 = vmatprep.mubr.bf16.mxu0 0
        %5287 = vmatmul.mubr.bf16.gmra.mxu0 %v4850
        %v5288 = vpop.f32.mrf.mxu0
        %v5289 = vadd.f32 %v5128, %v5288
        %v5290 = vpop.f32.mrf.mxu0
        %v5291 = vpop.f32.mrf.mxu0
        %v5292 = vadd.f32 %v5131, %v5291
        %v5293 = vpop.f32.mrf.mxu0
        %5294 = vmatprep.mubr.bf16.mxu0 0
        %5295 = vmatmul.mubr.bf16.gmra.mxu0 %v4853
        %v5296 = vpop.f32.mrf.mxu0
        %v5297 = vadd.f32 %v5136, %v5296
        %v5298 = vpop.f32.mrf.mxu0
        %v5299 = vpop.f32.mrf.mxu0
        %v5300 = vadd.f32 %v5139, %v5299
        %v5301 = vpop.f32.mrf.mxu0
        %5302 = vmatprep.mubr.bf16.mxu0 0
        %5303 = vmatmul.mubr.bf16.gmra.mxu0 %v4856
        %v5304 = vpop.f32.mrf.mxu0
        %v5305 = vadd.f32 %v5144, %v5304
        %v5306 = vpop.f32.mrf.mxu0
        %v5307 = vpop.f32.mrf.mxu0
        %v5308 = vadd.f32 %v5147, %v5307
        %v5309 = vpop.f32.mrf.mxu0
        %5310 = vmatprep.mubr.bf16.mxu0 0
        %5311 = vmatmul.mubr.bf16.gmra.mxu0 %v4859
        %v5312 = vpop.f32.mrf.mxu0
        %v5313 = vadd.f32 %v5152, %v5312
        %v5314 = vpop.f32.mrf.mxu0
        %v5315 = vpop.f32.mrf.mxu0
        %v5316 = vadd.f32 %v5155, %v5315
        %v5317 = vpop.f32.mrf.mxu0
        %5318 = vmatprep.mubr.bf16.mxu0 0
        %5319 = vmatmul.mubr.bf16.gmra.mxu0 %v4862
        %v5320 = vpop.f32.mrf.mxu0
        %v5321 = vadd.f32 %v5160, %v5320
        %v5322 = vpop.f32.mrf.mxu0
        %v5323 = vpop.f32.mrf.mxu0
        %v5324 = vadd.f32 %v5163, %v5323
        %v5325 = vpop.f32.mrf.mxu0
        %5326 = vmatprep.mubr.bf16.mxu0 0
        %5327 = vmatmul.mubr.bf16.gmra.mxu0 %v4865
        %v5328 = vpop.f32.mrf.mxu0
        %v5329 = vadd.f32 %v5168, %v5328
        %v5330 = vpop.f32.mrf.mxu0
        %v5331 = vpop.f32.mrf.mxu0
        %v5332 = vadd.f32 %v5171, %v5331
        %v5333 = vpop.f32.mrf.mxu0
        %5334 = vmatprep.mubr.bf16.mxu0 0
        %5335 = vmatmul.mubr.bf16.gmra.mxu0 %v4868
        %v5336 = vpop.f32.mrf.mxu0
        %v5337 = vadd.f32 %v5176, %v5336
        %v5338 = vpop.f32.mrf.mxu0
        %v5339 = vpop.f32.mrf.mxu0
        %v5340 = vadd.f32 %v5179, %v5339
        %v5341 = vpop.f32.mrf.mxu0
        %5342 = vmatprep.mubr.bf16.mxu0 0
        %5343 = vmatmul.mubr.bf16.gmra.mxu0 %v4871
        %v5344 = vpop.f32.mrf.mxu0
        %v5345 = vadd.f32 %v5184, %v5344
        %v5346 = vpop.f32.mrf.mxu0
        %v5347 = vpop.f32.mrf.mxu0
        %v5348 = vadd.f32 %v5187, %v5347
        %v5349 = vpop.f32.mrf.mxu0
        %5350 = vmatprep.mubr.bf16.mxu0 0
        %5351 = vmatmul.mubr.bf16.gmra.mxu0 %v4874
        %v5352 = vpop.f32.mrf.mxu0
        %v5353 = vadd.f32 %v5192, %v5352
        %v5354 = vpop.f32.mrf.mxu0
        %v5355 = vpop.f32.mrf.mxu0
        %v5356 = vadd.f32 %v5195, %v5355
        %v5357 = vpop.f32.mrf.mxu0
        %5358 = vmatprep.mubr.bf16.mxu0 0
        %5359 = vmatmul.mubr.bf16.gmra.mxu0 %v4877
        %v5360 = vpop.f32.mrf.mxu0
        %v5361 = vadd.f32 %v5200, %v5360
        %v5362 = vpop.f32.mrf.mxu0
        %v5363 = vpop.f32.mrf.mxu0
        %v5364 = vadd.f32 %v5203, %v5363
        %v5365 = vpop.f32.mrf.mxu0
        %5366 = vmatprep.mubr.bf16.mxu0 0
        %5367 = vmatmul.mubr.bf16.gmra.mxu0 %v4880
        %v5368 = vpop.f32.mrf.mxu0
        %v5369 = vadd.f32 %v5208, %v5368
        %v5370 = vpop.f32.mrf.mxu0
        %v5371 = vpop.f32.mrf.mxu0
        %v5372 = vadd.f32 %v5211, %v5371
        %v5373 = vpop.f32.mrf.mxu0
        %5374 = vmatprep.mubr.bf16.mxu0 0
        %5375 = vmatmul.mubr.bf16.gmra.mxu0 %v4883
        %v5376 = vpop.f32.mrf.mxu0
        %v5377 = vadd.f32 %v5216, %v5376
        %v5378 = vpop.f32.mrf.mxu0
        %v5379 = vpop.f32.mrf.mxu0
        %v5380 = vadd.f32 %v5219, %v5379
        %v5381 = vpop.f32.mrf.mxu0
        %5382 = vmatprep.mubr.bf16.mxu0 0
        %5383 = vmatmul.mubr.bf16.gmra.mxu0 %v4886
        %v5384 = vpop.f32.mrf.mxu0
        %v5385 = vadd.f32 %v5224, %v5384
        %v5386 = vpop.f32.mrf.mxu0
        %v5387 = vpop.f32.mrf.mxu0
        %v5388 = vadd.f32 %v5227, %v5387
        %v5389 = vpop.f32.mrf.mxu0
        %5390 = vmatprep.mubr.bf16.mxu0 0
        %5391 = vmatmul.mubr.bf16.gmra.mxu0 %v4889
        %v5392 = vpop.f32.mrf.mxu0
        %v5393 = vadd.f32 %v5232, %v5392
        %v5394 = vpop.f32.mrf.mxu0
        %v5395 = vpop.f32.mrf.mxu0
        %v5396 = vadd.f32 %v5235, %v5395
        %v5397 = vpop.f32.mrf.mxu0
        %5398 = vmatprep.mubr.bf16.mxu0 0
        %5399 = vmatmul.mubr.bf16.gmra.mxu0 %v4892
        %v5400 = vpop.f32.mrf.mxu0
        %v5401 = vadd.f32 %v5240, %v5400
        %v5402 = vpop.f32.mrf.mxu0
        %v5403 = vpop.f32.mrf.mxu0
        %v5404 = vadd.f32 %v5243, %v5403
        %v5405 = vpop.f32.mrf.mxu0
        %5406 = vdwg.mxu0
        %v5411 = vunpack.c.l.b16 %v4520
        %v5412 = vunpack.c.h.b16 %v4520
        %v5413 = vunpack.c.l.b16 %v4521
        %v5414 = vunpack.c.l.b16 %v4522
        %v5415 = vunpack.c.h.b16 %v4522
        %v5416 = vunpack.c.l.b16 %v4523
        %v5417 = vpack.c.b16 %v5414, %v5411
        %v5418 = vpack.c.b16 %v5415, %v5412
        %v5419 = vpack.c.b16 %v5416, %v5413
        %v5471 = vunpack.c.l.b16 %v4584
        %v5472 = vunpack.c.l.b16 %v4585
        %v5473 = vunpack.c.l.b16 %v4586
        %v5474 = vunpack.c.l.b16 %v4587
        %v5475 = vunpack.c.l.b16 %v4588
        %v5476 = vunpack.c.l.b16 %v4589
        %v5477 = vunpack.c.l.b16 %v4590
        %v5478 = vunpack.c.l.b16 %v4591
        %v5479 = vunpack.c.l.b16 %v4592
        %v5480 = vunpack.c.l.b16 %v4593
        %v5481 = vunpack.c.l.b16 %v4594
        %v5482 = vunpack.c.l.b16 %v4595
        %v5483 = vunpack.c.l.b16 %v4596
        %v5484 = vunpack.c.l.b16 %v4597
        %v5485 = vunpack.c.l.b16 %v4598
        %v5486 = vunpack.c.l.b16 %v4599
        %v5487 = vunpack.c.l.b16 %v4600
        %v5488 = vunpack.c.l.b16 %v4601
        %v5489 = vunpack.c.l.b16 %v4602
        %v5490 = vunpack.c.l.b16 %v4603
        %v5491 = vunpack.c.l.b16 %v4604
        %v5492 = vunpack.c.l.b16 %v4605
        %v5493 = vunpack.c.l.b16 %v4606
        %v5494 = vunpack.c.l.b16 %v4607
        %v5495 = vunpack.c.l.b16 %v4608
        %v5496 = vunpack.c.l.b16 %v4609
        %v5497 = vunpack.c.l.b16 %v4610
        %v5498 = vunpack.c.l.b16 %v4611
        %v5499 = vunpack.c.l.b16 %v4612
        %v5500 = vunpack.c.l.b16 %v4613
        %v5501 = vunpack.c.l.b16 %v4614
        %v5502 = vunpack.c.l.b16 %v4615
        %v5503 = vunpack.c.l.b16 %v4616
        %v5504 = vunpack.c.l.b16 %v4617
        %v5505 = vunpack.c.l.b16 %v4618
        %v5506 = vunpack.c.l.b16 %v4619
        %v5507 = vunpack.c.l.b16 %v4620
        %v5508 = vunpack.c.l.b16 %v4621
        %v5509 = vunpack.c.l.b16 %v4622
        %v5510 = vunpack.c.l.b16 %v4623
        %v5511 = vunpack.c.l.b16 %v4624
        %v5512 = vunpack.c.l.b16 %v4625
        %v5513 = vunpack.c.l.b16 %v4626
        %v5514 = vunpack.c.l.b16 %v4627
        %v5515 = vunpack.c.l.b16 %v4628
        %v5516 = vunpack.c.l.b16 %v4629
        %v5517 = vunpack.c.l.b16 %v4630
        %v5518 = vunpack.c.l.b16 %v4631
        %v5519 = vpack.c.b16 %v5472, %v5471
        %v5520 = vpack.c.b16 %v5474, %v5473
        %v5521 = vpack.c.b16 %v5476, %v5475
        %v5522 = vpack.c.b16 %v5478, %v5477
        %v5523 = vpack.c.b16 %v5480, %v5479
        %v5524 = vpack.c.b16 %v5482, %v5481
        %v5525 = vpack.c.b16 %v5484, %v5483
        %v5526 = vpack.c.b16 %v5486, %v5485
        %v5527 = vpack.c.b16 %v5488, %v5487
        %v5528 = vpack.c.b16 %v5490, %v5489
        %v5529 = vpack.c.b16 %v5492, %v5491
        %v5530 = vpack.c.b16 %v5494, %v5493
        %v5531 = vpack.c.b16 %v5496, %v5495
        %v5532 = vpack.c.b16 %v5498, %v5497
        %v5533 = vpack.c.b16 %v5500, %v5499
        %v5534 = vpack.c.b16 %v5502, %v5501
        %v5535 = vpack.c.b16 %v5504, %v5503
        %v5536 = vpack.c.b16 %v5506, %v5505
        %v5537 = vpack.c.b16 %v5508, %v5507
        %v5538 = vpack.c.b16 %v5510, %v5509
        %v5539 = vpack.c.b16 %v5512, %v5511
        %v5540 = vpack.c.b16 %v5514, %v5513
        %v5541 = vpack.c.b16 %v5516, %v5515
        %v5542 = vpack.c.b16 %v5518, %v5517
        %5567 = vmatprep.subr.bf16.mxu0 0
        %5568 = vmatpush1.bf16.msra.mxu0 %v5526
        %5569 = vmatprep.subr.bf16.mxu0 0
        %5570 = vmatpush1.bf16.msra.mxu0 %v5525
        %5571 = vmatprep.subr.bf16.mxu0 0
        %5572 = vmatpush1.bf16.msra.mxu0 %v5524
        %5573 = vmatprep.subr.bf16.mxu0 0
        %5574 = vmatpush1.bf16.msra.mxu0 %v5523
        %5575 = vmatprep.subr.bf16.mxu0 0
        %5576 = vmatpush1.bf16.msra.mxu0 %v5522
        %5577 = vmatprep.subr.bf16.mxu0 0
        %5578 = vmatpush1.bf16.msra.mxu0 %v5521
        %5579 = vmatprep.subr.bf16.mxu0 0
        %5580 = vmatpush1.bf16.msra.mxu0 %v5520
        %5581 = vmatprep.subr.bf16.mxu0 0
        %5582 = vmatpush1.bf16.msra.mxu0 %v5519
        %5583 = vmatprep.subr.bf16.mxu0 0
        %5584 = vmatpush2.bf16.msra.mxu0 %v5534
        %5585 = vmatprep.subr.bf16.mxu0 0
        %5586 = vmatpush2.bf16.msra.mxu0 %v5533
        %5587 = vmatprep.subr.bf16.mxu0 0
        %5588 = vmatpush2.bf16.msra.mxu0 %v5532
        %5589 = vmatprep.subr.bf16.mxu0 0
        %5590 = vmatpush2.bf16.msra.mxu0 %v5531
        %5591 = vmatprep.subr.bf16.mxu0 0
        %5592 = vmatpush2.bf16.msra.mxu0 %v5530
        %5593 = vmatprep.subr.bf16.mxu0 0
        %5594 = vmatpush2.bf16.msra.mxu0 %v5529
        %5595 = vmatprep.subr.bf16.mxu0 0
        %5596 = vmatpush2.bf16.msra.mxu0 %v5528
        %5597 = vmatprep.subr.bf16.mxu0 0
        %5598 = vmatpush2.bf16.msra.mxu0 %v5527
        %5599 = vmatprep.mubr.bf16.mxu0 %v5418
        %5600 = vmatmul.mubr.bf16.gmra.mxu0 %v5417
        %v5601 = vpop.f32.mrf.mxu0
        %v5602 = vadd.f32 %v5281, %v5601
        %v5603 = vpop.f32.mrf.mxu0
        %v5604 = vpop.f32.mrf.mxu0
        %v5605 = vadd.f32 %v5284, %v5604
        %v5606 = vpop.f32.mrf.mxu0
        %5607 = vmatprep.mubr.bf16.mxu0 %v4846
        %5608 = vmatmul.mubr.bf16.gmra.mxu0 %v4845
        %v5609 = vpop.f32.mrf.mxu0
        %v5610 = vadd.f32 %v5289, %v5609
        %v5611 = vpop.f32.mrf.mxu0
        %v5612 = vpop.f32.mrf.mxu0
        %v5613 = vadd.f32 %v5292, %v5612
        %v5614 = vpop.f32.mrf.mxu0
        %5615 = vmatprep.mubr.bf16.mxu0 %v4849
        %5616 = vmatmul.mubr.bf16.gmra.mxu0 %v4848
        %v5617 = vpop.f32.mrf.mxu0
        %v5618 = vadd.f32 %v5297, %v5617
        %v5619 = vpop.f32.mrf.mxu0
        %v5620 = vpop.f32.mrf.mxu0
        %v5621 = vadd.f32 %v5300, %v5620
        %v5622 = vpop.f32.mrf.mxu0
        %5623 = vmatprep.mubr.bf16.mxu0 %v4852
        %5624 = vmatmul.mubr.bf16.gmra.mxu0 %v4851
        %v5625 = vpop.f32.mrf.mxu0
        %v5626 = vadd.f32 %v5305, %v5625
        %v5627 = vpop.f32.mrf.mxu0
        %v5628 = vpop.f32.mrf.mxu0
        %v5629 = vadd.f32 %v5308, %v5628
        %v5630 = vpop.f32.mrf.mxu0
        %5631 = vmatprep.mubr.bf16.mxu0 %v4855
        %5632 = vmatmul.mubr.bf16.gmra.mxu0 %v4854
        %v5633 = vpop.f32.mrf.mxu0
        %v5634 = vadd.f32 %v5313, %v5633
        %v5635 = vpop.f32.mrf.mxu0
        %v5636 = vpop.f32.mrf.mxu0
        %v5637 = vadd.f32 %v5316, %v5636
        %v5638 = vpop.f32.mrf.mxu0
        %5639 = vmatprep.mubr.bf16.mxu0 %v4858
        %5640 = vmatmul.mubr.bf16.gmra.mxu0 %v4857
        %v5641 = vpop.f32.mrf.mxu0
        %v5642 = vadd.f32 %v5321, %v5641
        %v5643 = vpop.f32.mrf.mxu0
        %v5644 = vpop.f32.mrf.mxu0
        %v5645 = vadd.f32 %v5324, %v5644
        %v5646 = vpop.f32.mrf.mxu0
        %5647 = vmatprep.mubr.bf16.mxu0 %v4861
        %5648 = vmatmul.mubr.bf16.gmra.mxu0 %v4860
        %v5649 = vpop.f32.mrf.mxu0
        %v5650 = vadd.f32 %v5329, %v5649
        %v5651 = vpop.f32.mrf.mxu0
        %v5652 = vpop.f32.mrf.mxu0
        %v5653 = vadd.f32 %v5332, %v5652
        %v5654 = vpop.f32.mrf.mxu0
        %5655 = vmatprep.mubr.bf16.mxu0 %v4864
        %5656 = vmatmul.mubr.bf16.gmra.mxu0 %v4863
        %v5657 = vpop.f32.mrf.mxu0
        %v5658 = vadd.f32 %v5337, %v5657
        %v5659 = vpop.f32.mrf.mxu0
        %v5660 = vpop.f32.mrf.mxu0
        %v5661 = vadd.f32 %v5340, %v5660
        %v5662 = vpop.f32.mrf.mxu0
        %5663 = vmatprep.mubr.bf16.mxu0 %v4867
        %5664 = vmatmul.mubr.bf16.gmra.mxu0 %v4866
        %v5665 = vpop.f32.mrf.mxu0
        %v5666 = vadd.f32 %v5345, %v5665
        %v5667 = vpop.f32.mrf.mxu0
        %v5668 = vpop.f32.mrf.mxu0
        %v5669 = vadd.f32 %v5348, %v5668
        %v5670 = vpop.f32.mrf.mxu0
        %5671 = vmatprep.mubr.bf16.mxu0 %v4870
        %5672 = vmatmul.mubr.bf16.gmra.mxu0 %v4869
        %v5673 = vpop.f32.mrf.mxu0
        %v5674 = vadd.f32 %v5353, %v5673
        %v5675 = vpop.f32.mrf.mxu0
        %v5676 = vpop.f32.mrf.mxu0
        %v5677 = vadd.f32 %v5356, %v5676
        %v5678 = vpop.f32.mrf.mxu0
        %5679 = vmatprep.mubr.bf16.mxu0 %v4873
        %5680 = vmatmul.mubr.bf16.gmra.mxu0 %v4872
        %v5681 = vpop.f32.mrf.mxu0
        %v5682 = vadd.f32 %v5361, %v5681
        %v5683 = vpop.f32.mrf.mxu0
        %v5684 = vpop.f32.mrf.mxu0
        %v5685 = vadd.f32 %v5364, %v5684
        %v5686 = vpop.f32.mrf.mxu0
        %5687 = vmatprep.mubr.bf16.mxu0 %v4876
        %5688 = vmatmul.mubr.bf16.gmra.mxu0 %v4875
        %v5689 = vpop.f32.mrf.mxu0
        %v5690 = vadd.f32 %v5369, %v5689
        %v5691 = vpop.f32.mrf.mxu0
        %v5692 = vpop.f32.mrf.mxu0
        %v5693 = vadd.f32 %v5372, %v5692
        %v5694 = vpop.f32.mrf.mxu0
        %5695 = vmatprep.mubr.bf16.mxu0 %v4879
        %5696 = vmatmul.mubr.bf16.gmra.mxu0 %v4878
        %v5697 = vpop.f32.mrf.mxu0
        %v5698 = vadd.f32 %v5377, %v5697
        %v5699 = vpop.f32.mrf.mxu0
        %v5700 = vpop.f32.mrf.mxu0
        %v5701 = vadd.f32 %v5380, %v5700
        %v5702 = vpop.f32.mrf.mxu0
        %5703 = vmatprep.mubr.bf16.mxu0 %v4882
        %5704 = vmatmul.mubr.bf16.gmra.mxu0 %v4881
        %v5705 = vpop.f32.mrf.mxu0
        %v5706 = vadd.f32 %v5385, %v5705
        %v5707 = vpop.f32.mrf.mxu0
        %v5708 = vpop.f32.mrf.mxu0
        %v5709 = vadd.f32 %v5388, %v5708
        %v5710 = vpop.f32.mrf.mxu0
        %5711 = vmatprep.mubr.bf16.mxu0 %v4885
        %5712 = vmatmul.mubr.bf16.gmra.mxu0 %v4884
        %v5713 = vpop.f32.mrf.mxu0
        %v5714 = vadd.f32 %v5393, %v5713
        %v5715 = vpop.f32.mrf.mxu0
        %v5716 = vpop.f32.mrf.mxu0
        %v5717 = vadd.f32 %v5396, %v5716
        %v5718 = vpop.f32.mrf.mxu0
        %5719 = vmatprep.mubr.bf16.mxu0 %v4888
        %5720 = vmatmul.mubr.bf16.gmra.mxu0 %v4887
        %v5721 = vpop.f32.mrf.mxu0
        %v5722 = vadd.f32 %v5401, %v5721
        %v5723 = vpop.f32.mrf.mxu0
        %v5724 = vpop.f32.mrf.mxu0
        %v5725 = vadd.f32 %v5404, %v5724
        %v5726 = vpop.f32.mrf.mxu0
        %5727 = vdwg.mxu0
        %5728 = vmatprep.subr.bf16.mxu0 0
        %5729 = vmatpush1.bf16.msra.mxu0 %v5542
        %5730 = vmatprep.subr.bf16.mxu0 0
        %5731 = vmatpush1.bf16.msra.mxu0 %v5541
        %5732 = vmatprep.subr.bf16.mxu0 0
        %5733 = vmatpush1.bf16.msra.mxu0 %v5540
        %5734 = vmatprep.subr.bf16.mxu0 0
        %5735 = vmatpush1.bf16.msra.mxu0 %v5539
        %5736 = vmatprep.subr.bf16.mxu0 0
        %5737 = vmatpush1.bf16.msra.mxu0 %v5538
        %5738 = vmatprep.subr.bf16.mxu0 0
        %5739 = vmatpush1.bf16.msra.mxu0 %v5537
        %5740 = vmatprep.subr.bf16.mxu0 0
        %5741 = vmatpush1.bf16.msra.mxu0 %v5536
        %5742 = vmatprep.subr.bf16.mxu0 0
        %5743 = vmatpush1.bf16.msra.mxu0 %v5535
        %5744 = vmatprep.subr.bf16.mxu0 0
        %5745 = vmatpush2.bf16.msra.mxu0 0
        %5746 = vmatprep.subr.bf16.mxu0 0
        %5747 = vmatpush2.bf16.msra.mxu0 0
        %5748 = vmatprep.subr.bf16.mxu0 0
        %5749 = vmatpush2.bf16.msra.mxu0 0
        %5750 = vmatprep.subr.bf16.mxu0 0
        %5751 = vmatpush2.bf16.msra.mxu0 0
        %5752 = vmatprep.subr.bf16.mxu0 0
        %5753 = vmatpush2.bf16.msra.mxu0 0
        %5754 = vmatprep.subr.bf16.mxu0 0
        %5755 = vmatpush2.bf16.msra.mxu0 0
        %5756 = vmatprep.subr.bf16.mxu0 0
        %5757 = vmatpush2.bf16.msra.mxu0 0
        %5758 = vmatprep.subr.bf16.mxu0 0
        %5759 = vmatpush2.bf16.msra.mxu0 0
        %5760 = vmatprep.mubr.bf16.mxu0 0
        %5761 = vmatmul.mubr.bf16.gmra.mxu0 %v5419
        %v5762 = vpop.f32.mrf.mxu0
        %v5763 = vadd.f32 %v5602, %v5762
        %v5764 = vpop.f32.mrf.mxu0
        %v5765 = vpop.f32.mrf.mxu0
        %v5766 = vadd.f32 %v5605, %v5765
        %v5767 = vpop.f32.mrf.mxu0
        %5768 = vmatprep.mubr.bf16.mxu0 0
        %5769 = vmatmul.mubr.bf16.gmra.mxu0 %v4847
        %v5770 = vpop.f32.mrf.mxu0
        %v5771 = vadd.f32 %v5610, %v5770
        %v5772 = vpop.f32.mrf.mxu0
        %v5773 = vpop.f32.mrf.mxu0
        %v5774 = vadd.f32 %v5613, %v5773
        %v5775 = vpop.f32.mrf.mxu0
        %5776 = vmatprep.mubr.bf16.mxu0 0
        %5777 = vmatmul.mubr.bf16.gmra.mxu0 %v4850
        %v5778 = vpop.f32.mrf.mxu0
        %v5779 = vadd.f32 %v5618, %v5778
        %v5780 = vpop.f32.mrf.mxu0
        %v5781 = vpop.f32.mrf.mxu0
        %v5782 = vadd.f32 %v5621, %v5781
        %v5783 = vpop.f32.mrf.mxu0
        %5784 = vmatprep.mubr.bf16.mxu0 0
        %5785 = vmatmul.mubr.bf16.gmra.mxu0 %v4853
        %v5786 = vpop.f32.mrf.mxu0
        %v5787 = vadd.f32 %v5626, %v5786
        %v5788 = vpop.f32.mrf.mxu0
        %v5789 = vpop.f32.mrf.mxu0
        %v5790 = vadd.f32 %v5629, %v5789
        %v5791 = vpop.f32.mrf.mxu0
        %5792 = vmatprep.mubr.bf16.mxu0 0
        %5793 = vmatmul.mubr.bf16.gmra.mxu0 %v4856
        %v5794 = vpop.f32.mrf.mxu0
        %v5795 = vadd.f32 %v5634, %v5794
        %v5796 = vpop.f32.mrf.mxu0
        %v5797 = vpop.f32.mrf.mxu0
        %v5798 = vadd.f32 %v5637, %v5797
        %v5799 = vpop.f32.mrf.mxu0
        %5800 = vmatprep.mubr.bf16.mxu0 0
        %5801 = vmatmul.mubr.bf16.gmra.mxu0 %v4859
        %v5802 = vpop.f32.mrf.mxu0
        %v5803 = vadd.f32 %v5642, %v5802
        %v5804 = vpop.f32.mrf.mxu0
        %v5805 = vpop.f32.mrf.mxu0
        %v5806 = vadd.f32 %v5645, %v5805
        %v5807 = vpop.f32.mrf.mxu0
        %5808 = vmatprep.mubr.bf16.mxu0 0
        %5809 = vmatmul.mubr.bf16.gmra.mxu0 %v4862
        %v5810 = vpop.f32.mrf.mxu0
        %v5811 = vadd.f32 %v5650, %v5810
        %v5812 = vpop.f32.mrf.mxu0
        %v5813 = vpop.f32.mrf.mxu0
        %v5814 = vadd.f32 %v5653, %v5813
        %v5815 = vpop.f32.mrf.mxu0
        %5816 = vmatprep.mubr.bf16.mxu0 0
        %5817 = vmatmul.mubr.bf16.gmra.mxu0 %v4865
        %v5818 = vpop.f32.mrf.mxu0
        %v5819 = vadd.f32 %v5658, %v5818
        %v5820 = vpop.f32.mrf.mxu0
        %v5821 = vpop.f32.mrf.mxu0
        %v5822 = vadd.f32 %v5661, %v5821
        %v5823 = vpop.f32.mrf.mxu0
        %5824 = vmatprep.mubr.bf16.mxu0 0
        %5825 = vmatmul.mubr.bf16.gmra.mxu0 %v4868
        %v5826 = vpop.f32.mrf.mxu0
        %v5827 = vadd.f32 %v5666, %v5826
        %v5828 = vpop.f32.mrf.mxu0
        %v5829 = vpop.f32.mrf.mxu0
        %v5830 = vadd.f32 %v5669, %v5829
        %v5831 = vpop.f32.mrf.mxu0
        %5832 = vmatprep.mubr.bf16.mxu0 0
        %5833 = vmatmul.mubr.bf16.gmra.mxu0 %v4871
        %v5834 = vpop.f32.mrf.mxu0
        %v5835 = vadd.f32 %v5674, %v5834
        %v5836 = vpop.f32.mrf.mxu0
        %v5837 = vpop.f32.mrf.mxu0
        %v5838 = vadd.f32 %v5677, %v5837
        %v5839 = vpop.f32.mrf.mxu0
        %5840 = vmatprep.mubr.bf16.mxu0 0
        %5841 = vmatmul.mubr.bf16.gmra.mxu0 %v4874
        %v5842 = vpop.f32.mrf.mxu0
        %v5843 = vadd.f32 %v5682, %v5842
        %v5844 = vpop.f32.mrf.mxu0
        %v5845 = vpop.f32.mrf.mxu0
        %v5846 = vadd.f32 %v5685, %v5845
        %v5847 = vpop.f32.mrf.mxu0
        %5848 = vmatprep.mubr.bf16.mxu0 0
        %5849 = vmatmul.mubr.bf16.gmra.mxu0 %v4877
        %v5850 = vpop.f32.mrf.mxu0
        %v5851 = vadd.f32 %v5690, %v5850
        %v5852 = vpop.f32.mrf.mxu0
        %v5853 = vpop.f32.mrf.mxu0
        %v5854 = vadd.f32 %v5693, %v5853
        %v5855 = vpop.f32.mrf.mxu0
        %5856 = vmatprep.mubr.bf16.mxu0 0
        %5857 = vmatmul.mubr.bf16.gmra.mxu0 %v4880
        %v5858 = vpop.f32.mrf.mxu0
        %v5859 = vadd.f32 %v5698, %v5858
        %v5860 = vpop.f32.mrf.mxu0
        %v5861 = vpop.f32.mrf.mxu0
        %v5862 = vadd.f32 %v5701, %v5861
        %v5863 = vpop.f32.mrf.mxu0
        %5864 = vmatprep.mubr.bf16.mxu0 0
        %5865 = vmatmul.mubr.bf16.gmra.mxu0 %v4883
        %v5866 = vpop.f32.mrf.mxu0
        %v5867 = vadd.f32 %v5706, %v5866
        %v5868 = vpop.f32.mrf.mxu0
        %v5869 = vpop.f32.mrf.mxu0
        %v5870 = vadd.f32 %v5709, %v5869
        %v5871 = vpop.f32.mrf.mxu0
        %5872 = vmatprep.mubr.bf16.mxu0 0
        %5873 = vmatmul.mubr.bf16.gmra.mxu0 %v4886
        %v5874 = vpop.f32.mrf.mxu0
        %v5875 = vadd.f32 %v5714, %v5874
        %v5876 = vpop.f32.mrf.mxu0
        %v5877 = vpop.f32.mrf.mxu0
        %v5878 = vadd.f32 %v5717, %v5877
        %v5879 = vpop.f32.mrf.mxu0
        %5880 = vmatprep.mubr.bf16.mxu0 0
        %5881 = vmatmul.mubr.bf16.gmra.mxu0 %v4889
        %v5882 = vpop.f32.mrf.mxu0
        %v5883 = vadd.f32 %v5722, %v5882
        %v5884 = vpop.f32.mrf.mxu0
        %v5885 = vpop.f32.mrf.mxu0
        %v5886 = vadd.f32 %v5725, %v5885
        %v5887 = vpop.f32.mrf.mxu0
        %5888 = vdwg.mxu0
        %v5889 = vld [vmem:[#allocation2 + $0x30] sm:$0xff]
        %v5890 = vld [vmem:[#allocation2 + $0x38] sm:$0xf]
        %v5891 = vld [vmem:[#allocation2 + $0x3c] sm:$0xff]
        %v5892 = vld [vmem:[#allocation2 + $0x44] sm:$0xf]
        %v5893 = vld [vmem:[#allocation2 + $0x48] sm:$0xff]
        %v5894 = vld [vmem:[#allocation2 + $0x50] sm:$0xf]
        %v5895 = vld [vmem:[#allocation2 + $0x54] sm:$0xff]
        %v5896 = vld [vmem:[#allocation2 + $0x5c] sm:$0xf]
        %v5897 = vld [vmem:[#allocation2 + $0x60] sm:$0xff]
        %v5898 = vld [vmem:[#allocation2 + $0x68] sm:$0xf]
        %v5899 = vld [vmem:[#allocation2 + $0x6c] sm:$0xff]
        %v5900 = vld [vmem:[#allocation2 + $0x74] sm:$0xf]
        %v5901 = vld [vmem:[#allocation2 + $0x78] sm:$0xff]
        %v5902 = vld [vmem:[#allocation2 + $0x80] sm:$0xf]
        %v5903 = vld [vmem:[#allocation2 + $0x84] sm:$0xff]
        %v5904 = vld [vmem:[#allocation2 + $0x8c] sm:$0xf]
        %v5905 = vld [vmem:[#allocation2 + $0x90] sm:$0xff]
        %v5906 = vld [vmem:[#allocation2 + $0x98] sm:$0xf]
        %v5907 = vld [vmem:[#allocation2 + $0x9c] sm:$0xff]
        %v5908 = vld [vmem:[#allocation2 + $0xa4] sm:$0xf]
        %v5909 = vld [vmem:[#allocation2 + $0xa8] sm:$0xff]
        %v5910 = vld [vmem:[#allocation2 + $0xb0] sm:$0xf]
        %v5911 = vld [vmem:[#allocation2 + $0xb4] sm:$0xff]
        %v5912 = vld [vmem:[#allocation2 + $0xbc] sm:$0xf]
        %v5913 = vld [vmem:[#allocation2 + $0xc0] sm:$0xff]
        %v5914 = vld [vmem:[#allocation2 + $0xc8] sm:$0xf]
        %v5915 = vld [vmem:[#allocation2 + $0xcc] sm:$0xff]
        %v5916 = vld [vmem:[#allocation2 + $0xd4] sm:$0xf]
        %v5917 = vld [vmem:[#allocation2 + $0xd8] sm:$0xff]
        %v5918 = vld [vmem:[#allocation2 + $0xe0] sm:$0xf]
        %v5919 = vld [vmem:[#allocation2 + $0xe4] sm:$0xff]
        %v5920 = vld [vmem:[#allocation2 + $0xec] sm:$0xf]
        %v5921 = vld [vmem:[#allocation2 + $0xf0] sm:$0xff]
        %v5922 = vld [vmem:[#allocation2 + $0xf8] sm:$0xf]
        %v5923 = vld [vmem:[#allocation2 + $0xfc] sm:$0xff]
        %v5924 = vld [vmem:[#allocation2 + $0x104] sm:$0xf]
        %v5925 = vld [vmem:[#allocation2 + $0x108] sm:$0xff]
        %v5926 = vld [vmem:[#allocation2 + $0x110] sm:$0xf]
        %v5927 = vld [vmem:[#allocation2 + $0x114] sm:$0xff]
        %v5928 = vld [vmem:[#allocation2 + $0x11c] sm:$0xf]
        %v5929 = vld [vmem:[#allocation2 + $0x120] sm:$0xff]
        %v5930 = vld [vmem:[#allocation2 + $0x128] sm:$0xf]
        %v5931 = vld [vmem:[#allocation2 + $0x12c] sm:$0xff]
        %v5932 = vld [vmem:[#allocation2 + $0x134] sm:$0xf]
        %v5933 = vld [vmem:[#allocation2 + $0x138] sm:$0xff]
        %v5934 = vld [vmem:[#allocation2 + $0x140] sm:$0xf]
        %v5935 = vld [vmem:[#allocation2 + $0x144] sm:$0xff]
        %v5936 = vld [vmem:[#allocation2 + $0x14c] sm:$0xf]
        %v5937 = vld [vmem:[#allocation2 + $0x150] sm:$0xff]
        %v5938 = vld [vmem:[#allocation2 + $0x158] sm:$0xf]
        %v5939 = vld [vmem:[#allocation2 + $0x15c] sm:$0xff]
        %v5940 = vld [vmem:[#allocation2 + $0x164] sm:$0xf]
        %v5941 = vld [vmem:[#allocation2 + $0x168] sm:$0xff]
        %v5942 = vld [vmem:[#allocation2 + $0x170] sm:$0xf]
        %v5943 = vld [vmem:[#allocation2 + $0x174] sm:$0xff]
        %v5944 = vld [vmem:[#allocation2 + $0x17c] sm:$0xf]
        %v5945 = vld [vmem:[#allocation2 + $0x180] sm:$0xff]
        %v5946 = vld [vmem:[#allocation2 + $0x188] sm:$0xf]
        %v5947 = vld [vmem:[#allocation2 + $0x18c] sm:$0xff]
        %v5948 = vld [vmem:[#allocation2 + $0x194] sm:$0xf]
        %v5949 = vld [vmem:[#allocation2 + $0x198] sm:$0xff]
        %v5950 = vld [vmem:[#allocation2 + $0x1a0] sm:$0xf]
        %v5951 = vld [vmem:[#allocation2 + $0x1a4] sm:$0xff]
        %v5952 = vld [vmem:[#allocation2 + $0x1ac] sm:$0xf]
        %s5953 = scalar_lea.vmem %s2, 384
        %v5954 = vld [vmem:[%s5953] sm:$0xf]
        %v5955 = vld [vmem:[%s5953 + $0x4] sm:$0xf]
        %v5956 = vld [vmem:[%s5953 + $0x8] sm:$0xf]
        %v5957 = vld [vmem:[%s5953 + $0xc] sm:$0xf]
        %v5958 = vld [vmem:[%s5953 + $0x10] sm:$0xf]
        %v5959 = vld [vmem:[%s5953 + $0x14] sm:$0xf]
        %v5960 = vld [vmem:[%s5953 + $0x18] sm:$0xf]
        %v5961 = vld [vmem:[%s5953 + $0x1c] sm:$0xf]
        %v5962 = vld [vmem:[%s5953 + $0x20] sm:$0xf]
        %v5963 = vld [vmem:[%s5953 + $0x24] sm:$0xf]
        %v5964 = vld [vmem:[%s5953 + $0x28] sm:$0xf]
        %v5965 = vld [vmem:[%s5953 + $0x2c] sm:$0xf]
        %v5966 = vld [vmem:[%s5953 + $0x30] sm:$0xf]
        %v5967 = vld [vmem:[%s5953 + $0x34] sm:$0xf]
        %v5968 = vld [vmem:[%s5953 + $0x38] sm:$0xf]
        %v5969 = vld [vmem:[%s5953 + $0x3c] sm:$0xf]
        %v5970 = vld [vmem:[%s5953 + $0x40] sm:$0xf]
        %v5971 = vld [vmem:[%s5953 + $0x44] sm:$0xf]
        %v5972 = vld [vmem:[%s5953 + $0x48] sm:$0xf]
        %v5973 = vld [vmem:[%s5953 + $0x4c] sm:$0xf]
        %v5974 = vld [vmem:[%s5953 + $0x50] sm:$0xf]
        %v5975 = vld [vmem:[%s5953 + $0x54] sm:$0xf]
        %v5976 = vld [vmem:[%s5953 + $0x58] sm:$0xf]
        %v5977 = vld [vmem:[%s5953 + $0x5c] sm:$0xf]
        %v5978 = vld [vmem:[%s5953 + $0x60] sm:$0xf]
        %v5979 = vld [vmem:[%s5953 + $0x64] sm:$0xf]
        %v5980 = vld [vmem:[%s5953 + $0x68] sm:$0xf]
        %v5981 = vld [vmem:[%s5953 + $0x6c] sm:$0xf]
        %v5982 = vld [vmem:[%s5953 + $0x70] sm:$0xf]
        %v5983 = vld [vmem:[%s5953 + $0x74] sm:$0xf]
        %v5984 = vld [vmem:[%s5953 + $0x78] sm:$0xf]
        %v5985 = vld [vmem:[%s5953 + $0x7c] sm:$0xf]
        %v5986 = vld [vmem:[%s5953 + $0x80] sm:$0xf]
        %v5987 = vld [vmem:[%s5953 + $0x84] sm:$0xf]
        %v5988 = vld [vmem:[%s5953 + $0x88] sm:$0xf]
        %v5989 = vld [vmem:[%s5953 + $0x8c] sm:$0xf]
        %v5990 = vld [vmem:[%s5953 + $0x90] sm:$0xf]
        %v5991 = vld [vmem:[%s5953 + $0x94] sm:$0xf]
        %v5992 = vld [vmem:[%s5953 + $0x98] sm:$0xf]
        %v5993 = vld [vmem:[%s5953 + $0x9c] sm:$0xf]
        %v5994 = vld [vmem:[%s5953 + $0xa0] sm:$0xf]
        %v5995 = vld [vmem:[%s5953 + $0xa4] sm:$0xf]
        %v5996 = vld [vmem:[%s5953 + $0xa8] sm:$0xf]
        %v5997 = vld [vmem:[%s5953 + $0xac] sm:$0xf]
        %v5998 = vld [vmem:[%s5953 + $0xb0] sm:$0xf]
        %v5999 = vld [vmem:[%s5953 + $0xb4] sm:$0xf]
        %v6000 = vld [vmem:[%s5953 + $0xb8] sm:$0xf]
        %v6001 = vld [vmem:[%s5953 + $0xbc] sm:$0xf]
        %v6066 = vunpack.c.l.b16 %v5889
        %v6067 = vunpack.c.h.b16 %v5889
        %v6068 = vunpack.c.l.b16 %v5890
        %v6069 = vunpack.c.l.b16 %v5891
        %v6070 = vunpack.c.h.b16 %v5891
        %v6071 = vunpack.c.l.b16 %v5892
        %v6072 = vunpack.c.l.b16 %v5893
        %v6073 = vunpack.c.h.b16 %v5893
        %v6074 = vunpack.c.l.b16 %v5894
        %v6075 = vunpack.c.l.b16 %v5895
        %v6076 = vunpack.c.h.b16 %v5895
        %v6077 = vunpack.c.l.b16 %v5896
        %v6078 = vunpack.c.l.b16 %v5897
        %v6079 = vunpack.c.h.b16 %v5897
        %v6080 = vunpack.c.l.b16 %v5898
        %v6081 = vunpack.c.l.b16 %v5899
        %v6082 = vunpack.c.h.b16 %v5899
        %v6083 = vunpack.c.l.b16 %v5900
        %v6084 = vunpack.c.l.b16 %v5901
        %v6085 = vunpack.c.h.b16 %v5901
        %v6086 = vunpack.c.l.b16 %v5902
        %v6087 = vunpack.c.l.b16 %v5903
        %v6088 = vunpack.c.h.b16 %v5903
        %v6089 = vunpack.c.l.b16 %v5904
        %v6090 = vunpack.c.l.b16 %v5905
        %v6091 = vunpack.c.h.b16 %v5905
        %v6092 = vunpack.c.l.b16 %v5906
        %v6093 = vunpack.c.l.b16 %v5907
        %v6094 = vunpack.c.h.b16 %v5907
        %v6095 = vunpack.c.l.b16 %v5908
        %v6096 = vunpack.c.l.b16 %v5909
        %v6097 = vunpack.c.h.b16 %v5909
        %v6098 = vunpack.c.l.b16 %v5910
        %v6099 = vunpack.c.l.b16 %v5911
        %v6100 = vunpack.c.h.b16 %v5911
        %v6101 = vunpack.c.l.b16 %v5912
        %v6102 = vunpack.c.l.b16 %v5913
        %v6103 = vunpack.c.h.b16 %v5913
        %v6104 = vunpack.c.l.b16 %v5914
        %v6105 = vunpack.c.l.b16 %v5915
        %v6106 = vunpack.c.h.b16 %v5915
        %v6107 = vunpack.c.l.b16 %v5916
        %v6108 = vunpack.c.l.b16 %v5917
        %v6109 = vunpack.c.h.b16 %v5917
        %v6110 = vunpack.c.l.b16 %v5918
        %v6111 = vunpack.c.l.b16 %v5919
        %v6112 = vunpack.c.h.b16 %v5919
        %v6113 = vunpack.c.l.b16 %v5920
        %v6114 = vunpack.c.l.b16 %v5921
        %v6115 = vunpack.c.h.b16 %v5921
        %v6116 = vunpack.c.l.b16 %v5922
        %v6117 = vunpack.c.l.b16 %v5923
        %v6118 = vunpack.c.h.b16 %v5923
        %v6119 = vunpack.c.l.b16 %v5924
        %v6120 = vunpack.c.l.b16 %v5925
        %v6121 = vunpack.c.h.b16 %v5925
        %v6122 = vunpack.c.l.b16 %v5926
        %v6123 = vunpack.c.l.b16 %v5927
        %v6124 = vunpack.c.h.b16 %v5927
        %v6125 = vunpack.c.l.b16 %v5928
        %v6126 = vunpack.c.l.b16 %v5929
        %v6127 = vunpack.c.h.b16 %v5929
        %v6128 = vunpack.c.l.b16 %v5930
        %v6129 = vunpack.c.l.b16 %v5931
        %v6130 = vunpack.c.h.b16 %v5931
        %v6131 = vunpack.c.l.b16 %v5932
        %v6132 = vunpack.c.l.b16 %v5933
        %v6133 = vunpack.c.h.b16 %v5933
        %v6134 = vunpack.c.l.b16 %v5934
        %v6135 = vunpack.c.l.b16 %v5935
        %v6136 = vunpack.c.h.b16 %v5935
        %v6137 = vunpack.c.l.b16 %v5936
        %v6138 = vunpack.c.l.b16 %v5937
        %v6139 = vunpack.c.h.b16 %v5937
        %v6140 = vunpack.c.l.b16 %v5938
        %v6141 = vunpack.c.l.b16 %v5939
        %v6142 = vunpack.c.h.b16 %v5939
        %v6143 = vunpack.c.l.b16 %v5940
        %v6144 = vunpack.c.l.b16 %v5941
        %v6145 = vunpack.c.h.b16 %v5941
        %v6146 = vunpack.c.l.b16 %v5942
        %v6147 = vunpack.c.l.b16 %v5943
        %v6148 = vunpack.c.h.b16 %v5943
        %v6149 = vunpack.c.l.b16 %v5944
        %v6150 = vunpack.c.l.b16 %v5945
        %v6151 = vunpack.c.h.b16 %v5945
        %v6152 = vunpack.c.l.b16 %v5946
        %v6153 = vunpack.c.l.b16 %v5947
        %v6154 = vunpack.c.h.b16 %v5947
        %v6155 = vunpack.c.l.b16 %v5948
        %v6156 = vunpack.c.l.b16 %v5949
        %v6157 = vunpack.c.h.b16 %v5949
        %v6158 = vunpack.c.l.b16 %v5950
        %v6159 = vunpack.c.l.b16 %v5951
        %v6160 = vunpack.c.h.b16 %v5951
        %v6161 = vunpack.c.l.b16 %v5952
        %v6162 = vpack.c.b16 %v6069, %v6066
        %v6163 = vpack.c.b16 %v6070, %v6067
        %v6164 = vpack.c.b16 %v6071, %v6068
        %v6165 = vpack.c.b16 %v6075, %v6072
        %v6166 = vpack.c.b16 %v6076, %v6073
        %v6167 = vpack.c.b16 %v6077, %v6074
        %v6168 = vpack.c.b16 %v6081, %v6078
        %v6169 = vpack.c.b16 %v6082, %v6079
        %v6170 = vpack.c.b16 %v6083, %v6080
        %v6171 = vpack.c.b16 %v6087, %v6084
        %v6172 = vpack.c.b16 %v6088, %v6085
        %v6173 = vpack.c.b16 %v6089, %v6086
        %v6174 = vpack.c.b16 %v6093, %v6090
        %v6175 = vpack.c.b16 %v6094, %v6091
        %v6176 = vpack.c.b16 %v6095, %v6092
        %v6177 = vpack.c.b16 %v6099, %v6096
        %v6178 = vpack.c.b16 %v6100, %v6097
        %v6179 = vpack.c.b16 %v6101, %v6098
        %v6180 = vpack.c.b16 %v6105, %v6102
        %v6181 = vpack.c.b16 %v6106, %v6103
        %v6182 = vpack.c.b16 %v6107, %v6104
        %v6183 = vpack.c.b16 %v6111, %v6108
        %v6184 = vpack.c.b16 %v6112, %v6109
        %v6185 = vpack.c.b16 %v6113, %v6110
        %v6186 = vpack.c.b16 %v6117, %v6114
        %v6187 = vpack.c.b16 %v6118, %v6115
        %v6188 = vpack.c.b16 %v6119, %v6116
        %v6189 = vpack.c.b16 %v6123, %v6120
        %v6190 = vpack.c.b16 %v6124, %v6121
        %v6191 = vpack.c.b16 %v6125, %v6122
        %v6192 = vpack.c.b16 %v6129, %v6126
        %v6193 = vpack.c.b16 %v6130, %v6127
        %v6194 = vpack.c.b16 %v6131, %v6128
        %v6195 = vpack.c.b16 %v6135, %v6132
        %v6196 = vpack.c.b16 %v6136, %v6133
        %v6197 = vpack.c.b16 %v6137, %v6134
        %v6198 = vpack.c.b16 %v6141, %v6138
        %v6199 = vpack.c.b16 %v6142, %v6139
        %v6200 = vpack.c.b16 %v6143, %v6140
        %v6201 = vpack.c.b16 %v6147, %v6144
        %v6202 = vpack.c.b16 %v6148, %v6145
        %v6203 = vpack.c.b16 %v6149, %v6146
        %v6204 = vpack.c.b16 %v6153, %v6150
        %v6205 = vpack.c.b16 %v6154, %v6151
        %v6206 = vpack.c.b16 %v6155, %v6152
        %v6207 = vpack.c.b16 %v6159, %v6156
        %v6208 = vpack.c.b16 %v6160, %v6157
        %v6209 = vpack.c.b16 %v6161, %v6158
        %v6306 = vunpack.c.l.b16 %v5954
        %v6307 = vunpack.c.l.b16 %v5955
        %v6308 = vunpack.c.l.b16 %v5956
        %v6309 = vunpack.c.l.b16 %v5957
        %v6310 = vunpack.c.l.b16 %v5958
        %v6311 = vunpack.c.l.b16 %v5959
        %v6312 = vunpack.c.l.b16 %v5960
        %v6313 = vunpack.c.l.b16 %v5961
        %v6314 = vunpack.c.l.b16 %v5962
        %v6315 = vunpack.c.l.b16 %v5963
        %v6316 = vunpack.c.l.b16 %v5964
        %v6317 = vunpack.c.l.b16 %v5965
        %v6318 = vunpack.c.l.b16 %v5966
        %v6319 = vunpack.c.l.b16 %v5967
        %v6320 = vunpack.c.l.b16 %v5968
        %v6321 = vunpack.c.l.b16 %v5969
        %v6322 = vunpack.c.l.b16 %v5970
        %v6323 = vunpack.c.l.b16 %v5971
        %v6324 = vunpack.c.l.b16 %v5972
        %v6325 = vunpack.c.l.b16 %v5973
        %v6326 = vunpack.c.l.b16 %v5974
        %v6327 = vunpack.c.l.b16 %v5975
        %v6328 = vunpack.c.l.b16 %v5976
        %v6329 = vunpack.c.l.b16 %v5977
        %v6330 = vunpack.c.l.b16 %v5978
        %v6331 = vunpack.c.l.b16 %v5979
        %v6332 = vunpack.c.l.b16 %v5980
        %v6333 = vunpack.c.l.b16 %v5981
        %v6334 = vunpack.c.l.b16 %v5982
        %v6335 = vunpack.c.l.b16 %v5983
        %v6336 = vunpack.c.l.b16 %v5984
        %v6337 = vunpack.c.l.b16 %v5985
        %v6338 = vunpack.c.l.b16 %v5986
        %v6339 = vunpack.c.l.b16 %v5987
        %v6340 = vunpack.c.l.b16 %v5988
        %v6341 = vunpack.c.l.b16 %v5989
        %v6342 = vunpack.c.l.b16 %v5990
        %v6343 = vunpack.c.l.b16 %v5991
        %v6344 = vunpack.c.l.b16 %v5992
        %v6345 = vunpack.c.l.b16 %v5993
        %v6346 = vunpack.c.l.b16 %v5994
        %v6347 = vunpack.c.l.b16 %v5995
        %v6348 = vunpack.c.l.b16 %v5996
        %v6349 = vunpack.c.l.b16 %v5997
        %v6350 = vunpack.c.l.b16 %v5998
        %v6351 = vunpack.c.l.b16 %v5999
        %v6352 = vunpack.c.l.b16 %v6000
        %v6353 = vunpack.c.l.b16 %v6001
        %v6354 = vpack.c.b16 %v6307, %v6306
        %v6355 = vpack.c.b16 %v6309, %v6308
        %v6356 = vpack.c.b16 %v6311, %v6310
        %v6357 = vpack.c.b16 %v6313, %v6312
        %v6358 = vpack.c.b16 %v6315, %v6314
        %v6359 = vpack.c.b16 %v6317, %v6316
        %v6360 = vpack.c.b16 %v6319, %v6318
        %v6361 = vpack.c.b16 %v6321, %v6320
        %v6362 = vpack.c.b16 %v6323, %v6322
        %v6363 = vpack.c.b16 %v6325, %v6324
        %v6364 = vpack.c.b16 %v6327, %v6326
        %v6365 = vpack.c.b16 %v6329, %v6328
        %v6366 = vpack.c.b16 %v6331, %v6330
        %v6367 = vpack.c.b16 %v6333, %v6332
        %v6368 = vpack.c.b16 %v6335, %v6334
        %v6369 = vpack.c.b16 %v6337, %v6336
        %v6370 = vpack.c.b16 %v6339, %v6338
        %v6371 = vpack.c.b16 %v6341, %v6340
        %v6372 = vpack.c.b16 %v6343, %v6342
        %v6373 = vpack.c.b16 %v6345, %v6344
        %v6374 = vpack.c.b16 %v6347, %v6346
        %v6375 = vpack.c.b16 %v6349, %v6348
        %v6376 = vpack.c.b16 %v6351, %v6350
        %v6377 = vpack.c.b16 %v6353, %v6352
        %6402 = vmatprep.subr.bf16.mxu0 0
        %6403 = vmatpush1.bf16.msra.mxu0 %v6361
        %6404 = vmatprep.subr.bf16.mxu0 0
        %6405 = vmatpush1.bf16.msra.mxu0 %v6360
        %6406 = vmatprep.subr.bf16.mxu0 0
        %6407 = vmatpush1.bf16.msra.mxu0 %v6359
        %6408 = vmatprep.subr.bf16.mxu0 0
        %6409 = vmatpush1.bf16.msra.mxu0 %v6358
        %6410 = vmatprep.subr.bf16.mxu0 0
        %6411 = vmatpush1.bf16.msra.mxu0 %v6357
        %6412 = vmatprep.subr.bf16.mxu0 0
        %6413 = vmatpush1.bf16.msra.mxu0 %v6356
        %6414 = vmatprep.subr.bf16.mxu0 0
        %6415 = vmatpush1.bf16.msra.mxu0 %v6355
        %6416 = vmatprep.subr.bf16.mxu0 0
        %6417 = vmatpush1.bf16.msra.mxu0 %v6354
        %6418 = vmatprep.subr.bf16.mxu0 0
        %6419 = vmatpush2.bf16.msra.mxu0 %v6369
        %6420 = vmatprep.subr.bf16.mxu0 0
        %6421 = vmatpush2.bf16.msra.mxu0 %v6368
        %6422 = vmatprep.subr.bf16.mxu0 0
        %6423 = vmatpush2.bf16.msra.mxu0 %v6367
        %6424 = vmatprep.subr.bf16.mxu0 0
        %6425 = vmatpush2.bf16.msra.mxu0 %v6366
        %6426 = vmatprep.subr.bf16.mxu0 0
        %6427 = vmatpush2.bf16.msra.mxu0 %v6365
        %6428 = vmatprep.subr.bf16.mxu0 0
        %6429 = vmatpush2.bf16.msra.mxu0 %v6364
        %6430 = vmatprep.subr.bf16.mxu0 0
        %6431 = vmatpush2.bf16.msra.mxu0 %v6363
        %6432 = vmatprep.subr.bf16.mxu0 0
        %6433 = vmatpush2.bf16.msra.mxu0 %v6362
        %6434 = vmatprep.mubr.bf16.mxu0 %v6163
        %6435 = vmatmul.mubr.bf16.gmra.mxu0 %v6162
        %v6436 = vpop.f32.mrf.mxu0
        %v6437 = vadd.f32 0.0, %v6436
        %v6438 = vpop.f32.mrf.mxu0
        %v6439 = vpop.f32.mrf.mxu0
        %v6440 = vadd.f32 0.0, %v6439
        %v6441 = vpop.f32.mrf.mxu0
        %6442 = vmatprep.mubr.bf16.mxu0 %v6166
        %6443 = vmatmul.mubr.bf16.gmra.mxu0 %v6165
        %v6444 = vpop.f32.mrf.mxu0
        %v6445 = vadd.f32 0.0, %v6444
        %v6446 = vpop.f32.mrf.mxu0
        %v6447 = vpop.f32.mrf.mxu0
        %v6448 = vadd.f32 0.0, %v6447
        %v6449 = vpop.f32.mrf.mxu0
        %6450 = vmatprep.mubr.bf16.mxu0 %v6169
        %6451 = vmatmul.mubr.bf16.gmra.mxu0 %v6168
        %v6452 = vpop.f32.mrf.mxu0
        %v6453 = vadd.f32 0.0, %v6452
        %v6454 = vpop.f32.mrf.mxu0
        %v6455 = vpop.f32.mrf.mxu0
        %v6456 = vadd.f32 0.0, %v6455
        %v6457 = vpop.f32.mrf.mxu0
        %6458 = vmatprep.mubr.bf16.mxu0 %v6172
        %6459 = vmatmul.mubr.bf16.gmra.mxu0 %v6171
        %v6460 = vpop.f32.mrf.mxu0
        %v6461 = vadd.f32 0.0, %v6460
        %v6462 = vpop.f32.mrf.mxu0
        %v6463 = vpop.f32.mrf.mxu0
        %v6464 = vadd.f32 0.0, %v6463
        %v6465 = vpop.f32.mrf.mxu0
        %6466 = vmatprep.mubr.bf16.mxu0 %v6175
        %6467 = vmatmul.mubr.bf16.gmra.mxu0 %v6174
        %v6468 = vpop.f32.mrf.mxu0
        %v6469 = vadd.f32 0.0, %v6468
        %v6470 = vpop.f32.mrf.mxu0
        %v6471 = vpop.f32.mrf.mxu0
        %v6472 = vadd.f32 0.0, %v6471
        %v6473 = vpop.f32.mrf.mxu0
        %6474 = vmatprep.mubr.bf16.mxu0 %v6178
        %6475 = vmatmul.mubr.bf16.gmra.mxu0 %v6177
        %v6476 = vpop.f32.mrf.mxu0
        %v6477 = vadd.f32 0.0, %v6476
        %v6478 = vpop.f32.mrf.mxu0
        %v6479 = vpop.f32.mrf.mxu0
        %v6480 = vadd.f32 0.0, %v6479
        %v6481 = vpop.f32.mrf.mxu0
        %6482 = vmatprep.mubr.bf16.mxu0 %v6181
        %6483 = vmatmul.mubr.bf16.gmra.mxu0 %v6180
        %v6484 = vpop.f32.mrf.mxu0
        %v6485 = vadd.f32 0.0, %v6484
        %v6486 = vpop.f32.mrf.mxu0
        %v6487 = vpop.f32.mrf.mxu0
        %v6488 = vadd.f32 0.0, %v6487
        %v6489 = vpop.f32.mrf.mxu0
        %6490 = vmatprep.mubr.bf16.mxu0 %v6184
        %6491 = vmatmul.mubr.bf16.gmra.mxu0 %v6183
        %v6492 = vpop.f32.mrf.mxu0
        %v6493 = vadd.f32 0.0, %v6492
        %v6494 = vpop.f32.mrf.mxu0
        %v6495 = vpop.f32.mrf.mxu0
        %v6496 = vadd.f32 0.0, %v6495
        %v6497 = vpop.f32.mrf.mxu0
        %6498 = vmatprep.mubr.bf16.mxu0 %v6187
        %6499 = vmatmul.mubr.bf16.gmra.mxu0 %v6186
        %v6500 = vpop.f32.mrf.mxu0
        %v6501 = vadd.f32 0.0, %v6500
        %v6502 = vpop.f32.mrf.mxu0
        %v6503 = vpop.f32.mrf.mxu0
        %v6504 = vadd.f32 0.0, %v6503
        %v6505 = vpop.f32.mrf.mxu0
        %6506 = vmatprep.mubr.bf16.mxu0 %v6190
        %6507 = vmatmul.mubr.bf16.gmra.mxu0 %v6189
        %v6508 = vpop.f32.mrf.mxu0
        %v6509 = vadd.f32 0.0, %v6508
        %v6510 = vpop.f32.mrf.mxu0
        %v6511 = vpop.f32.mrf.mxu0
        %v6512 = vadd.f32 0.0, %v6511
        %v6513 = vpop.f32.mrf.mxu0
        %6514 = vmatprep.mubr.bf16.mxu0 %v6193
        %6515 = vmatmul.mubr.bf16.gmra.mxu0 %v6192
        %v6516 = vpop.f32.mrf.mxu0
        %v6517 = vadd.f32 0.0, %v6516
        %v6518 = vpop.f32.mrf.mxu0
        %v6519 = vpop.f32.mrf.mxu0
        %v6520 = vadd.f32 0.0, %v6519
        %v6521 = vpop.f32.mrf.mxu0
        %6522 = vmatprep.mubr.bf16.mxu0 %v6196
        %6523 = vmatmul.mubr.bf16.gmra.mxu0 %v6195
        %v6524 = vpop.f32.mrf.mxu0
        %v6525 = vadd.f32 0.0, %v6524
        %v6526 = vpop.f32.mrf.mxu0
        %v6527 = vpop.f32.mrf.mxu0
        %v6528 = vadd.f32 0.0, %v6527
        %v6529 = vpop.f32.mrf.mxu0
        %6530 = vmatprep.mubr.bf16.mxu0 %v6199
        %6531 = vmatmul.mubr.bf16.gmra.mxu0 %v6198
        %v6532 = vpop.f32.mrf.mxu0
        %v6533 = vadd.f32 0.0, %v6532
        %v6534 = vpop.f32.mrf.mxu0
        %v6535 = vpop.f32.mrf.mxu0
        %v6536 = vadd.f32 0.0, %v6535
        %v6537 = vpop.f32.mrf.mxu0
        %6538 = vmatprep.mubr.bf16.mxu0 %v6202
        %6539 = vmatmul.mubr.bf16.gmra.mxu0 %v6201
        %v6540 = vpop.f32.mrf.mxu0
        %v6541 = vadd.f32 0.0, %v6540
        %v6542 = vpop.f32.mrf.mxu0
        %v6543 = vpop.f32.mrf.mxu0
        %v6544 = vadd.f32 0.0, %v6543
        %v6545 = vpop.f32.mrf.mxu0
        %6546 = vmatprep.mubr.bf16.mxu0 %v6205
        %6547 = vmatmul.mubr.bf16.gmra.mxu0 %v6204
        %v6548 = vpop.f32.mrf.mxu0
        %v6549 = vadd.f32 0.0, %v6548
        %v6550 = vpop.f32.mrf.mxu0
        %v6551 = vpop.f32.mrf.mxu0
        %v6552 = vadd.f32 0.0, %v6551
        %v6553 = vpop.f32.mrf.mxu0
        %6554 = vmatprep.mubr.bf16.mxu0 %v6208
        %6555 = vmatmul.mubr.bf16.gmra.mxu0 %v6207
        %v6556 = vpop.f32.mrf.mxu0
        %v6557 = vadd.f32 0.0, %v6556
        %v6558 = vpop.f32.mrf.mxu0
        %v6559 = vpop.f32.mrf.mxu0
        %v6560 = vadd.f32 0.0, %v6559
        %v6561 = vpop.f32.mrf.mxu0
        %6562 = vdwg.mxu0
        %6563 = vmatprep.subr.bf16.mxu0 0
        %6564 = vmatpush1.bf16.msra.mxu0 %v6377
        %6565 = vmatprep.subr.bf16.mxu0 0
        %6566 = vmatpush1.bf16.msra.mxu0 %v6376
        %6567 = vmatprep.subr.bf16.mxu0 0
        %6568 = vmatpush1.bf16.msra.mxu0 %v6375
        %6569 = vmatprep.subr.bf16.mxu0 0
        %6570 = vmatpush1.bf16.msra.mxu0 %v6374
        %6571 = vmatprep.subr.bf16.mxu0 0
        %6572 = vmatpush1.bf16.msra.mxu0 %v6373
        %6573 = vmatprep.subr.bf16.mxu0 0
        %6574 = vmatpush1.bf16.msra.mxu0 %v6372
        %6575 = vmatprep.subr.bf16.mxu0 0
        %6576 = vmatpush1.bf16.msra.mxu0 %v6371
        %6577 = vmatprep.subr.bf16.mxu0 0
        %6578 = vmatpush1.bf16.msra.mxu0 %v6370
        %6579 = vmatprep.subr.bf16.mxu0 0
        %6580 = vmatpush2.bf16.msra.mxu0 0
        %6581 = vmatprep.subr.bf16.mxu0 0
        %6582 = vmatpush2.bf16.msra.mxu0 0
        %6583 = vmatprep.subr.bf16.mxu0 0
        %6584 = vmatpush2.bf16.msra.mxu0 0
        %6585 = vmatprep.subr.bf16.mxu0 0
        %6586 = vmatpush2.bf16.msra.mxu0 0
        %6587 = vmatprep.subr.bf16.mxu0 0
        %6588 = vmatpush2.bf16.msra.mxu0 0
        %6589 = vmatprep.subr.bf16.mxu0 0
        %6590 = vmatpush2.bf16.msra.mxu0 0
        %6591 = vmatprep.subr.bf16.mxu0 0
        %6592 = vmatpush2.bf16.msra.mxu0 0
        %6593 = vmatprep.subr.bf16.mxu0 0
        %6594 = vmatpush2.bf16.msra.mxu0 0
        %6595 = vmatprep.mubr.bf16.mxu0 0
        %6596 = vmatmul.mubr.bf16.gmra.mxu0 %v6164
        %v6597 = vpop.f32.mrf.mxu0
        %v6598 = vadd.f32 %v6437, %v6597
        %v6599 = vpop.f32.mrf.mxu0
        %v6600 = vpop.f32.mrf.mxu0
        %v6601 = vadd.f32 %v6440, %v6600
        %v6602 = vpop.f32.mrf.mxu0
        %6603 = vmatprep.mubr.bf16.mxu0 0
        %6604 = vmatmul.mubr.bf16.gmra.mxu0 %v6167
        %v6605 = vpop.f32.mrf.mxu0
        %v6606 = vadd.f32 %v6445, %v6605
        %v6607 = vpop.f32.mrf.mxu0
        %v6608 = vpop.f32.mrf.mxu0
        %v6609 = vadd.f32 %v6448, %v6608
        %v6610 = vpop.f32.mrf.mxu0
        %6611 = vmatprep.mubr.bf16.mxu0 0
        %6612 = vmatmul.mubr.bf16.gmra.mxu0 %v6170
        %v6613 = vpop.f32.mrf.mxu0
        %v6614 = vadd.f32 %v6453, %v6613
        %v6615 = vpop.f32.mrf.mxu0
        %v6616 = vpop.f32.mrf.mxu0
        %v6617 = vadd.f32 %v6456, %v6616
        %v6618 = vpop.f32.mrf.mxu0
        %6619 = vmatprep.mubr.bf16.mxu0 0
        %6620 = vmatmul.mubr.bf16.gmra.mxu0 %v6173
        %v6621 = vpop.f32.mrf.mxu0
        %v6622 = vadd.f32 %v6461, %v6621
        %v6623 = vpop.f32.mrf.mxu0
        %v6624 = vpop.f32.mrf.mxu0
        %v6625 = vadd.f32 %v6464, %v6624
        %v6626 = vpop.f32.mrf.mxu0
        %6627 = vmatprep.mubr.bf16.mxu0 0
        %6628 = vmatmul.mubr.bf16.gmra.mxu0 %v6176
        %v6629 = vpop.f32.mrf.mxu0
        %v6630 = vadd.f32 %v6469, %v6629
        %v6631 = vpop.f32.mrf.mxu0
        %v6632 = vpop.f32.mrf.mxu0
        %v6633 = vadd.f32 %v6472, %v6632
        %v6634 = vpop.f32.mrf.mxu0
        %6635 = vmatprep.mubr.bf16.mxu0 0
        %6636 = vmatmul.mubr.bf16.gmra.mxu0 %v6179
        %v6637 = vpop.f32.mrf.mxu0
        %v6638 = vadd.f32 %v6477, %v6637
        %v6639 = vpop.f32.mrf.mxu0
        %v6640 = vpop.f32.mrf.mxu0
        %v6641 = vadd.f32 %v6480, %v6640
        %v6642 = vpop.f32.mrf.mxu0
        %6643 = vmatprep.mubr.bf16.mxu0 0
        %6644 = vmatmul.mubr.bf16.gmra.mxu0 %v6182
        %v6645 = vpop.f32.mrf.mxu0
        %v6646 = vadd.f32 %v6485, %v6645
        %v6647 = vpop.f32.mrf.mxu0
        %v6648 = vpop.f32.mrf.mxu0
        %v6649 = vadd.f32 %v6488, %v6648
        %v6650 = vpop.f32.mrf.mxu0
        %6651 = vmatprep.mubr.bf16.mxu0 0
        %6652 = vmatmul.mubr.bf16.gmra.mxu0 %v6185
        %v6653 = vpop.f32.mrf.mxu0
        %v6654 = vadd.f32 %v6493, %v6653
        %v6655 = vpop.f32.mrf.mxu0
        %v6656 = vpop.f32.mrf.mxu0
        %v6657 = vadd.f32 %v6496, %v6656
        %v6658 = vpop.f32.mrf.mxu0
        %6659 = vmatprep.mubr.bf16.mxu0 0
        %6660 = vmatmul.mubr.bf16.gmra.mxu0 %v6188
        %v6661 = vpop.f32.mrf.mxu0
        %v6662 = vadd.f32 %v6501, %v6661
        %v6663 = vpop.f32.mrf.mxu0
        %v6664 = vpop.f32.mrf.mxu0
        %v6665 = vadd.f32 %v6504, %v6664
        %v6666 = vpop.f32.mrf.mxu0
        %6667 = vmatprep.mubr.bf16.mxu0 0
        %6668 = vmatmul.mubr.bf16.gmra.mxu0 %v6191
        %v6669 = vpop.f32.mrf.mxu0
        %v6670 = vadd.f32 %v6509, %v6669
        %v6671 = vpop.f32.mrf.mxu0
        %v6672 = vpop.f32.mrf.mxu0
        %v6673 = vadd.f32 %v6512, %v6672
        %v6674 = vpop.f32.mrf.mxu0
        %6675 = vmatprep.mubr.bf16.mxu0 0
        %6676 = vmatmul.mubr.bf16.gmra.mxu0 %v6194
        %v6677 = vpop.f32.mrf.mxu0
        %v6678 = vadd.f32 %v6517, %v6677
        %v6679 = vpop.f32.mrf.mxu0
        %v6680 = vpop.f32.mrf.mxu0
        %v6681 = vadd.f32 %v6520, %v6680
        %v6682 = vpop.f32.mrf.mxu0
        %6683 = vmatprep.mubr.bf16.mxu0 0
        %6684 = vmatmul.mubr.bf16.gmra.mxu0 %v6197
        %v6685 = vpop.f32.mrf.mxu0
        %v6686 = vadd.f32 %v6525, %v6685
        %v6687 = vpop.f32.mrf.mxu0
        %v6688 = vpop.f32.mrf.mxu0
        %v6689 = vadd.f32 %v6528, %v6688
        %v6690 = vpop.f32.mrf.mxu0
        %6691 = vmatprep.mubr.bf16.mxu0 0
        %6692 = vmatmul.mubr.bf16.gmra.mxu0 %v6200
        %v6693 = vpop.f32.mrf.mxu0
        %v6694 = vadd.f32 %v6533, %v6693
        %v6695 = vpop.f32.mrf.mxu0
        %v6696 = vpop.f32.mrf.mxu0
        %v6697 = vadd.f32 %v6536, %v6696
        %v6698 = vpop.f32.mrf.mxu0
        %6699 = vmatprep.mubr.bf16.mxu0 0
        %6700 = vmatmul.mubr.bf16.gmra.mxu0 %v6203
        %v6701 = vpop.f32.mrf.mxu0
        %v6702 = vadd.f32 %v6541, %v6701
        %v6703 = vpop.f32.mrf.mxu0
        %v6704 = vpop.f32.mrf.mxu0
        %v6705 = vadd.f32 %v6544, %v6704
        %v6706 = vpop.f32.mrf.mxu0
        %6707 = vmatprep.mubr.bf16.mxu0 0
        %6708 = vmatmul.mubr.bf16.gmra.mxu0 %v6206
        %v6709 = vpop.f32.mrf.mxu0
        %v6710 = vadd.f32 %v6549, %v6709
        %v6711 = vpop.f32.mrf.mxu0
        %v6712 = vpop.f32.mrf.mxu0
        %v6713 = vadd.f32 %v6552, %v6712
        %v6714 = vpop.f32.mrf.mxu0
        %6715 = vmatprep.mubr.bf16.mxu0 0
        %6716 = vmatmul.mubr.bf16.gmra.mxu0 %v6209
        %v6717 = vpop.f32.mrf.mxu0
        %v6718 = vadd.f32 %v6557, %v6717
        %v6719 = vpop.f32.mrf.mxu0
        %v6720 = vpop.f32.mrf.mxu0
        %v6721 = vadd.f32 %v6560, %v6720
        %v6722 = vpop.f32.mrf.mxu0
        %6723 = vdwg.mxu0
        %v6724 = vadd.f32 %v5763, %v6598
        %v6725 = vadd.f32 %v5766, %v6601
        %v6726 = vadd.f32 %v5771, %v6606
        %v6727 = vadd.f32 %v5774, %v6609
        %v6728 = vadd.f32 %v5779, %v6614
        %v6729 = vadd.f32 %v5782, %v6617
        %v6730 = vadd.f32 %v5787, %v6622
        %v6731 = vadd.f32 %v5790, %v6625
        %v6732 = vadd.f32 %v5795, %v6630
        %v6733 = vadd.f32 %v5798, %v6633
        %v6734 = vadd.f32 %v5803, %v6638
        %v6735 = vadd.f32 %v5806, %v6641
        %v6736 = vadd.f32 %v5811, %v6646
        %v6737 = vadd.f32 %v5814, %v6649
        %v6738 = vadd.f32 %v5819, %v6654
        %v6739 = vadd.f32 %v5822, %v6657
        %v6740 = vadd.f32 %v5827, %v6662
        %v6741 = vadd.f32 %v5830, %v6665
        %v6742 = vadd.f32 %v5835, %v6670
        %v6743 = vadd.f32 %v5838, %v6673
        %v6744 = vadd.f32 %v5843, %v6678
        %v6745 = vadd.f32 %v5846, %v6681
        %v6746 = vadd.f32 %v5851, %v6686
        %v6747 = vadd.f32 %v5854, %v6689
        %v6748 = vadd.f32 %v5859, %v6694
        %v6749 = vadd.f32 %v5862, %v6697
        %v6750 = vadd.f32 %v5867, %v6702
        %v6751 = vadd.f32 %v5870, %v6705
        %v6752 = vadd.f32 %v5875, %v6710
        %v6753 = vadd.f32 %v5878, %v6713
        %v6754 = vadd.f32 %v5883, %v6718
        %v6755 = vadd.f32 %v5886, %v6721
        %v6756 = vld [vmem:[%s4] sm:$0x1]
        %v6758 = vlaneseq
        %v6759 = vshrl.u32 %v6758, 7
        %v6760 = vsub.s32 0, %v6759
        %v6761 = vrot.slane %v6756, %v6760
        %v6763 = vadd.f32 %v6724, %v6761
        %v6764 = vadd.f32 %v6725, %v6761
        %v6765 = vadd.f32 %v6726, %v6761
        %v6766 = vadd.f32 %v6727, %v6761
        %v6767 = vadd.f32 %v6728, %v6761
        %v6768 = vadd.f32 %v6729, %v6761
        %v6769 = vadd.f32 %v6730, %v6761
        %v6770 = vadd.f32 %v6731, %v6761
        %v6771 = vadd.f32 %v6732, %v6761
        %v6772 = vadd.f32 %v6733, %v6761
        %v6773 = vadd.f32 %v6734, %v6761
        %v6774 = vadd.f32 %v6735, %v6761
        %v6775 = vadd.f32 %v6736, %v6761
        %v6776 = vadd.f32 %v6737, %v6761
        %v6777 = vadd.f32 %v6738, %v6761
        %v6778 = vadd.f32 %v6739, %v6761
        %v6779 = vadd.f32 %v6740, %v6761
        %v6780 = vadd.f32 %v6741, %v6761
        %v6781 = vadd.f32 %v6742, %v6761
        %v6782 = vadd.f32 %v6743, %v6761
        %v6783 = vadd.f32 %v6744, %v6761
        %v6784 = vadd.f32 %v6745, %v6761
        %v6785 = vadd.f32 %v6746, %v6761
        %v6786 = vadd.f32 %v6747, %v6761
        %v6787 = vadd.f32 %v6748, %v6761
        %v6788 = vadd.f32 %v6749, %v6761
        %v6789 = vadd.f32 %v6750, %v6761
        %v6790 = vadd.f32 %v6751, %v6761
        %v6791 = vadd.f32 %v6752, %v6761
        %v6792 = vadd.f32 %v6753, %v6761
        %v6793 = vadd.f32 %v6754, %v6761
        %v6794 = vadd.f32 %v6755, %v6761
        %v6795 = vld [vmem:[%s222] sm:$0xf]
        %v6796 = vld [vmem:[%s222 + $0x4] sm:$0xf]
        %v6797 = vld [vmem:[%s222 + $0x8] sm:$0xf]
        %v6798 = vld [vmem:[%s222 + $0xc] sm:$0xf]
        %v6799 = vld [vmem:[%s222 + $0x10] sm:$0xf]
        %v6800 = vld [vmem:[%s222 + $0x14] sm:$0xf]
        %v6801 = vld [vmem:[%s222 + $0x18] sm:$0xf]
        %v6802 = vld [vmem:[%s222 + $0x1c] sm:$0xf]
        %v6803 = vld [vmem:[%s222 + $0x20] sm:$0xf]
        %v6804 = vld [vmem:[%s222 + $0x24] sm:$0xf]
        %v6805 = vld [vmem:[%s222 + $0x28] sm:$0xf]
        %v6806 = vld [vmem:[%s222 + $0x2c] sm:$0xf]
        %v6807 = vld [vmem:[%s222 + $0x30] sm:$0xf]
        %v6808 = vld [vmem:[%s222 + $0x34] sm:$0xf]
        %v6809 = vld [vmem:[%s222 + $0x38] sm:$0xf]
        %v6810 = vld [vmem:[%s222 + $0x3c] sm:$0xf]
        %v6811 = vld [vmem:[%s222 + $0x40] sm:$0xf]
        %v6812 = vld [vmem:[%s222 + $0x44] sm:$0xf]
        %v6813 = vld [vmem:[%s222 + $0x48] sm:$0xf]
        %v6814 = vld [vmem:[%s222 + $0x4c] sm:$0xf]
        %v6815 = vld [vmem:[%s222 + $0x50] sm:$0xf]
        %v6816 = vld [vmem:[%s222 + $0x54] sm:$0xf]
        %v6817 = vld [vmem:[%s222 + $0x58] sm:$0xf]
        %v6818 = vld [vmem:[%s222 + $0x5c] sm:$0xf]
        %v6819 = vld [vmem:[%s222 + $0x60] sm:$0xf]
        %v6820 = vld [vmem:[%s222 + $0x64] sm:$0xf]
        %v6821 = vld [vmem:[%s222 + $0x68] sm:$0xf]
        %v6822 = vld [vmem:[%s222 + $0x6c] sm:$0xf]
        %v6823 = vld [vmem:[%s222 + $0x70] sm:$0xf]
        %v6824 = vld [vmem:[%s222 + $0x74] sm:$0xf]
        %v6825 = vld [vmem:[%s222 + $0x78] sm:$0xf]
        %v6826 = vld [vmem:[%s222 + $0x7c] sm:$0xf]
        %v6827 = vunpack.c.l.bf16 %v6795
        %v6828 = vunpack.c.l.bf16 %v6796
        %v6829 = vunpack.c.l.bf16 %v6797
        %v6830 = vunpack.c.l.bf16 %v6798
        %v6831 = vunpack.c.l.bf16 %v6799
        %v6832 = vunpack.c.l.bf16 %v6800
        %v6833 = vunpack.c.l.bf16 %v6801
        %v6834 = vunpack.c.l.bf16 %v6802
        %v6835 = vunpack.c.l.bf16 %v6803
        %v6836 = vunpack.c.l.bf16 %v6804
        %v6837 = vunpack.c.l.bf16 %v6805
        %v6838 = vunpack.c.l.bf16 %v6806
        %v6839 = vunpack.c.l.bf16 %v6807
        %v6840 = vunpack.c.l.bf16 %v6808
        %v6841 = vunpack.c.l.bf16 %v6809
        %v6842 = vunpack.c.l.bf16 %v6810
        %v6843 = vunpack.c.l.bf16 %v6811
        %v6844 = vunpack.c.l.bf16 %v6812
        %v6845 = vunpack.c.l.bf16 %v6813
        %v6846 = vunpack.c.l.bf16 %v6814
        %v6847 = vunpack.c.l.bf16 %v6815
        %v6848 = vunpack.c.l.bf16 %v6816
        %v6849 = vunpack.c.l.bf16 %v6817
        %v6850 = vunpack.c.l.bf16 %v6818
        %v6851 = vunpack.c.l.bf16 %v6819
        %v6852 = vunpack.c.l.bf16 %v6820
        %v6853 = vunpack.c.l.bf16 %v6821
        %v6854 = vunpack.c.l.bf16 %v6822
        %v6855 = vunpack.c.l.bf16 %v6823
        %v6856 = vunpack.c.l.bf16 %v6824
        %v6857 = vunpack.c.l.bf16 %v6825
        %v6858 = vunpack.c.l.bf16 %v6826
        %v6859 = vadd.f32 %v6763, %v6827
        %v6860 = vadd.f32 %v6764, %v6828
        %v6861 = vadd.f32 %v6765, %v6829
        %v6862 = vadd.f32 %v6766, %v6830
        %v6863 = vadd.f32 %v6767, %v6831
        %v6864 = vadd.f32 %v6768, %v6832
        %v6865 = vadd.f32 %v6769, %v6833
        %v6866 = vadd.f32 %v6770, %v6834
        %v6867 = vadd.f32 %v6771, %v6835
        %v6868 = vadd.f32 %v6772, %v6836
        %v6869 = vadd.f32 %v6773, %v6837
        %v6870 = vadd.f32 %v6774, %v6838
        %v6871 = vadd.f32 %v6775, %v6839
        %v6872 = vadd.f32 %v6776, %v6840
        %v6873 = vadd.f32 %v6777, %v6841
        %v6874 = vadd.f32 %v6778, %v6842
        %v6875 = vadd.f32 %v6779, %v6843
        %v6876 = vadd.f32 %v6780, %v6844
        %v6877 = vadd.f32 %v6781, %v6845
        %v6878 = vadd.f32 %v6782, %v6846
        %v6879 = vadd.f32 %v6783, %v6847
        %v6880 = vadd.f32 %v6784, %v6848
        %v6881 = vadd.f32 %v6785, %v6849
        %v6882 = vadd.f32 %v6786, %v6850
        %v6883 = vadd.f32 %v6787, %v6851
        %v6884 = vadd.f32 %v6788, %v6852
        %v6885 = vadd.f32 %v6789, %v6853
        %v6886 = vadd.f32 %v6790, %v6854
        %v6887 = vadd.f32 %v6791, %v6855
        %v6888 = vadd.f32 %v6792, %v6856
        %v6889 = vadd.f32 %v6793, %v6857
        %v6890 = vadd.f32 %v6794, %v6858
        %v6891 = vmax.f32 %v6859, 0.0
        %v6892 = vmax.f32 %v6860, 0.0
        %v6893 = vmax.f32 %v6861, 0.0
        %v6894 = vmax.f32 %v6862, 0.0
        %v6895 = vmax.f32 %v6863, 0.0
        %v6896 = vmax.f32 %v6864, 0.0
        %v6897 = vmax.f32 %v6865, 0.0
        %v6898 = vmax.f32 %v6866, 0.0
        %v6899 = vmax.f32 %v6867, 0.0
        %v6900 = vmax.f32 %v6868, 0.0
        %v6901 = vmax.f32 %v6869, 0.0
        %v6902 = vmax.f32 %v6870, 0.0
        %v6903 = vmax.f32 %v6871, 0.0
        %v6904 = vmax.f32 %v6872, 0.0
        %v6905 = vmax.f32 %v6873, 0.0
        %v6906 = vmax.f32 %v6874, 0.0
        %v6907 = vmax.f32 %v6875, 0.0
        %v6908 = vmax.f32 %v6876, 0.0
        %v6909 = vmax.f32 %v6877, 0.0
        %v6910 = vmax.f32 %v6878, 0.0
        %v6911 = vmax.f32 %v6879, 0.0
        %v6912 = vmax.f32 %v6880, 0.0
        %v6913 = vmax.f32 %v6881, 0.0
        %v6914 = vmax.f32 %v6882, 0.0
        %v6915 = vmax.f32 %v6883, 0.0
        %v6916 = vmax.f32 %v6884, 0.0
        %v6917 = vmax.f32 %v6885, 0.0
        %v6918 = vmax.f32 %v6886, 0.0
        %v6919 = vmax.f32 %v6887, 0.0
        %v6920 = vmax.f32 %v6888, 0.0
        %v6921 = vmax.f32 %v6889, 0.0
        %v6922 = vmax.f32 %v6890, 0.0
        %v6923 = vpack.c.bf16 %v6892, %v6891
        %v6924 = vpack.c.bf16 %v6894, %v6893
        %v6925 = vpack.c.bf16 %v6896, %v6895
        %v6926 = vpack.c.bf16 %v6898, %v6897
        %v6927 = vpack.c.bf16 %v6900, %v6899
        %v6928 = vpack.c.bf16 %v6902, %v6901
        %v6929 = vpack.c.bf16 %v6904, %v6903
        %v6930 = vpack.c.bf16 %v6906, %v6905
        %v6931 = vpack.c.bf16 %v6908, %v6907
        %v6932 = vpack.c.bf16 %v6910, %v6909
        %v6933 = vpack.c.bf16 %v6912, %v6911
        %v6934 = vpack.c.bf16 %v6914, %v6913
        %v6935 = vpack.c.bf16 %v6916, %v6915
        %v6936 = vpack.c.bf16 %v6918, %v6917
        %v6937 = vpack.c.bf16 %v6920, %v6919
        %v6938 = vpack.c.bf16 %v6922, %v6921
        %v6955 = vunpack.c.l.b16 %v6923
        %v6956 = vunpack.c.h.b16 %v6923
        %v6957 = vunpack.c.l.b16 %v6924
        %v6958 = vunpack.c.h.b16 %v6924
        %v6959 = vunpack.c.l.b16 %v6925
        %v6960 = vunpack.c.h.b16 %v6925
        %v6961 = vunpack.c.l.b16 %v6926
        %v6962 = vunpack.c.h.b16 %v6926
        %v6963 = vunpack.c.l.b16 %v6927
        %v6964 = vunpack.c.h.b16 %v6927
        %v6965 = vunpack.c.l.b16 %v6928
        %v6966 = vunpack.c.h.b16 %v6928
        %v6967 = vunpack.c.l.b16 %v6929
        %v6968 = vunpack.c.h.b16 %v6929
        %v6969 = vunpack.c.l.b16 %v6930
        %v6970 = vunpack.c.h.b16 %v6930
        %v6971 = vunpack.c.l.b16 %v6931
        %v6972 = vunpack.c.h.b16 %v6931
        %v6973 = vunpack.c.l.b16 %v6932
        %v6974 = vunpack.c.h.b16 %v6932
        %v6975 = vunpack.c.l.b16 %v6933
        %v6976 = vunpack.c.h.b16 %v6933
        %v6977 = vunpack.c.l.b16 %v6934
        %v6978 = vunpack.c.h.b16 %v6934
        %v6979 = vunpack.c.l.b16 %v6935
        %v6980 = vunpack.c.h.b16 %v6935
        %v6981 = vunpack.c.l.b16 %v6936
        %v6982 = vunpack.c.h.b16 %v6936
        %v6983 = vunpack.c.l.b16 %v6937
        %v6984 = vunpack.c.h.b16 %v6937
        %v6985 = vunpack.c.l.b16 %v6938
        %v6986 = vunpack.c.h.b16 %v6938
        %v6987 = vpack.c.b16 %v6955, %v6955
        %v6988 = vpack.c.b16 %v6956, %v6956
        %v6989 = vpack.c.b16 %v6957, %v6957
        %v6990 = vpack.c.b16 %v6958, %v6958
        %v6991 = vpack.c.b16 %v6959, %v6959
        %v6992 = vpack.c.b16 %v6960, %v6960
        %v6993 = vpack.c.b16 %v6961, %v6961
        %v6994 = vpack.c.b16 %v6962, %v6962
        %v6995 = vpack.c.b16 %v6963, %v6963
        %v6996 = vpack.c.b16 %v6964, %v6964
        %v6997 = vpack.c.b16 %v6965, %v6965
        %v6998 = vpack.c.b16 %v6966, %v6966
        %v6999 = vpack.c.b16 %v6967, %v6967
        %v7000 = vpack.c.b16 %v6968, %v6968
        %v7001 = vpack.c.b16 %v6969, %v6969
        %v7002 = vpack.c.b16 %v6970, %v6970
        %v7003 = vpack.c.b16 %v6971, %v6971
        %v7004 = vpack.c.b16 %v6972, %v6972
        %v7005 = vpack.c.b16 %v6973, %v6973
        %v7006 = vpack.c.b16 %v6974, %v6974
        %v7007 = vpack.c.b16 %v6975, %v6975
        %v7008 = vpack.c.b16 %v6976, %v6976
        %v7009 = vpack.c.b16 %v6977, %v6977
        %v7010 = vpack.c.b16 %v6978, %v6978
        %v7011 = vpack.c.b16 %v6979, %v6979
        %v7012 = vpack.c.b16 %v6980, %v6980
        %v7013 = vpack.c.b16 %v6981, %v6981
        %v7014 = vpack.c.b16 %v6982, %v6982
        %v7015 = vpack.c.b16 %v6983, %v6983
        %v7016 = vpack.c.b16 %v6984, %v6984
        %v7017 = vpack.c.b16 %v6985, %v6985
        %v7018 = vpack.c.b16 %v6986, %v6986
        %7051 = vst [vmem:[%s217] sm:$0xf] %v6987
        %7052 = vst [vmem:[%s217 + $0x4] sm:$0xf] %v6988
        %7053 = vst [vmem:[%s217 + $0x8] sm:$0xf] %v6989
        %7054 = vst [vmem:[%s217 + $0xc] sm:$0xf] %v6990
        %7055 = vst [vmem:[%s217 + $0x10] sm:$0xf] %v6991
        %7056 = vst [vmem:[%s217 + $0x14] sm:$0xf] %v6992
        %7057 = vst [vmem:[%s217 + $0x18] sm:$0xf] %v6993
        %7058 = vst [vmem:[%s217 + $0x1c] sm:$0xf] %v6994
        %7059 = vst [vmem:[%s217 + $0x20] sm:$0xf] %v6995
        %7060 = vst [vmem:[%s217 + $0x24] sm:$0xf] %v6996
        %7061 = vst [vmem:[%s217 + $0x28] sm:$0xf] %v6997
        %7062 = vst [vmem:[%s217 + $0x2c] sm:$0xf] %v6998
        %7063 = vst [vmem:[%s217 + $0x30] sm:$0xf] %v6999
        %7064 = vst [vmem:[%s217 + $0x34] sm:$0xf] %v7000
        %7065 = vst [vmem:[%s217 + $0x38] sm:$0xf] %v7001
        %7066 = vst [vmem:[%s217 + $0x3c] sm:$0xf] %v7002
        %7067 = vst [vmem:[%s217 + $0x40] sm:$0xf] %v7003
        %7068 = vst [vmem:[%s217 + $0x44] sm:$0xf] %v7004
        %7069 = vst [vmem:[%s217 + $0x48] sm:$0xf] %v7005
        %7070 = vst [vmem:[%s217 + $0x4c] sm:$0xf] %v7006
        %7071 = vst [vmem:[%s217 + $0x50] sm:$0xf] %v7007
        %7072 = vst [vmem:[%s217 + $0x54] sm:$0xf] %v7008
        %7073 = vst [vmem:[%s217 + $0x58] sm:$0xf] %v7009
        %7074 = vst [vmem:[%s217 + $0x5c] sm:$0xf] %v7010
        %7075 = vst [vmem:[%s217 + $0x60] sm:$0xf] %v7011
        %7076 = vst [vmem:[%s217 + $0x64] sm:$0xf] %v7012
        %7077 = vst [vmem:[%s217 + $0x68] sm:$0xf] %v7013
        %7078 = vst [vmem:[%s217 + $0x6c] sm:$0xf] %v7014
        %7079 = vst [vmem:[%s217 + $0x70] sm:$0xf] %v7015
        %7080 = vst [vmem:[%s217 + $0x74] sm:$0xf] %v7016
        %7081 = vst [vmem:[%s217 + $0x78] sm:$0xf] %v7017
        %7082 = vst [vmem:[%s217 + $0x7c] sm:$0xf] %v7018
        %s7083 = sand.u32 %s137, 1
        %s7084 = scalar_lea.sflag [#allocation4], %s7083
        %s7085 = sand.u32 %s137, 1
        %s7086 = smul.addr %s7085, 128
        %s7087 = scalar_lea.vmem [#allocation3], %s7086
        // Predicated region
        $region41: #{basic_block_forward.1} parent=39 // pred_check
          %p7088 = pneg %p147
        $region42: #{basic_block_forward.1} parent=39 // pred_check_branch
          %7090 = sbr.rel (%p7088) target = $region44
        $region43: #{basic_block_forward.1} parent=39 // pred_region
          %s7092 = ssub.s32 2048, 2048
          %7093 = vsyncadd %s7084, %s7092
          %s7094 = smul.addr %s19, 32
          %s7095 = smul.addr %s7094, 64
          %s7096 = scalar_lea.hbm %s5, %s7095
          %s7097 = sshll.u32 %s7087, 4
          %s7098 = int_to_ptr.vmem [resolvable:$true] %s7097
          %7103 = dma.vmem_to_hbm [thread:$0]  %s7098, 2048, %s7096, %s7084, 64, 64, 4
        $region44: #{basic_block_forward.1} parent=39 // pred_fallthru
          _
      $region40: #{basic_block_forward.1} parent=5 // pred_fallthru
        _
      %p7104 = scmp.le.s32.totalorder 2, %s14
      // Predicated region
      $region45: #{basic_block_forward.1} parent=5 // pred_check
        %p7105 = pneg %p7104
      $region46: #{basic_block_forward.1} parent=5 // pred_check_branch
        %7107 = sbr.rel (%p7105) target = $region48
      $region47: #{basic_block_forward.1} parent=5 // pred_region
        %s7108 = ssub.s32 %s14, 2
        // Predicated region
        $region49: #{basic_block_forward.1} parent=47 // pred_check
          %p7109 = pneg %p153
        $region50: #{basic_block_forward.1} parent=47 // pred_check_branch
          %7111 = sbr.rel (%p7109) target = $region52
        $region51: #{basic_block_forward.1} parent=47 // pred_region
          %s7112 = sand.u32 %s138, 1
          %s7113 = scalar_lea.sflag [#allocation4], %s7112
          %s7114 = sand.u32 %s138, 1
          %s7115 = smul.addr %s7114, 128
          %s7116 = scalar_lea.vmem [#allocation3], %s7115
          %7117 = dma.done %s7113, 2048
        $region52: #{basic_block_forward.1} parent=47 // pred_fallthru
          _
      $region48: #{basic_block_forward.1} parent=5 // pred_fallthru
        _
    $region6: #{basic_block_forward.1} parent=1 // loop_footer
      %s18 = sadd.s32 1, %s14
    $region7: #{basic_block_forward.1} parent=1 // loop_footer_branch
      %13 = sbr.rel target = $region3
    $region8: #{basic_block_forward.1} parent=1 // loop_exit
      _
    %7118 = vsyncpa [#allocation4], 1
    %s7119 = scalar_lea.sflag [#allocation4], 1
    %7120 = vsyncpa %s7119, 1

</llo_original>
